<compile_context>
chip_gen: v7x
topology: tpu7x:2x2x1
jax: 0.10.0
libtpu: 0.0.40
codegen_flags: <defaults>
</compile_context>

<pallas_src>
import functools
import math

import jax
import jax.numpy as jnp
from jax import lax
from jax.experimental import pallas as pl
from jax.experimental.pallas import tpu as pltpu

RMS_EPS = 1e-6      # RMSNorm eps
HN_EPS = 1e-5       # HeadwiseNorm eps
ROPE_THETA = 500000.0

# MXU operands are fed in bf16 (f32 accumulation via preferred_element_type);
# all VPU elementwise math (norms, softmax, SwiGLU) stays in f32.
MXU_DTYPE = jnp.bfloat16


# --------------------------------------------------------------------------
# Small utilities
# --------------------------------------------------------------------------

def _round_up(x, m):
    return (x + m - 1) // m * m


def _pick_tile(total, candidates):
    for c in candidates:
        if c <= total and total % c == 0:
            return c
    return total


@functools.lru_cache(maxsize=None)
def _vmem_limit_bytes():
    try:
        cap = int(pltpu.get_tpu_info().vmem_capacity_bytes)
        return max(32 << 20, min(cap * 7 // 8, 128 << 20))
    except Exception:
        return 96 * 1024 * 1024


@functools.lru_cache(maxsize=None)
def _single_buffer_supported():
    """Probe whether pipeline_mode=pl.Buffered(1) compiles on this JAX/TPU."""
    try:
        def _probe(x_ref, o_ref):
            o_ref[...] = x_ref[...] + 1.0

        f = pl.pallas_call(
            _probe,
            out_shape=jax.ShapeDtypeStruct((8, 128), jnp.float32),
            grid=(1,),
            in_specs=[pl.BlockSpec((8, 128), lambda i: (0, 0),
                                   pipeline_mode=pl.Buffered(1))],
            out_specs=pl.BlockSpec((8, 128), lambda i: (0, 0)))
        jax.block_until_ready(f(jnp.zeros((8, 128), jnp.float32)))
        return True
    except Exception:
        return False


def _const_spec(shape):
    """Spec for a grid-invariant operand (2-D grid); single-buffer if possible."""
    zeros = (0,) * len(shape)
    if _single_buffer_supported():
        return pl.BlockSpec(shape, lambda i, j: zeros, pipeline_mode=pl.Buffered(1))
    return pl.BlockSpec(shape, lambda i, j: zeros)


# --------------------------------------------------------------------------
# In-kernel helpers
# --------------------------------------------------------------------------

def _rmsnorm(x, g):
    # Matches the PyTorch RMSNorm exactly: (x+eps) / (||x+2eps||*sqrt(D)+eps) * g.
    scale = float(x.shape[-1]) ** 0.5
    xe = x + RMS_EPS
    nrm = jnp.sqrt(jnp.sum((xe + RMS_EPS) ** 2, axis=-1, keepdims=True)) * scale + RMS_EPS
    return xe * (1.0 / nrm) * g


def _attn_head(q_h, k_h, v_h, sm_scale):
    # q_h [tq, hd], k_h/v_h [Skv, hd] (bf16 MXU operands, f32 softmax).
    s = jnp.dot(q_h, k_h.T, preferred_element_type=jnp.float32) * sm_scale
    m = jnp.max(s, axis=-1, keepdims=True)
    p = jnp.exp(s - m)
    denom = jnp.sum(p, axis=-1, keepdims=True)
    p = p * (1.0 / denom)          # exact reciprocal (f32 parity in norm path)
    return jnp.dot(p.astype(v_h.dtype), v_h, preferred_element_type=jnp.float32)


# --------------------------------------------------------------------------
# Fused differential self-attention sublayer
# --------------------------------------------------------------------------

def _self_attn_kernel(x_ref, g_ref, wqkv_ref, bqkv_ref, cos_ref, ssin_ref,
                      lam_ref, segm_ref, segb_ref, woe_ref, boe_ref,
                      o_ref, q_scr, k_scr, v_scr, diff_scr,
                      *, num_heads, head_dim, q_tile):
    S = x_ref.shape[1]
    D = x_ref.shape[2]
    hd = head_dim
    dh = hd // 2
    H = num_heads
    H2 = H // 2
    D2 = H2 * hd
    sm_scale = 1.0 / math.sqrt(hd)
    qi = pl.program_id(1)

    # ---- once per batch element: RMSNorm + fused QKV proj + full-width RoPE.
    @pl.when(qi == 0)
    def _project():
        x = x_ref[0].astype(jnp.float32)                       # [S, D]
        xn = _rmsnorm(x, g_ref[...])
        qkv = jnp.dot(xn.astype(MXU_DTYPE), wqkv_ref[...],
                      preferred_element_type=jnp.float32) + bqkv_ref[...]
        q = qkv[:, :D]
        k = qkv[:, D:2 * D]
        v = qkv[:, 2 * D:]

        lane = lax.broadcasted_iota(jnp.int32, (S, D), 1)
        first_half = (lane % hd) < dh
        cos = cos_ref[...]
        ssin = ssin_ref[...]

        def rope(t):
            # partner lane = lane +/- hd/2 within each head (np.roll convention:
            # result[i] = t[i - shift]).
            partner = jnp.where(first_half,
                                pltpu.roll(t, D - dh, axis=1),   # t[i + dh]
                                pltpu.roll(t, dh, axis=1))       # t[i - dh]
            return t * cos + partner * ssin

        q_scr[...] = rope(q).astype(q_scr.dtype)
        k_scr[...] = rope(k).astype(k_scr.dtype)
        v_scr[...] = v.astype(v_scr.dtype)

    # ---- per q-row tile: per-head attention -> differential combine -> slab.
    if q_tile % 8 == 0:
        row0 = pl.multiple_of(qi * q_tile, 8)
    else:
        row0 = qi * q_tile

    lam = lam_ref[...]                                          # [1, D2] f32
    for h in range(H2):                                         # unrolled (trace time)
        c1 = h * hd
        c2 = (h + H2) * hd
        q1 = q_scr[pl.ds(row0, q_tile), c1:c1 + hd]
        q2 = q_scr[pl.ds(row0, q_tile), c2:c2 + hd]
        a1 = _attn_head(q1, k_scr[:, c1:c1 + hd], v_scr[:, c1:c1 + hd], sm_scale)
        a2 = _attn_head(q2, k_scr[:, c2:c2 + hd], v_scr[:, c2:c2 + hd], sm_scale)
        diff_scr[:, c1:c1 + hd] = a1 - lam[:, c1:c1 + hd] * a2

    # ---- HeadwiseNorm for all heads in one pass (segment matmuls on the MXU).
    d = diff_scr[...]                                           # [tq, D2] f32
    mean_h = jnp.dot(d, segm_ref[...], preferred_element_type=jnp.float32)      # [tq, H2]
    msq_h = jnp.dot(d * d, segm_ref[...], preferred_element_type=jnp.float32)
    mean = jnp.dot(mean_h, segb_ref[...], preferred_element_type=jnp.float32)   # [tq, D2]
    msq = jnp.dot(msq_h, segb_ref[...], preferred_element_type=jnp.float32)
    var = jnp.maximum(msq - mean * mean, 0.0)
    hn = (d - mean) * lax.rsqrt(var + HN_EPS)

    # ---- duplicated-head cat + gamma/beta + O-proj folded into woe/boe.
    o = jnp.dot(hn.astype(MXU_DTYPE), woe_ref[...],
                preferred_element_type=jnp.float32) + boe_ref[...]
    x_t = x_ref[0, pl.ds(row0, q_tile), :].astype(jnp.float32)
    o_ref[0] = (x_t + o).astype(o_ref.dtype)                    # residual in-kernel


def self_attn_block(p, x, positions, num_heads):
    B, S, D = x.shape
    hd = D // num_heads
    H2 = num_heads // 2
    D2 = H2 * hd

    tq = _pick_tile(S, (256, 128, 64, 32, 16, 8))
    nq = S // tq

    # Lane-dense full-width [S, D] RoPE tables (cos, signed sin).
    inv_freq = 1.0 / ROPE_THETA ** (jnp.arange(0, hd, 2, dtype=jnp.float32) / hd)
    freqs = positions.astype(jnp.float32)[:, None] * inv_freq[None, :]       # [S, hd/2]
    cos = jnp.cos(freqs)
    sin = jnp.sin(freqs)
    cos_full = jnp.tile(jnp.concatenate([cos, cos], axis=1), (1, num_heads))
    ssin_full = jnp.tile(jnp.concatenate([-sin, sin], axis=1), (1, num_heads))

    # Differential-attention lambda (parameter-only scalar math).
    qk1 = jnp.sum(p["lambda_q1"] * p["lambda_k1"], axis=-1)                  # (1, H)
    qk2 = jnp.sum(p["lambda_q2"] * p["lambda_k2"], axis=-1)
    lam = jnp.clip(jnp.exp(qk1) - jnp.exp(qk2) + p["lambda_init"], 0.0, 1.0)
    lam_row = jnp.repeat(lam[0, :H2], hd).reshape(1, D2).astype(jnp.float32)

    # Fused [Wq|Wk|Wv] (one wide-N MXU op), bf16 operands.
    wqkv = jnp.concatenate([p["q_w"], p["k_w"], p["v_w"]], axis=1).astype(MXU_DTYPE)
    bqkv = jnp.concatenate([p["q_b"], p["k_b"], p["v_b"]]).reshape(1, 3 * D)

    # Fold HeadwiseNorm gamma/beta + torch.cat([out, out]) into the O-projection.
    g1 = jnp.repeat(p["hn_gamma"][:H2], hd)
    g2 = jnp.repeat(p["hn_gamma"][H2:], hd)
    be1 = jnp.repeat(p["hn_beta"][:H2], hd)
    be2 = jnp.repeat(p["hn_beta"][H2:], hd)
    wo = p["o_w"]
    wo_eff = (wo[:D2] * g1[:, None] + wo[D2:] * g2[:, None]).astype(MXU_DTYPE)
    bo_eff = (p["o_b"] + be1 @ wo[:D2] + be2 @ wo[D2:]).reshape(1, D)

    # Segment matrices for one-pass per-head mean/var over the [tq, D/2] slab.
    head_ids = jnp.arange(D2) // hd
    segb = (jnp.arange(H2)[:, None] == head_ids[None, :]).astype(jnp.float32)  # [H2, D2]
    segm = segb.T / float(hd)                                                   # [D2, H2]

    kern = functools.partial(_self_attn_kernel, num_heads=num_heads,
                             head_dim=hd, q_tile=tq)
    ce = pl.CostEstimate(
        flops=int(2 * B * S * D * 3 * D + 4 * B * num_heads * S * S * hd
                  + 2 * B * S * D2 * D),
        transcendentals=int(B * num_heads * S * S),
        bytes_accessed=int(4 * 2 * B * S * D + 2 * 4 * D * D))

    return pl.pallas_call(
        kern,
        out_shape=jax.ShapeDtypeStruct((B, S, D), x.dtype),
        grid=(B, nq),
        in_specs=[
            pl.BlockSpec((1, S, D), lambda b, q: (b, 0, 0)),     # x (full seq / batch)
            _const_spec((1, D)),                                 # rmsnorm g
            _const_spec((D, 3 * D)),                             # [Wq|Wk|Wv]
            _const_spec((1, 3 * D)),                             # [bq|bk|bv]
            _const_spec((S, D)),                                 # cos (full width)
            _const_spec((S, D)),                                 # signed sin
            _const_spec((1, D2)),                                # lambda row
            _const_spec((D2, H2)),                               # segment mean matrix
            _const_spec((H2, D2)),                               # segment bcast matrix
            _const_spec((D2, D)),                                # wo_eff
            _const_spec((1, D)),                                 # bo_eff
        ],
        out_specs=pl.BlockSpec((1, tq, D), lambda b, q: (b, q, 0)),
        scratch_shapes=[
            pltpu.VMEM((S, D), MXU_DTYPE),        # rope'd q
            pltpu.VMEM((S, D), MXU_DTYPE),        # rope'd k
            pltpu.VMEM((S, D), MXU_DTYPE),        # v
            pltpu.VMEM((tq, D2), jnp.float32),    # differential head outputs
        ],
        compiler_params=pltpu.CompilerParams(
            dimension_semantics=("parallel", "arbitrary"),
            vmem_limit_bytes=_vmem_limit_bytes()),
        cost_estimate=ce,
    )(x, p["norm_g"].reshape(1, D), wqkv, bqkv, cos_full, ssin_full,
      lam_row, segm, segb, wo_eff, bo_eff)


# --------------------------------------------------------------------------
# Fused cross-attention sublayer
# --------------------------------------------------------------------------

def _cross_attn_kernel(x_ref, ctx_ref, g_ref, wq_ref, bq_ref, wkv_ref, bkv_ref,
                       wo_ref, bo_ref, o_ref, k_scr, v_scr, slab_scr,
                       *, num_heads, head_dim):
    D = x_ref.shape[2]
    hd = head_dim
    H = num_heads
    sm_scale = 1.0 / math.sqrt(hd)
    qi = pl.program_id(1)

    # K/V projection of the (un-normalized) context, once per batch element.
    @pl.when(qi == 0)
    def _project_kv():
        ctx = ctx_ref[0].astype(MXU_DTYPE)
        kv = jnp.dot(ctx, wkv_ref[...], preferred_element_type=jnp.float32) + bkv_ref[...]
        k_scr[...] = kv[:, :D].astype(k_scr.dtype)
        v_scr[...] = kv[:, D:].astype(v_scr.dtype)

    x_t = x_ref[0].astype(jnp.float32)                           # [tq, D]
    xn = _rmsnorm(x_t, g_ref[...])
    q = (jnp.dot(xn.astype(MXU_DTYPE), wq_ref[...],
                 preferred_element_type=jnp.float32) + bq_ref[...]).astype(MXU_DTYPE)

    # TODO(synk): boolean patch_mask path (attn_mask = patch_mask == 0) not
    # wired; mask=None only (matches the test invocation).
    for h in range(H):
        c = h * hd
        slab_scr[:, c:c + hd] = _attn_head(q[:, c:c + hd], k_scr[:, c:c + hd],
                                           v_scr[:, c:c + hd], sm_scale)

    o = jnp.dot(slab_scr[...].astype(MXU_DTYPE), wo_ref[...],
                preferred_element_type=jnp.float32) + bo_ref[...]
    o_ref[0] = (x_t + o).astype(o_ref.dtype)                     # residual in-kernel


def cross_attn_block(p, x, context, num_heads):
    B, S, D = x.shape
    Sk = context.shape[1]
    hd = D // num_heads
    tq = _pick_tile(S, (256, 128, 64, 32, 16, 8))
    nq = S // tq

    wq = p["q_w"].astype(MXU_DTYPE)
    wkv = jnp.concatenate([p["k_w"], p["v_w"]], axis=1).astype(MXU_DTYPE)
    bkv = jnp.concatenate([p["k_b"], p["v_b"]]).reshape(1, 2 * D)
    wo = p["o_w"].astype(MXU_DTYPE)

    kern = functools.partial(_cross_attn_kernel, num_heads=num_heads, head_dim=hd)
    ce = pl.CostEstimate(
        flops=int(4 * B * S * D * D + 4 * B * Sk * D * D
                  + 4 * B * num_heads * S * Sk * hd),
        transcendentals=int(B * num_heads * S * Sk),
        bytes_accessed=int(4 * (2 * B * S * D + B * Sk * D) + 2 * 4 * D * D))

    return pl.pallas_call(
        kern,
        out_shape=jax.ShapeDtypeStruct((B, S, D), x.dtype),
        grid=(B, nq),
        in_specs=[
            pl.BlockSpec((1, tq, D), lambda b, q: (b, q, 0)),    # x rows (q + residual)
            pl.BlockSpec((1, Sk, D), lambda b, q: (b, 0, 0)),    # context
            _const_spec((1, D)),                                 # rmsnorm g
            _const_spec((D, D)),                                 # wq
            _const_spec((1, D)),                                 # bq
            _const_spec((D, 2 * D)),                             # [Wk|Wv]
            _const_spec((1, 2 * D)),                             # [bk|bv]
            _const_spec((D, D)),                                 # wo
            _const_spec((1, D)),                                 # bo
        ],
        out_specs=pl.BlockSpec((1, tq, D), lambda b, q: (b, q, 0)),
        scratch_shapes=[
            pltpu.VMEM((Sk, D), MXU_DTYPE),       # k
            pltpu.VMEM((Sk, D), MXU_DTYPE),       # v
            pltpu.VMEM((tq, D), jnp.float32),     # per-head output slab
        ],
        compiler_params=pltpu.CompilerParams(
            dimension_semantics=("parallel", "arbitrary"),
            vmem_limit_bytes=_vmem_limit_bytes()),
        cost_estimate=ce,
    )(x, context, p["norm_g"].reshape(1, D), wq, p["q_b"].reshape(1, D),
      wkv, bkv, wo, p["o_b"].reshape(1, D))


# --------------------------------------------------------------------------
# Fused SwiGLU FFN sublayer (rows x intermediate-tile grid, f32 accumulator)
# --------------------------------------------------------------------------

def _ffn_kernel(x_ref, g_ref, w13_ref, b13_ref, w2_ref, b2_ref, o_ref,
                xn_scr, acc_scr, *, inter_tile):
    j = pl.program_id(1)

    @pl.when(j == 0)
    def _init():
        xn = _rmsnorm(x_ref[...].astype(jnp.float32), g_ref[...])
        xn_scr[...] = xn.astype(xn_scr.dtype)
        acc_scr[...] = jnp.zeros_like(acc_scr)

    h13 = jnp.dot(xn_scr[...], w13_ref[...],
                  preferred_element_type=jnp.float32) + b13_ref[...]
    h1 = h13[:, :inter_tile]
    h3 = h13[:, inter_tile:]
    h = h1 * jax.nn.sigmoid(h1) * h3                            # SwiGLU (f32 VPU)
    acc_scr[...] += jnp.dot(h.astype(MXU_DTYPE), w2_ref[...],
                            preferred_element_type=jnp.float32)

    @pl.when(j == pl.num_programs(1) - 1)
    def _finalize():
        o_ref[...] = (x_ref[...].astype(jnp.float32) + acc_scr[...]
                      + b2_ref[...]).astype(o_ref.dtype)        # residual in-kernel


def ffn_block(p, x):
    B, S, D = x.shape
    inter = p["w1"].shape[1]
    n = B * S
    x2 = x.reshape(n, D)

    tm = 256 if n >= 256 else _round_up(n, 8)                   # MXU-friendly row tile
    n_pad = _round_up(n, tm)
    if n_pad != n:
        x2 = jnp.pad(x2, ((0, n_pad - n), (0, 0)))

    ti = _pick_tile(inter, (512, 256, 128))                     # intermediate tile
    nt = inter // ti

    # [w1_tile | w3_tile] interleaved per intermediate tile -> one wide matmul/tile.
    w13 = jnp.concatenate([p["w1"].reshape(D, nt, ti), p["w3"].reshape(D, nt, ti)],
                          axis=2).reshape(D, nt * 2 * ti).astype(MXU_DTYPE)
    b13 = jnp.concatenate([p["b1"].reshape(nt, ti), p["b3"].reshape(nt, ti)],
                          axis=1).reshape(1, nt * 2 * ti)
    w2 = p["w2"].astype(MXU_DTYPE)

    kern = functools.partial(_ffn_kernel, inter_tile=ti)
    ce = pl.CostEstimate(flops=int(6 * n_pad * D * inter),
                         transcendentals=int(n_pad * inter),
                         bytes_accessed=int(4 * 2 * n_pad * D + 2 * 3 * D * inter))

    out = pl.pallas_call(
        kern,
        out_shape=jax.ShapeDtypeStruct((n_pad, D), x.dtype),
        grid=(n_pad // tm, nt),
        in_specs=[
            pl.BlockSpec((tm, D), lambda i, j: (i, 0)),          # x rows
            _const_spec((1, D)),                                 # rmsnorm g
            pl.BlockSpec((D, 2 * ti), lambda i, j: (0, j)),      # [w1|w3] tile
            pl.BlockSpec((1, 2 * ti), lambda i, j: (0, j)),      # [b1|b3] tile
            pl.BlockSpec((ti, D), lambda i, j: (j, 0)),          # w2 tile
            _const_spec((1, D)),                                 # b2
        ],
        out_specs=pl.BlockSpec((tm, D), lambda i, j: (i, 0)),
        scratch_shapes=[
            pltpu.VMEM((tm, D), MXU_DTYPE),       # normalized rows (reused over j)
            pltpu.VMEM((tm, D), jnp.float32),     # f32 accumulator
        ],
        compiler_params=pltpu.CompilerParams(
            dimension_semantics=("parallel", "arbitrary"),
            vmem_limit_bytes=_vmem_limit_bytes()),
        cost_estimate=ce,
    )(x2, p["norm_g"].reshape(1, D), w13, b13, w2, p["b2"].reshape(1, D))
    return out[:n].reshape(B, S, D)


# --------------------------------------------------------------------------
# Layer wiring
# --------------------------------------------------------------------------

@functools.partial(jax.jit, static_argnames=("num_heads",))
def encoder_layer(params, x, cross_context, positions, num_heads):
    # EncoderLayer: self-attn (is_causal=False) -> cross-attn -> FFN; residuals
    # in-kernel; all nn.Dropout layers are identity (inference / eval mode).
    # TODO(synk): self_mask is computed but never applied to SDPA in the
    # reference module, so it is (correctly) ignored here as well.
    h = self_attn_block(params["self"], x, positions, num_heads)
    if cross_context is not None:
        h = cross_attn_block(params["cross"], h, cross_context, num_heads)
    out = ffn_block(params["ffn"], h)
    return out


# --------------------------------------------------------------------------
# Deterministic parameter init (shapes from the PyTorch module __init__).
# Linear weights stored [D_in, D_out] (transpose of nn.Linear's [out, in]).
# --------------------------------------------------------------------------

def init_params(key, D, H, inter):
    hd = D // H
    keys = list(jax.random.split(key, 24))
    kit = iter(keys)

    def lin(din, dout):
        kw, kb = jax.random.split(next(kit))
        bound = 1.0 / math.sqrt(din)
        w = jax.random.uniform(kw, (din, dout), jnp.float32, -bound, bound)
        b = jax.random.uniform(kb, (dout,), jnp.float32, -bound, bound)
        return w, b

    g_init = jnp.ones((D,), jnp.float32) + RMS_EPS               # RMSNorm g = 1 + eps

    cq_w, cq_b = lin(D, D); ck_w, ck_b = lin(D, D)
    cv_w, cv_b = lin(D, D); co_w, co_b = lin(D, D)
    cross = dict(q_w=cq_w, q_b=cq_b, k_w=ck_w, k_b=ck_b, v_w=cv_w, v_b=cv_b,
                 o_w=co_w, o_b=co_b, norm_g=g_init)

    sq_w, sq_b = lin(D, D); sk_w, sk_b = lin(D, D)
    sv_w, sv_b = lin(D, D); so_w, so_b = lin(D, D)
    base_lambda = 0.8 - 0.6 * math.exp(-0.3 * (1 - 1))           # layer_idx = 1
    dim_scale = 0.01 / math.sqrt(D)
    self_p = dict(
        q_w=sq_w, q_b=sq_b, k_w=sk_w, k_b=sk_b, v_w=sv_w, v_b=sv_b,
        o_w=so_w, o_b=so_b, norm_g=g_init,
        hn_gamma=jnp.ones((H,), jnp.float32),
        hn_beta=jnp.zeros((H,), jnp.float32),
        lambda_init=jnp.full((1, H), base_lambda, jnp.float32),
        lambda_q1=jax.random.normal(next(kit), (1, H, hd), jnp.float32) * dim_scale,
        lambda_k1=jax.random.normal(next(kit), (1, H, hd), jnp.float32) * dim_scale,
        lambda_q2=jax.random.normal(next(kit), (1, H, hd), jnp.float32) * dim_scale,
        lambda_k2=jax.random.normal(next(kit), (1, H, hd), jnp.float32) * dim_scale,
    )

    w1, b1 = lin(D, inter); w2, b2 = lin(inter, D); w3, b3 = lin(D, inter)
    ffn_p = dict(w1=w1, b1=b1, w2=w2, b2=b2, w3=w3, b3=b3, norm_g=g_init)

    return dict(cross=cross, self=self_p, ffn=ffn_p)


# --------------------------------------------------------------------------

if __name__ == "__main__":
    B, S, Sk, D, H, INTER = 2, 8, 8, 32, 4, 64                   # head_dim = 8 (even)
    key = jax.random.PRNGKey(0)
    kp, kx, kc = jax.random.split(key, 3)

    params = init_params(kp, D, H, INTER)
    x = jax.random.normal(kx, (B, S, D), jnp.float32)
    cross_context = jax.random.normal(kc, (B, Sk, D), jnp.float32)
    positions = jnp.arange(S, dtype=jnp.int32)

    _single_buffer_supported()        # run the feature probe outside the jit trace

    out = encoder_layer(params, x, cross_context, positions, num_heads=H)
    out = jax.block_until_ready(out)

    assert out.shape == (B, S, D), out.shape
    assert bool(jnp.all(jnp.isfinite(out)))
    print("KERNEL_OK")
</pallas_src>

<mosaic_0001>
module attributes {stable_mosaic.version = 11 : i64} {
  func.func @_probe(%arg0: i32, %arg1: memref<8x128xf32, #tpu.memory_space<vmem>>, %arg2: memref<8x128xf32, #tpu.memory_space<vmem>>) attributes {dimension_semantics = [#tpu.dimension_semantics<arbitrary>], iteration_bounds = array<i64: 1>, scalar_prefetch = 0 : i64, scratch_operands = 0 : i64, tpu.core_type = #tpu.core_type<tc>, window_params = [{pipeline_mode = #tpu.pipeline_mode<synchronous>, transform_indices = @transform_0, window_bounds = array<i64: 8, 128>}, {pipeline_mode = #tpu.pipeline_mode<synchronous>, transform_indices = @transform_1, window_bounds = array<i64: 8, 128>}]} {
    %c0 = arith.constant 0 : index
    %c0_0 = arith.constant 0 : index
    %0 = vector.load %arg1[%c0, %c0_0] : memref<8x128xf32, #tpu.memory_space<vmem>>, vector<8x128xf32>
    %cst = arith.constant 1.000000e+00 : f32
    %1 = vector.broadcast %cst : f32 to vector<8x128xf32>
    %2 = arith.addf %0, %1 : vector<8x128xf32>
    %c0_1 = arith.constant 0 : index
    %c0_2 = arith.constant 0 : index
    %3 = vector.load %arg2[%c0_1, %c0_2] : memref<8x128xf32, #tpu.memory_space<vmem>>, vector<8x128xf32>
    tpu.vector_store %arg2[%c0_1, %c0_2], %2 {strides = array<i32>} : memref<8x128xf32, #tpu.memory_space<vmem>>, vector<8x128xf32>,
    return
  }
  func.func @transform_0(%arg0: i32) -> (i32, i32) {
    %c0_i32 = arith.constant 0 : i32
    %c0_i32_0 = arith.constant 0 : i32
    %c0_i32_1 = arith.constant 0 : i32
    return %c0_i32, %c0_i32_0 : i32, i32
  }
  func.func @transform_1(%arg0: i32) -> (i32, i32) {
    %c0_i32 = arith.constant 0 : i32
    %c0_i32_0 = arith.constant 0 : i32
    %c0_i32_1 = arith.constant 0 : i32
    return %c0_i32, %c0_i32_0 : i32, i32
  }
}

module attributes {stable_mosaic.version = 11 : i64} {
  func.func @_self_attn_kernel(%arg0: i32, %arg1: i32, %arg2: memref<1x8x32xf32, #tpu.memory_space<vmem>>, %arg3: memref<1x32xf32, #tpu.memory_space<vmem>>, %arg4: memref<32x96xbf16, #tpu.memory_space<vmem>>, %arg5: memref<1x96xf32, #tpu.memory_space<vmem>>, %arg6: memref<8x32xf32, #tpu.memory_space<vmem>>, %arg7: memref<8x32xf32, #tpu.memory_space<vmem>>, %arg8: memref<1x16xf32, #tpu.memory_space<vmem>>, %arg9: memref<16x2xf32, #tpu.memory_space<vmem>>, %arg10: memref<2x16xf32, #tpu.memory_space<vmem>>, %arg11: memref<16x32xbf16, #tpu.memory_space<vmem>>, %arg12: memref<1x32xf32, #tpu.memory_space<vmem>>, %arg13: memref<1x8x32xf32, #tpu.memory_space<vmem>>, %arg14: memref<8x32xbf16, #tpu.memory_space<vmem>>, %arg15: memref<8x32xbf16, #tpu.memory_space<vmem>>, %arg16: memref<8x32xbf16, #tpu.memory_space<vmem>>, %arg17: memref<8x16xf32, #tpu.memory_space<vmem>>) attributes {dimension_semantics = [#tpu.dimension_semantics<parallel>, #tpu.dimension_semantics<arbitrary>], iteration_bounds = array<i64: 2, 1>, scalar_prefetch = 0 : i64, scratch_operands = 4 : i64, tpu.core_type = #tpu.core_type<tc>, window_params = [{transform_indices = @transform_0, window_bounds = array<i64: 1, 8, 32>}, {pipeline_mode = #tpu.pipeline_mode<synchronous>, transform_indices = @transform_1, window_bounds = array<i64: 1, 32>}, {pipeline_mode = #tpu.pipeline_mode<synchronous>, transform_indices = @transform_2, window_bounds = array<i64: 32, 96>}, {pipeline_mode = #tpu.pipeline_mode<synchronous>, transform_indices = @transform_3, window_bounds = array<i64: 1, 96>}, {pipeline_mode = #tpu.pipeline_mode<synchronous>, transform_indices = @transform_4, window_bounds = array<i64: 8, 32>}, {pipeline_mode = #tpu.pipeline_mode<synchronous>, transform_indices = @transform_5, window_bounds = array<i64: 8, 32>}, {pipeline_mode = #tpu.pipeline_mode<synchronous>, transform_indices = @transform_6, window_bounds = array<i64: 1, 16>}, {pipeline_mode = #tpu.pipeline_mode<synchronous>, transform_indices = @transform_7, window_bounds = array<i64: 16, 2>}, {pipeline_mode = #tpu.pipeline_mode<synchronous>, transform_indices = @transform_8, window_bounds = array<i64: 2, 16>}, {pipeline_mode = #tpu.pipeline_mode<synchronous>, transform_indices = @transform_9, window_bounds = array<i64: 16, 32>}, {pipeline_mode = #tpu.pipeline_mode<synchronous>, transform_indices = @transform_10, window_bounds = array<i64: 1, 32>}, {transform_indices = @transform_11, window_bounds = array<i64: 1, 8, 32>}]} {
    %c0_i32 = arith.constant 0 : i32
    %0 = arith.cmpi eq, %arg1, %c0_i32 : i32
    %1 = arith.extui %0 : i1 to i32
    %c0_i32_0 = arith.constant 0 : i32
    %2 = arith.cmpi ne, %1, %c0_i32_0 : i32
    scf.if %2 {
      %c0_72 = arith.constant 0 : index
      %c0_73 = arith.constant 0 : index
      %c0_74 = arith.constant 0 : index
      %132 = vector.load %arg2[%c0_72, %c0_73, %c0_74] : memref<1x8x32xf32, #tpu.memory_space<vmem>>, vector<1x8x32xf32>
      %133 = vector.shape_cast %132 : vector<1x8x32xf32> to vector<8x32xf32>
      %c0_75 = arith.constant 0 : index
      %c0_76 = arith.constant 0 : index
      %134 = vector.load %arg3[%c0_75, %c0_76] : memref<1x32xf32, #tpu.memory_space<vmem>>, vector<1x32xf32>
      %cst_77 = arith.constant 9.99999997E-7 : f32
      %135 = vector.broadcast %cst_77 : f32 to vector<8x32xf32>
      %136 = arith.addf %133, %135 : vector<8x32xf32>
      %cst_78 = arith.constant 9.99999997E-7 : f32
      %137 = vector.broadcast %cst_78 : f32 to vector<8x32xf32>
      %138 = arith.addf %136, %137 : vector<8x32xf32>
      %139 = arith.mulf %138, %138 : vector<8x32xf32>
      %cst_79 = arith.constant dense<0.000000e+00> : vector<8xf32>
      %140 = vector.multi_reduction <add>, %139, %cst_79 [1] : vector<8x32xf32> to vector<8xf32>
      %141 = vector.shape_cast %140 : vector<8xf32> to vector<8x1xf32>
      %142 = math.sqrt %141 : vector<8x1xf32>
      %cst_80 = arith.constant 5.65685415 : f32
      %143 = vector.broadcast %cst_80 : f32 to vector<8x1xf32>
      %144 = arith.mulf %142, %143 : vector<8x1xf32>
      %cst_81 = arith.constant 9.99999997E-7 : f32
      %145 = vector.broadcast %cst_81 : f32 to vector<8x1xf32>
      %146 = arith.addf %144, %145 : vector<8x1xf32>
      %cst_82 = arith.constant 1.000000e+00 : f32
      %147 = vector.broadcast %cst_82 : f32 to vector<8x1xf32>
      %148 = arith.divf %147, %146 : vector<8x1xf32>
      %149 = vector.broadcast %148 : vector<8x1xf32> to vector<8x32xf32>
      %150 = arith.mulf %136, %149 : vector<8x32xf32>
      %151 = vector.broadcast %134 : vector<1x32xf32> to vector<8x32xf32>
      %152 = arith.mulf %150, %151 : vector<8x32xf32>
      %153 = arith.truncf %152 : vector<8x32xf32> to vector<8x32xbf16>
      %c0_83 = arith.constant 0 : index
      %c0_84 = arith.constant 0 : index
      %154 = vector.load %arg4[%c0_83, %c0_84] : memref<32x96xbf16, #tpu.memory_space<vmem>>, vector<32x96xbf16>
      %cst_85 = arith.constant dense<0.000000e+00> : vector<8x96xf32>
      %155 = tpu.matmul %153, %154, %cst_85 {dimension_numbers = #tpu.dot_dimension_numbers<[1], [0], [0], [1], [0, 0, 1, 1], [], []>} : vector<8x32xbf16>, vector<32x96xbf16>, vector<8x96xf32> -> vector<8x96xf32>
      %c0_86 = arith.constant 0 : index
      %c0_87 = arith.constant 0 : index
      %156 = vector.load %arg5[%c0_86, %c0_87] : memref<1x96xf32, #tpu.memory_space<vmem>>, vector<1x96xf32>
      %157 = vector.broadcast %156 : vector<1x96xf32> to vector<8x96xf32>
      %158 = arith.addf %155, %157 : vector<8x96xf32>
      %159 = vector.extract_strided_slice %158 {offsets = [0, 0], sizes = [8, 32], strides = [1, 1]} : vector<8x96xf32> to vector<8x32xf32>
      %160 = vector.extract_strided_slice %158 {offsets = [0, 32], sizes = [8, 32], strides = [1, 1]} : vector<8x96xf32> to vector<8x32xf32>
      %161 = vector.extract_strided_slice %158 {offsets = [0, 64], sizes = [8, 32], strides = [1, 1]} : vector<8x96xf32> to vector<8x32xf32>
      %162 = tpu.iota {dimensions = array<i32: 1>} : vector<8x32xi32>
      %c8_i32_88 = arith.constant 8 : i32
      %c0_i32_89 = arith.constant 0 : i32
      %163 = arith.cmpi eq, %c8_i32_88, %c0_i32_89 : i32
      %c1_i32 = arith.constant 1 : i32
      %164 = arith.select %163, %c1_i32, %c8_i32_88 : i32
      %165 = vector.broadcast %164 : i32 to vector<8x32xi32>
      %166 = arith.remsi %162, %165 : vector<8x32xi32>
      %c0_i32_90 = arith.constant 0 : i32
      %167 = vector.broadcast %c0_i32_90 : i32 to vector<8x32xi32>
      %168 = arith.cmpi ne, %166, %167 : vector<8x32xi32>
      %c0_i32_91 = arith.constant 0 : i32
      %169 = vector.broadcast %c0_i32_91 : i32 to vector<8x32xi32>
      %170 = arith.cmpi slt, %166, %169 : vector<8x32xi32>
      %c0_i32_92 = arith.constant 0 : i32
      %171 = arith.cmpi slt, %164, %c0_i32_92 : i32
      %172 = vector.broadcast %171 : i1 to vector<8x32xi1>
      %173 = vector.broadcast %172 : vector<8x32xi1> to vector<8x32xi1>
      %174 = arith.xori %170, %173 : vector<8x32xi1>
      %175 = arith.andi %174, %168 : vector<8x32xi1>
      %176 = vector.broadcast %164 : i32 to vector<8x32xi32>
      %177 = arith.addi %166, %176 : vector<8x32xi32>
      %178 = arith.select %175, %177, %166 : vector<8x32xi1>, vector<8x32xi32>
      %c4_i32 = arith.constant 4 : i32
      %179 = vector.broadcast %c4_i32 : i32 to vector<8x32xi32>
      %180 = arith.cmpi slt, %178, %179 : vector<8x32xi32>
      %c0_93 = arith.constant 0 : index
      %c0_94 = arith.constant 0 : index
      %181 = vector.load %arg6[%c0_93, %c0_94] : memref<8x32xf32, #tpu.memory_space<vmem>>, vector<8x32xf32>
      %c0_95 = arith.constant 0 : index
      %c0_96 = arith.constant 0 : index
      %182 = vector.load %arg7[%c0_95, %c0_96] : memref<8x32xf32, #tpu.memory_space<vmem>>, vector<8x32xf32>
      %c28_i32 = arith.constant 28 : i32
      %183 = tpu.dynamic_rotate %159 by %c28_i32 dim 1 : vector<8x32xf32>, i32 -> vector<8x32xf32>
      %c4_i32_97 = arith.constant 4 : i32
      %184 = tpu.dynamic_rotate %159 by %c4_i32_97 dim 1 : vector<8x32xf32>, i32 -> vector<8x32xf32>
      %185 = arith.select %180, %183, %184 : vector<8x32xi1>, vector<8x32xf32>
      %186 = arith.mulf %159, %181 : vector<8x32xf32>
      %187 = arith.mulf %185, %182 : vector<8x32xf32>
      %188 = arith.addf %186, %187 : vector<8x32xf32>
      %189 = arith.truncf %188 : vector<8x32xf32> to vector<8x32xbf16>
      %c0_98 = arith.constant 0 : index
      %c0_99 = arith.constant 0 : index
      %190 = vector.load %arg14[%c0_98, %c0_99] : memref<8x32xbf16, #tpu.memory_space<vmem>>, vector<8x32xbf16>
      tpu.vector_store %arg14[%c0_98, %c0_99], %189 {strides = array<i32>} : memref<8x32xbf16, #tpu.memory_space<vmem>>, vector<8x32xbf16>,
      %c28_i32_100 = arith.constant 28 : i32
      %191 = tpu.dynamic_rotate %160 by %c28_i32_100 dim 1 : vector<8x32xf32>, i32 -> vector<8x32xf32>
      %c4_i32_101 = arith.constant 4 : i32
      %192 = tpu.dynamic_rotate %160 by %c4_i32_101 dim 1 : vector<8x32xf32>, i32 -> vector<8x32xf32>
      %193 = arith.select %180, %191, %192 : vector<8x32xi1>, vector<8x32xf32>
      %194 = arith.mulf %160, %181 : vector<8x32xf32>
      %195 = arith.mulf %193, %182 : vector<8x32xf32>
      %196 = arith.addf %194, %195 : vector<8x32xf32>
      %197 = arith.truncf %196 : vector<8x32xf32> to vector<8x32xbf16>
      %c0_102 = arith.constant 0 : index
      %c0_103 = arith.constant 0 : index
      %198 = vector.load %arg15[%c0_102, %c0_103] : memref<8x32xbf16, #tpu.memory_space<vmem>>, vector<8x32xbf16>
      tpu.vector_store %arg15[%c0_102, %c0_103], %197 {strides = array<i32>} : memref<8x32xbf16, #tpu.memory_space<vmem>>, vector<8x32xbf16>,
      %199 = arith.truncf %161 : vector<8x32xf32> to vector<8x32xbf16>
      %c0_104 = arith.constant 0 : index
      %c0_105 = arith.constant 0 : index
      %200 = vector.load %arg16[%c0_104, %c0_105] : memref<8x32xbf16, #tpu.memory_space<vmem>>, vector<8x32xbf16>
      tpu.vector_store %arg16[%c0_104, %c0_105], %199 {strides = array<i32>} : memref<8x32xbf16, #tpu.memory_space<vmem>>, vector<8x32xbf16>,
    } else {
    }
    %c8_i32 = arith.constant 8 : i32
    %3 = arith.muli %arg1, %c8_i32 : i32
    %4 = tpu.assume_multiple %3, 8 : i32
    %c0 = arith.constant 0 : index
    %c0_1 = arith.constant 0 : index
    %5 = vector.load %arg8[%c0, %c0_1] : memref<1x16xf32, #tpu.memory_space<vmem>>, vector<1x16xf32>
    %6 = arith.index_cast %4 : i32 to index
    %c0_2 = arith.constant 0 : index
    %7 = vector.load %arg14[%6, %c0_2] : memref<8x32xbf16, #tpu.memory_space<vmem>>, vector<8x8xbf16>
    %8 = arith.index_cast %4 : i32 to index
    %c16 = arith.constant 16 : index
    %9 = vector.load %arg14[%8, %c16] : memref<8x32xbf16, #tpu.memory_space<vmem>>, vector<8x8xbf16>
    %c0_3 = arith.constant 0 : index
    %c0_4 = arith.constant 0 : index
    %10 = vector.load %arg15[%c0_3, %c0_4] : memref<8x32xbf16, #tpu.memory_space<vmem>>, vector<8x8xbf16>
    %c0_5 = arith.constant 0 : index
    %c0_6 = arith.constant 0 : index
    %11 = vector.load %arg16[%c0_5, %c0_6] : memref<8x32xbf16, #tpu.memory_space<vmem>>, vector<8x8xbf16>
    %12 = tpu.transpose %10, [1, 0] : vector<8x8xbf16> -> vector<8x8xbf16>
    %cst = arith.constant dense<0.000000e+00> : vector<8x8xf32>
    %13 = tpu.matmul %7, %12, %cst {dimension_numbers = #tpu.dot_dimension_numbers<[1], [0], [0], [1], [0, 0, 1, 1], [], []>} : vector<8x8xbf16>, vector<8x8xbf16>, vector<8x8xf32> -> vector<8x8xf32>
    %cst_7 = arith.constant 0.353553385 : f32
    %14 = vector.broadcast %cst_7 : f32 to vector<8x8xf32>
    %15 = arith.mulf %13, %14 : vector<8x8xf32>
    %cst_8 = arith.constant dense<0xFF800000> : vector<8xf32>
    %16 = vector.multi_reduction <maximumf>, %15, %cst_8 [1] : vector<8x8xf32> to vector<8xf32>
    %17 = vector.shape_cast %16 : vector<8xf32> to vector<8x1xf32>
    %18 = vector.broadcast %17 : vector<8x1xf32> to vector<8x8xf32>
    %19 = arith.subf %15, %18 : vector<8x8xf32>
    %20 = math.exp %19 : vector<8x8xf32>
    %cst_9 = arith.constant dense<0.000000e+00> : vector<8xf32>
    %21 = vector.multi_reduction <add>, %20, %cst_9 [1] : vector<8x8xf32> to vector<8xf32>
    %22 = vector.shape_cast %21 : vector<8xf32> to vector<8x1xf32>
    %cst_10 = arith.constant 1.000000e+00 : f32
    %23 = vector.broadcast %cst_10 : f32 to vector<8x1xf32>
    %24 = arith.divf %23, %22 : vector<8x1xf32>
    %25 = vector.broadcast %24 : vector<8x1xf32> to vector<8x8xf32>
    %26 = arith.mulf %20, %25 : vector<8x8xf32>
    %27 = arith.truncf %26 : vector<8x8xf32> to vector<8x8xbf16>
    %cst_11 = arith.constant dense<0.000000e+00> : vector<8x8xf32>
    %28 = tpu.matmul %27, %11, %cst_11 {dimension_numbers = #tpu.dot_dimension_numbers<[1], [0], [0], [1], [0, 0, 1, 1], [], []>} : vector<8x8xbf16>, vector<8x8xbf16>, vector<8x8xf32> -> vector<8x8xf32>
    %c0_12 = arith.constant 0 : index
    %c16_13 = arith.constant 16 : index
    %29 = vector.load %arg15[%c0_12, %c16_13] : memref<8x32xbf16, #tpu.memory_space<vmem>>, vector<8x8xbf16>
    %c0_14 = arith.constant 0 : index
    %c16_15 = arith.constant 16 : index
    %30 = vector.load %arg16[%c0_14, %c16_15] : memref<8x32xbf16, #tpu.memory_space<vmem>>, vector<8x8xbf16>
    %31 = tpu.transpose %29, [1, 0] : vector<8x8xbf16> -> vector<8x8xbf16>
    %cst_16 = arith.constant dense<0.000000e+00> : vector<8x8xf32>
    %32 = tpu.matmul %9, %31, %cst_16 {dimension_numbers = #tpu.dot_dimension_numbers<[1], [0], [0], [1], [0, 0, 1, 1], [], []>} : vector<8x8xbf16>, vector<8x8xbf16>, vector<8x8xf32> -> vector<8x8xf32>
    %cst_17 = arith.constant 0.353553385 : f32
    %33 = vector.broadcast %cst_17 : f32 to vector<8x8xf32>
    %34 = arith.mulf %32, %33 : vector<8x8xf32>
    %cst_18 = arith.constant dense<0xFF800000> : vector<8xf32>
    %35 = vector.multi_reduction <maximumf>, %34, %cst_18 [1] : vector<8x8xf32> to vector<8xf32>
    %36 = vector.shape_cast %35 : vector<8xf32> to vector<8x1xf32>
    %37 = vector.broadcast %36 : vector<8x1xf32> to vector<8x8xf32>
    %38 = arith.subf %34, %37 : vector<8x8xf32>
    %39 = math.exp %38 : vector<8x8xf32>
    %cst_19 = arith.constant dense<0.000000e+00> : vector<8xf32>
    %40 = vector.multi_reduction <add>, %39, %cst_19 [1] : vector<8x8xf32> to vector<8xf32>
    %41 = vector.shape_cast %40 : vector<8xf32> to vector<8x1xf32>
    %cst_20 = arith.constant 1.000000e+00 : f32
    %42 = vector.broadcast %cst_20 : f32 to vector<8x1xf32>
    %43 = arith.divf %42, %41 : vector<8x1xf32>
    %44 = vector.broadcast %43 : vector<8x1xf32> to vector<8x8xf32>
    %45 = arith.mulf %39, %44 : vector<8x8xf32>
    %46 = arith.truncf %45 : vector<8x8xf32> to vector<8x8xbf16>
    %cst_21 = arith.constant dense<0.000000e+00> : vector<8x8xf32>
    %47 = tpu.matmul %46, %30, %cst_21 {dimension_numbers = #tpu.dot_dimension_numbers<[1], [0], [0], [1], [0, 0, 1, 1], [], []>} : vector<8x8xbf16>, vector<8x8xbf16>, vector<8x8xf32> -> vector<8x8xf32>
    %48 = vector.extract_strided_slice %5 {offsets = [0, 0], sizes = [1, 8], strides = [1, 1]} : vector<1x16xf32> to vector<1x8xf32>
    %49 = vector.broadcast %48 : vector<1x8xf32> to vector<8x8xf32>
    %50 = arith.mulf %49, %47 : vector<8x8xf32>
    %51 = arith.subf %28, %50 : vector<8x8xf32>
    %c0_22 = arith.constant 0 : index
    %c0_23 = arith.constant 0 : index
    %52 = vector.load %arg17[%c0_22, %c0_23] : memref<8x16xf32, #tpu.memory_space<vmem>>, vector<8x8xf32>
    tpu.vector_store %arg17[%c0_22, %c0_23], %51 {strides = array<i32>} : memref<8x16xf32, #tpu.memory_space<vmem>>, vector<8x8xf32>,
    %53 = arith.index_cast %4 : i32 to index
    %c8 = arith.constant 8 : index
    %54 = vector.load %arg14[%53, %c8] : memref<8x32xbf16, #tpu.memory_space<vmem>>, vector<8x8xbf16>
    %55 = arith.index_cast %4 : i32 to index
    %c24 = arith.constant 24 : index
    %56 = vector.load %arg14[%55, %c24] : memref<8x32xbf16, #tpu.memory_space<vmem>>, vector<8x8xbf16>
    %c0_24 = arith.constant 0 : index
    %c8_25 = arith.constant 8 : index
    %57 = vector.load %arg15[%c0_24, %c8_25] : memref<8x32xbf16, #tpu.memory_space<vmem>>, vector<8x8xbf16>
    %c0_26 = arith.constant 0 : index
    %c8_27 = arith.constant 8 : index
    %58 = vector.load %arg16[%c0_26, %c8_27] : memref<8x32xbf16, #tpu.memory_space<vmem>>, vector<8x8xbf16>
    %59 = tpu.transpose %57, [1, 0] : vector<8x8xbf16> -> vector<8x8xbf16>
    %cst_28 = arith.constant dense<0.000000e+00> : vector<8x8xf32>
    %60 = tpu.matmul %54, %59, %cst_28 {dimension_numbers = #tpu.dot_dimension_numbers<[1], [0], [0], [1], [0, 0, 1, 1], [], []>} : vector<8x8xbf16>, vector<8x8xbf16>, vector<8x8xf32> -> vector<8x8xf32>
    %cst_29 = arith.constant 0.353553385 : f32
    %61 = vector.broadcast %cst_29 : f32 to vector<8x8xf32>
    %62 = arith.mulf %60, %61 : vector<8x8xf32>
    %cst_30 = arith.constant dense<0xFF800000> : vector<8xf32>
    %63 = vector.multi_reduction <maximumf>, %62, %cst_30 [1] : vector<8x8xf32> to vector<8xf32>
    %64 = vector.shape_cast %63 : vector<8xf32> to vector<8x1xf32>
    %65 = vector.broadcast %64 : vector<8x1xf32> to vector<8x8xf32>
    %66 = arith.subf %62, %65 : vector<8x8xf32>
    %67 = math.exp %66 : vector<8x8xf32>
    %cst_31 = arith.constant dense<0.000000e+00> : vector<8xf32>
    %68 = vector.multi_reduction <add>, %67, %cst_31 [1] : vector<8x8xf32> to vector<8xf32>
    %69 = vector.shape_cast %68 : vector<8xf32> to vector<8x1xf32>
    %cst_32 = arith.constant 1.000000e+00 : f32
    %70 = vector.broadcast %cst_32 : f32 to vector<8x1xf32>
    %71 = arith.divf %70, %69 : vector<8x1xf32>
    %72 = vector.broadcast %71 : vector<8x1xf32> to vector<8x8xf32>
    %73 = arith.mulf %67, %72 : vector<8x8xf32>
    %74 = arith.truncf %73 : vector<8x8xf32> to vector<8x8xbf16>
    %cst_33 = arith.constant dense<0.000000e+00> : vector<8x8xf32>
    %75 = tpu.matmul %74, %58, %cst_33 {dimension_numbers = #tpu.dot_dimension_numbers<[1], [0], [0], [1], [0, 0, 1, 1], [], []>} : vector<8x8xbf16>, vector<8x8xbf16>, vector<8x8xf32> -> vector<8x8xf32>
    %c0_34 = arith.constant 0 : index
    %c24_35 = arith.constant 24 : index
    %76 = vector.load %arg15[%c0_34, %c24_35] : memref<8x32xbf16, #tpu.memory_space<vmem>>, vector<8x8xbf16>
    %c0_36 = arith.constant 0 : index
    %c24_37 = arith.constant 24 : index
    %77 = vector.load %arg16[%c0_36, %c24_37] : memref<8x32xbf16, #tpu.memory_space<vmem>>, vector<8x8xbf16>
    %78 = tpu.transpose %76, [1, 0] : vector<8x8xbf16> -> vector<8x8xbf16>
    %cst_38 = arith.constant dense<0.000000e+00> : vector<8x8xf32>
    %79 = tpu.matmul %56, %78, %cst_38 {dimension_numbers = #tpu.dot_dimension_numbers<[1], [0], [0], [1], [0, 0, 1, 1], [], []>} : vector<8x8xbf16>, vector<8x8xbf16>, vector<8x8xf32> -> vector<8x8xf32>
    %cst_39 = arith.constant 0.353553385 : f32
    %80 = vector.broadcast %cst_39 : f32 to vector<8x8xf32>
    %81 = arith.mulf %79, %80 : vector<8x8xf32>
    %cst_40 = arith.constant dense<0xFF800000> : vector<8xf32>
    %82 = vector.multi_reduction <maximumf>, %81, %cst_40 [1] : vector<8x8xf32> to vector<8xf32>
    %83 = vector.shape_cast %82 : vector<8xf32> to vector<8x1xf32>
    %84 = vector.broadcast %83 : vector<8x1xf32> to vector<8x8xf32>
    %85 = arith.subf %81, %84 : vector<8x8xf32>
    %86 = math.exp %85 : vector<8x8xf32>
    %cst_41 = arith.constant dense<0.000000e+00> : vector<8xf32>
    %87 = vector.multi_reduction <add>, %86, %cst_41 [1] : vector<8x8xf32> to vector<8xf32>
    %88 = vector.shape_cast %87 : vector<8xf32> to vector<8x1xf32>
    %cst_42 = arith.constant 1.000000e+00 : f32
    %89 = vector.broadcast %cst_42 : f32 to vector<8x1xf32>
    %90 = arith.divf %89, %88 : vector<8x1xf32>
    %91 = vector.broadcast %90 : vector<8x1xf32> to vector<8x8xf32>
    %92 = arith.mulf %86, %91 : vector<8x8xf32>
    %93 = arith.truncf %92 : vector<8x8xf32> to vector<8x8xbf16>
    %cst_43 = arith.constant dense<0.000000e+00> : vector<8x8xf32>
    %94 = tpu.matmul %93, %77, %cst_43 {dimension_numbers = #tpu.dot_dimension_numbers<[1], [0], [0], [1], [0, 0, 1, 1], [], []>} : vector<8x8xbf16>, vector<8x8xbf16>, vector<8x8xf32> -> vector<8x8xf32>
    %95 = vector.extract_strided_slice %5 {offsets = [0, 8], sizes = [1, 8], strides = [1, 1]} : vector<1x16xf32> to vector<1x8xf32>
    %96 = vector.broadcast %95 : vector<1x8xf32> to vector<8x8xf32>
    %97 = arith.mulf %96, %94 : vector<8x8xf32>
    %98 = arith.subf %75, %97 : vector<8x8xf32>
    %c0_44 = arith.constant 0 : index
    %c8_45 = arith.constant 8 : index
    %99 = vector.load %arg17[%c0_44, %c8_45] : memref<8x16xf32, #tpu.memory_space<vmem>>, vector<8x8xf32>
    tpu.vector_store %arg17[%c0_44, %c8_45], %98 {strides = array<i32>} : memref<8x16xf32, #tpu.memory_space<vmem>>, vector<8x8xf32>,
    %c0_46 = arith.constant 0 : index
    %c0_47 = arith.constant 0 : index
    %100 = vector.load %arg17[%c0_46, %c0_47] : memref<8x16xf32, #tpu.memory_space<vmem>>, vector<8x16xf32>
    %c0_48 = arith.constant 0 : index
    %c0_49 = arith.constant 0 : index
    %101 = vector.load %arg9[%c0_48, %c0_49] : memref<16x2xf32, #tpu.memory_space<vmem>>, vector<16x2xf32>
    %cst_50 = arith.constant dense<0.000000e+00> : vector<8x2xf32>
    %102 = tpu.matmul %100, %101, %cst_50 {dimension_numbers = #tpu.dot_dimension_numbers<[1], [0], [0], [1], [0, 0, 1, 1], [], []>} : vector<8x16xf32>, vector<16x2xf32>, vector<8x2xf32> -> vector<8x2xf32>
    %103 = arith.mulf %100, %100 : vector<8x16xf32>
    %c0_51 = arith.constant 0 : index
    %c0_52 = arith.constant 0 : index
    %104 = vector.load %arg9[%c0_51, %c0_52] : memref<16x2xf32, #tpu.memory_space<vmem>>, vector<16x2xf32>
    %cst_53 = arith.constant dense<0.000000e+00> : vector<8x2xf32>
    %105 = tpu.matmul %103, %104, %cst_53 {dimension_numbers = #tpu.dot_dimension_numbers<[1], [0], [0], [1], [0, 0, 1, 1], [], []>} : vector<8x16xf32>, vector<16x2xf32>, vector<8x2xf32> -> vector<8x2xf32>
    %c0_54 = arith.constant 0 : index
    %c0_55 = arith.constant 0 : index
    %106 = vector.load %arg10[%c0_54, %c0_55] : memref<2x16xf32, #tpu.memory_space<vmem>>, vector<2x16xf32>
    %cst_56 = arith.constant dense<0.000000e+00> : vector<8x16xf32>
    %107 = tpu.matmul %102, %106, %cst_56 {dimension_numbers = #tpu.dot_dimension_numbers<[1], [0], [0], [1], [0, 0, 1, 1], [], []>} : vector<8x2xf32>, vector<2x16xf32>, vector<8x16xf32> -> vector<8x16xf32>
    %c0_57 = arith.constant 0 : index
    %c0_58 = arith.constant 0 : index
    %108 = vector.load %arg10[%c0_57, %c0_58] : memref<2x16xf32, #tpu.memory_space<vmem>>, vector<2x16xf32>
    %cst_59 = arith.constant dense<0.000000e+00> : vector<8x16xf32>
    %109 = tpu.matmul %105, %108, %cst_59 {dimension_numbers = #tpu.dot_dimension_numbers<[1], [0], [0], [1], [0, 0, 1, 1], [], []>} : vector<8x2xf32>, vector<2x16xf32>, vector<8x16xf32> -> vector<8x16xf32>
    %110 = arith.mulf %107, %107 : vector<8x16xf32>
    %111 = arith.subf %109, %110 : vector<8x16xf32>
    %cst_60 = arith.constant 0.000000e+00 : f32
    %112 = vector.broadcast %cst_60 : f32 to vector<8x16xf32>
    %113 = arith.maximumf %111, %112 : vector<8x16xf32>
    %114 = arith.subf %100, %107 : vector<8x16xf32>
    %cst_61 = arith.constant 9.99999974E-6 : f32
    %115 = vector.broadcast %cst_61 : f32 to vector<8x16xf32>
    %116 = arith.addf %113, %115 : vector<8x16xf32>
    %117 = math.rsqrt %116 : vector<8x16xf32>
    %118 = arith.mulf %114, %117 : vector<8x16xf32>
    %119 = arith.truncf %118 : vector<8x16xf32> to vector<8x16xbf16>
    %c0_62 = arith.constant 0 : index
    %c0_63 = arith.constant 0 : index
    %120 = vector.load %arg11[%c0_62, %c0_63] : memref<16x32xbf16, #tpu.memory_space<vmem>>, vector<16x32xbf16>
    %cst_64 = arith.constant dense<0.000000e+00> : vector<8x32xf32>
    %121 = tpu.matmul %119, %120, %cst_64 {dimension_numbers = #tpu.dot_dimension_numbers<[1], [0], [0], [1], [0, 0, 1, 1], [], []>} : vector<8x16xbf16>, vector<16x32xbf16>, vector<8x32xf32> -> vector<8x32xf32>
    %c0_65 = arith.constant 0 : index
    %c0_66 = arith.constant 0 : index
    %122 = vector.load %arg12[%c0_65, %c0_66] : memref<1x32xf32, #tpu.memory_space<vmem>>, vector<1x32xf32>
    %123 = vector.broadcast %122 : vector<1x32xf32> to vector<8x32xf32>
    %124 = arith.addf %121, %123 : vector<8x32xf32>
    %c0_67 = arith.constant 0 : index
    %125 = arith.index_cast %4 : i32 to index
    %c0_68 = arith.constant 0 : index
    %126 = vector.load %arg2[%c0_67, %125, %c0_68] : memref<1x8x32xf32, #tpu.memory_space<vmem>>, vector<1x8x32xf32>
    %127 = vector.shape_cast %126 : vector<1x8x32xf32> to vector<8x32xf32>
    %128 = arith.addf %127, %124 : vector<8x32xf32>
    %c0_69 = arith.constant 0 : index
    %c0_70 = arith.constant 0 : index
    %c0_71 = arith.constant 0 : index
    %129 = vector.load %arg13[%c0_69, %c0_70, %c0_71] : memref<1x8x32xf32, #tpu.memory_space<vmem>>, vector<1x8x32xf32>
    %130 = vector.shape_cast %129 : vector<1x8x32xf32> to vector<8x32xf32>
    %131 = vector.shape_cast %128 : vector<8x32xf32> to vector<1x8x32xf32>
    tpu.vector_store %arg13[%c0_69, %c0_70, %c0_71], %131 {strides = array<i32>} : memref<1x8x32xf32, #tpu.memory_space<vmem>>, vector<1x8x32xf32>,
    return
  }
  func.func @transform_0(%arg0: i32, %arg1: i32) -> (i32, i32, i32) {
    %c0_i32 = arith.constant 0 : i32
    %c0_i32_0 = arith.constant 0 : i32
    %c0_i32_1 = arith.constant 0 : i32
    return %arg0, %c0_i32, %c0_i32_0 : i32, i32, i32
  }
  func.func @transform_1(%arg0: i32, %arg1: i32) -> (i32, i32) {
    %c0_i32 = arith.constant 0 : i32
    %c0_i32_0 = arith.constant 0 : i32
    %c0_i32_1 = arith.constant 0 : i32
    return %c0_i32, %c0_i32_0 : i32, i32
  }
  func.func @transform_2(%arg0: i32, %arg1: i32) -> (i32, i32) {
    %c0_i32 = arith.constant 0 : i32
    %c0_i32_0 = arith.constant 0 : i32
    %c0_i32_1 = arith.constant 0 : i32
    return %c0_i32, %c0_i32_0 : i32, i32
  }
  func.func @transform_3(%arg0: i32, %arg1: i32) -> (i32, i32) {
    %c0_i32 = arith.constant 0 : i32
    %c0_i32_0 = arith.constant 0 : i32
    %c0_i32_1 = arith.constant 0 : i32
    return %c0_i32, %c0_i32_0 : i32, i32
  }
  func.func @transform_4(%arg0: i32, %arg1: i32) -> (i32, i32) {
    %c0_i32 = arith.constant 0 : i32
    %c0_i32_0 = arith.constant 0 : i32
    %c0_i32_1 = arith.constant 0 : i32
    return %c0_i32, %c0_i32_0 : i32, i32
  }
  func.func @transform_5(%arg0: i32, %arg1: i32) -> (i32, i32) {
    %c0_i32 = arith.constant 0 : i32
    %c0_i32_0 = arith.constant 0 : i32
    %c0_i32_1 = arith.constant 0 : i32
    return %c0_i32, %c0_i32_0 : i32, i32
  }
  func.func @transform_6(%arg0: i32, %arg1: i32) -> (i32, i32) {
    %c0_i32 = arith.constant 0 : i32
    %c0_i32_0 = arith.constant 0 : i32
    %c0_i32_1 = arith.constant 0 : i32
    return %c0_i32, %c0_i32_0 : i32, i32
  }
  func.func @transform_7(%arg0: i32, %arg1: i32) -> (i32, i32) {
    %c0_i32 = arith.constant 0 : i32
    %c0_i32_0 = arith.constant 0 : i32
    %c0_i32_1 = arith.constant 0 : i32
    return %c0_i32, %c0_i32_0 : i32, i32
  }
  func.func @transform_8(%arg0: i32, %arg1: i32) -> (i32, i32) {
    %c0_i32 = arith.constant 0 : i32
    %c0_i32_0 = arith.constant 0 : i32
    %c0_i32_1 = arith.constant 0 : i32
    return %c0_i32, %c0_i32_0 : i32, i32
  }
  func.func @transform_9(%arg0: i32, %arg1: i32) -> (i32, i32) {
    %c0_i32 = arith.constant 0 : i32
    %c0_i32_0 = arith.constant 0 : i32
    %c0_i32_1 = arith.constant 0 : i32
    return %c0_i32, %c0_i32_0 : i32, i32
  }
  func.func @transform_10(%arg0: i32, %arg1: i32) -> (i32, i32) {
    %c0_i32 = arith.constant 0 : i32
    %c0_i32_0 = arith.constant 0 : i32
    %c0_i32_1 = arith.constant 0 : i32
    return %c0_i32, %c0_i32_0 : i32, i32
  }
  func.func @transform_11(%arg0: i32, %arg1: i32) -> (i32, i32, i32) {
    %c0_i32 = arith.constant 0 : i32
    %c0_i32_0 = arith.constant 0 : i32
    return %arg0, %arg1, %c0_i32 : i32, i32, i32
  }
}

module attributes {stable_mosaic.version = 11 : i64} {
  func.func @_cross_attn_kernel(%arg0: i32, %arg1: i32, %arg2: memref<1x8x32xf32, #tpu.memory_space<vmem>>, %arg3: memref<1x8x32xf32, #tpu.memory_space<vmem>>, %arg4: memref<1x32xf32, #tpu.memory_space<vmem>>, %arg5: memref<32x32xbf16, #tpu.memory_space<vmem>>, %arg6: memref<1x32xf32, #tpu.memory_space<vmem>>, %arg7: memref<32x64xbf16, #tpu.memory_space<vmem>>, %arg8: memref<1x64xf32, #tpu.memory_space<vmem>>, %arg9: memref<32x32xbf16, #tpu.memory_space<vmem>>, %arg10: memref<1x32xf32, #tpu.memory_space<vmem>>, %arg11: memref<1x8x32xf32, #tpu.memory_space<vmem>>, %arg12: memref<8x32xbf16, #tpu.memory_space<vmem>>, %arg13: memref<8x32xbf16, #tpu.memory_space<vmem>>, %arg14: memref<8x32xf32, #tpu.memory_space<vmem>>) attributes {dimension_semantics = [#tpu.dimension_semantics<parallel>, #tpu.dimension_semantics<arbitrary>], iteration_bounds = array<i64: 2, 1>, scalar_prefetch = 0 : i64, scratch_operands = 3 : i64, tpu.core_type = #tpu.core_type<tc>, window_params = [{transform_indices = @transform_0, window_bounds = array<i64: 1, 8, 32>}, {transform_indices = @transform_1, window_bounds = array<i64: 1, 8, 32>}, {pipeline_mode = #tpu.pipeline_mode<synchronous>, transform_indices = @transform_2, window_bounds = array<i64: 1, 32>}, {pipeline_mode = #tpu.pipeline_mode<synchronous>, transform_indices = @transform_3, window_bounds = array<i64: 32, 32>}, {pipeline_mode = #tpu.pipeline_mode<synchronous>, transform_indices = @transform_4, window_bounds = array<i64: 1, 32>}, {pipeline_mode = #tpu.pipeline_mode<synchronous>, transform_indices = @transform_5, window_bounds = array<i64: 32, 64>}, {pipeline_mode = #tpu.pipeline_mode<synchronous>, transform_indices = @transform_6, window_bounds = array<i64: 1, 64>}, {pipeline_mode = #tpu.pipeline_mode<synchronous>, transform_indices = @transform_7, window_bounds = array<i64: 32, 32>}, {pipeline_mode = #tpu.pipeline_mode<synchronous>, transform_indices = @transform_8, window_bounds = array<i64: 1, 32>}, {transform_indices = @transform_9, window_bounds = array<i64: 1, 8, 32>}]} {
    %c0_i32 = arith.constant 0 : i32
    %0 = arith.cmpi eq, %arg1, %c0_i32 : i32
    %1 = arith.extui %0 : i1 to i32
    %c0_i32_0 = arith.constant 0 : i32
    %2 = arith.cmpi ne, %1, %c0_i32_0 : i32
    scf.if %2 {
      %c0_70 = arith.constant 0 : index
      %c0_71 = arith.constant 0 : index
      %c0_72 = arith.constant 0 : index
      %126 = vector.load %arg3[%c0_70, %c0_71, %c0_72] : memref<1x8x32xf32, #tpu.memory_space<vmem>>, vector<1x8x32xf32>
      %127 = vector.shape_cast %126 : vector<1x8x32xf32> to vector<8x32xf32>
      %128 = arith.truncf %127 : vector<8x32xf32> to vector<8x32xbf16>
      %c0_73 = arith.constant 0 : index
      %c0_74 = arith.constant 0 : index
      %129 = vector.load %arg7[%c0_73, %c0_74] : memref<32x64xbf16, #tpu.memory_space<vmem>>, vector<32x64xbf16>
      %cst_75 = arith.constant dense<0.000000e+00> : vector<8x64xf32>
      %130 = tpu.matmul %128, %129, %cst_75 {dimension_numbers = #tpu.dot_dimension_numbers<[1], [0], [0], [1], [0, 0, 1, 1], [], []>} : vector<8x32xbf16>, vector<32x64xbf16>, vector<8x64xf32> -> vector<8x64xf32>
      %c0_76 = arith.constant 0 : index
      %c0_77 = arith.constant 0 : index
      %131 = vector.load %arg8[%c0_76, %c0_77] : memref<1x64xf32, #tpu.memory_space<vmem>>, vector<1x64xf32>
      %132 = vector.broadcast %131 : vector<1x64xf32> to vector<8x64xf32>
      %133 = arith.addf %130, %132 : vector<8x64xf32>
      %134 = vector.extract_strided_slice %133 {offsets = [0, 0], sizes = [8, 32], strides = [1, 1]} : vector<8x64xf32> to vector<8x32xf32>
      %135 = arith.truncf %134 : vector<8x32xf32> to vector<8x32xbf16>
      %c0_78 = arith.constant 0 : index
      %c0_79 = arith.constant 0 : index
      %136 = vector.load %arg12[%c0_78, %c0_79] : memref<8x32xbf16, #tpu.memory_space<vmem>>, vector<8x32xbf16>
      tpu.vector_store %arg12[%c0_78, %c0_79], %135 {strides = array<i32>} : memref<8x32xbf16, #tpu.memory_space<vmem>>, vector<8x32xbf16>,
      %137 = vector.extract_strided_slice %133 {offsets = [0, 32], sizes = [8, 32], strides = [1, 1]} : vector<8x64xf32> to vector<8x32xf32>
      %138 = arith.truncf %137 : vector<8x32xf32> to vector<8x32xbf16>
      %c0_80 = arith.constant 0 : index
      %c0_81 = arith.constant 0 : index
      %139 = vector.load %arg13[%c0_80, %c0_81] : memref<8x32xbf16, #tpu.memory_space<vmem>>, vector<8x32xbf16>
      tpu.vector_store %arg13[%c0_80, %c0_81], %138 {strides = array<i32>} : memref<8x32xbf16, #tpu.memory_space<vmem>>, vector<8x32xbf16>,
    } else {
    }
    %c0 = arith.constant 0 : index
    %c0_1 = arith.constant 0 : index
    %c0_2 = arith.constant 0 : index
    %3 = vector.load %arg2[%c0, %c0_1, %c0_2] : memref<1x8x32xf32, #tpu.memory_space<vmem>>, vector<1x8x32xf32>
    %4 = vector.shape_cast %3 : vector<1x8x32xf32> to vector<8x32xf32>
    %c0_3 = arith.constant 0 : index
    %c0_4 = arith.constant 0 : index
    %5 = vector.load %arg4[%c0_3, %c0_4] : memref<1x32xf32, #tpu.memory_space<vmem>>, vector<1x32xf32>
    %cst = arith.constant 9.99999997E-7 : f32
    %6 = vector.broadcast %cst : f32 to vector<8x32xf32>
    %7 = arith.addf %4, %6 : vector<8x32xf32>
    %cst_5 = arith.constant 9.99999997E-7 : f32
    %8 = vector.broadcast %cst_5 : f32 to vector<8x32xf32>
    %9 = arith.addf %7, %8 : vector<8x32xf32>
    %10 = arith.mulf %9, %9 : vector<8x32xf32>
    %cst_6 = arith.constant dense<0.000000e+00> : vector<8xf32>
    %11 = vector.multi_reduction <add>, %10, %cst_6 [1] : vector<8x32xf32> to vector<8xf32>
    %12 = vector.shape_cast %11 : vector<8xf32> to vector<8x1xf32>
    %13 = math.sqrt %12 : vector<8x1xf32>
    %cst_7 = arith.constant 5.65685415 : f32
    %14 = vector.broadcast %cst_7 : f32 to vector<8x1xf32>
    %15 = arith.mulf %13, %14 : vector<8x1xf32>
    %cst_8 = arith.constant 9.99999997E-7 : f32
    %16 = vector.broadcast %cst_8 : f32 to vector<8x1xf32>
    %17 = arith.addf %15, %16 : vector<8x1xf32>
    %cst_9 = arith.constant 1.000000e+00 : f32
    %18 = vector.broadcast %cst_9 : f32 to vector<8x1xf32>
    %19 = arith.divf %18, %17 : vector<8x1xf32>
    %20 = vector.broadcast %19 : vector<8x1xf32> to vector<8x32xf32>
    %21 = arith.mulf %7, %20 : vector<8x32xf32>
    %22 = vector.broadcast %5 : vector<1x32xf32> to vector<8x32xf32>
    %23 = arith.mulf %21, %22 : vector<8x32xf32>
    %24 = arith.truncf %23 : vector<8x32xf32> to vector<8x32xbf16>
    %c0_10 = arith.constant 0 : index
    %c0_11 = arith.constant 0 : index
    %25 = vector.load %arg5[%c0_10, %c0_11] : memref<32x32xbf16, #tpu.memory_space<vmem>>, vector<32x32xbf16>
    %cst_12 = arith.constant dense<0.000000e+00> : vector<8x32xf32>
    %26 = tpu.matmul %24, %25, %cst_12 {dimension_numbers = #tpu.dot_dimension_numbers<[1], [0], [0], [1], [0, 0, 1, 1], [], []>} : vector<8x32xbf16>, vector<32x32xbf16>, vector<8x32xf32> -> vector<8x32xf32>
    %c0_13 = arith.constant 0 : index
    %c0_14 = arith.constant 0 : index
    %27 = vector.load %arg6[%c0_13, %c0_14] : memref<1x32xf32, #tpu.memory_space<vmem>>, vector<1x32xf32>
    %28 = vector.broadcast %27 : vector<1x32xf32> to vector<8x32xf32>
    %29 = arith.addf %26, %28 : vector<8x32xf32>
    %30 = arith.truncf %29 : vector<8x32xf32> to vector<8x32xbf16>
    %31 = vector.extract_strided_slice %30 {offsets = [0, 0], sizes = [8, 8], strides = [1, 1]} : vector<8x32xbf16> to vector<8x8xbf16>
    %c0_15 = arith.constant 0 : index
    %c0_16 = arith.constant 0 : index
    %32 = vector.load %arg12[%c0_15, %c0_16] : memref<8x32xbf16, #tpu.memory_space<vmem>>, vector<8x8xbf16>
    %c0_17 = arith.constant 0 : index
    %c0_18 = arith.constant 0 : index
    %33 = vector.load %arg13[%c0_17, %c0_18] : memref<8x32xbf16, #tpu.memory_space<vmem>>, vector<8x8xbf16>
    %34 = tpu.transpose %32, [1, 0] : vector<8x8xbf16> -> vector<8x8xbf16>
    %cst_19 = arith.constant dense<0.000000e+00> : vector<8x8xf32>
    %35 = tpu.matmul %31, %34, %cst_19 {dimension_numbers = #tpu.dot_dimension_numbers<[1], [0], [0], [1], [0, 0, 1, 1], [], []>} : vector<8x8xbf16>, vector<8x8xbf16>, vector<8x8xf32> -> vector<8x8xf32>
    %cst_20 = arith.constant 0.353553385 : f32
    %36 = vector.broadcast %cst_20 : f32 to vector<8x8xf32>
    %37 = arith.mulf %35, %36 : vector<8x8xf32>
    %cst_21 = arith.constant dense<0xFF800000> : vector<8xf32>
    %38 = vector.multi_reduction <maximumf>, %37, %cst_21 [1] : vector<8x8xf32> to vector<8xf32>
    %39 = vector.shape_cast %38 : vector<8xf32> to vector<8x1xf32>
    %40 = vector.broadcast %39 : vector<8x1xf32> to vector<8x8xf32>
    %41 = arith.subf %37, %40 : vector<8x8xf32>
    %42 = math.exp %41 : vector<8x8xf32>
    %cst_22 = arith.constant dense<0.000000e+00> : vector<8xf32>
    %43 = vector.multi_reduction <add>, %42, %cst_22 [1] : vector<8x8xf32> to vector<8xf32>
    %44 = vector.shape_cast %43 : vector<8xf32> to vector<8x1xf32>
    %cst_23 = arith.constant 1.000000e+00 : f32
    %45 = vector.broadcast %cst_23 : f32 to vector<8x1xf32>
    %46 = arith.divf %45, %44 : vector<8x1xf32>
    %47 = vector.broadcast %46 : vector<8x1xf32> to vector<8x8xf32>
    %48 = arith.mulf %42, %47 : vector<8x8xf32>
    %49 = arith.truncf %48 : vector<8x8xf32> to vector<8x8xbf16>
    %cst_24 = arith.constant dense<0.000000e+00> : vector<8x8xf32>
    %50 = tpu.matmul %49, %33, %cst_24 {dimension_numbers = #tpu.dot_dimension_numbers<[1], [0], [0], [1], [0, 0, 1, 1], [], []>} : vector<8x8xbf16>, vector<8x8xbf16>, vector<8x8xf32> -> vector<8x8xf32>
    %c0_25 = arith.constant 0 : index
    %c0_26 = arith.constant 0 : index
    %51 = vector.load %arg14[%c0_25, %c0_26] : memref<8x32xf32, #tpu.memory_space<vmem>>, vector<8x8xf32>
    tpu.vector_store %arg14[%c0_25, %c0_26], %50 {strides = array<i32>} : memref<8x32xf32, #tpu.memory_space<vmem>>, vector<8x8xf32>,
    %52 = vector.extract_strided_slice %30 {offsets = [0, 8], sizes = [8, 8], strides = [1, 1]} : vector<8x32xbf16> to vector<8x8xbf16>
    %c0_27 = arith.constant 0 : index
    %c8 = arith.constant 8 : index
    %53 = vector.load %arg12[%c0_27, %c8] : memref<8x32xbf16, #tpu.memory_space<vmem>>, vector<8x8xbf16>
    %c0_28 = arith.constant 0 : index
    %c8_29 = arith.constant 8 : index
    %54 = vector.load %arg13[%c0_28, %c8_29] : memref<8x32xbf16, #tpu.memory_space<vmem>>, vector<8x8xbf16>
    %55 = tpu.transpose %53, [1, 0] : vector<8x8xbf16> -> vector<8x8xbf16>
    %cst_30 = arith.constant dense<0.000000e+00> : vector<8x8xf32>
    %56 = tpu.matmul %52, %55, %cst_30 {dimension_numbers = #tpu.dot_dimension_numbers<[1], [0], [0], [1], [0, 0, 1, 1], [], []>} : vector<8x8xbf16>, vector<8x8xbf16>, vector<8x8xf32> -> vector<8x8xf32>
    %cst_31 = arith.constant 0.353553385 : f32
    %57 = vector.broadcast %cst_31 : f32 to vector<8x8xf32>
    %58 = arith.mulf %56, %57 : vector<8x8xf32>
    %cst_32 = arith.constant dense<0xFF800000> : vector<8xf32>
    %59 = vector.multi_reduction <maximumf>, %58, %cst_32 [1] : vector<8x8xf32> to vector<8xf32>
    %60 = vector.shape_cast %59 : vector<8xf32> to vector<8x1xf32>
    %61 = vector.broadcast %60 : vector<8x1xf32> to vector<8x8xf32>
    %62 = arith.subf %58, %61 : vector<8x8xf32>
    %63 = math.exp %62 : vector<8x8xf32>
    %cst_33 = arith.constant dense<0.000000e+00> : vector<8xf32>
    %64 = vector.multi_reduction <add>, %63, %cst_33 [1] : vector<8x8xf32> to vector<8xf32>
    %65 = vector.shape_cast %64 : vector<8xf32> to vector<8x1xf32>
    %cst_34 = arith.constant 1.000000e+00 : f32
    %66 = vector.broadcast %cst_34 : f32 to vector<8x1xf32>
    %67 = arith.divf %66, %65 : vector<8x1xf32>
    %68 = vector.broadcast %67 : vector<8x1xf32> to vector<8x8xf32>
    %69 = arith.mulf %63, %68 : vector<8x8xf32>
    %70 = arith.truncf %69 : vector<8x8xf32> to vector<8x8xbf16>
    %cst_35 = arith.constant dense<0.000000e+00> : vector<8x8xf32>
    %71 = tpu.matmul %70, %54, %cst_35 {dimension_numbers = #tpu.dot_dimension_numbers<[1], [0], [0], [1], [0, 0, 1, 1], [], []>} : vector<8x8xbf16>, vector<8x8xbf16>, vector<8x8xf32> -> vector<8x8xf32>
    %c0_36 = arith.constant 0 : index
    %c8_37 = arith.constant 8 : index
    %72 = vector.load %arg14[%c0_36, %c8_37] : memref<8x32xf32, #tpu.memory_space<vmem>>, vector<8x8xf32>
    tpu.vector_store %arg14[%c0_36, %c8_37], %71 {strides = array<i32>} : memref<8x32xf32, #tpu.memory_space<vmem>>, vector<8x8xf32>,
    %73 = vector.extract_strided_slice %30 {offsets = [0, 16], sizes = [8, 8], strides = [1, 1]} : vector<8x32xbf16> to vector<8x8xbf16>
    %c0_38 = arith.constant 0 : index
    %c16 = arith.constant 16 : index
    %74 = vector.load %arg12[%c0_38, %c16] : memref<8x32xbf16, #tpu.memory_space<vmem>>, vector<8x8xbf16>
    %c0_39 = arith.constant 0 : index
    %c16_40 = arith.constant 16 : index
    %75 = vector.load %arg13[%c0_39, %c16_40] : memref<8x32xbf16, #tpu.memory_space<vmem>>, vector<8x8xbf16>
    %76 = tpu.transpose %74, [1, 0] : vector<8x8xbf16> -> vector<8x8xbf16>
    %cst_41 = arith.constant dense<0.000000e+00> : vector<8x8xf32>
    %77 = tpu.matmul %73, %76, %cst_41 {dimension_numbers = #tpu.dot_dimension_numbers<[1], [0], [0], [1], [0, 0, 1, 1], [], []>} : vector<8x8xbf16>, vector<8x8xbf16>, vector<8x8xf32> -> vector<8x8xf32>
    %cst_42 = arith.constant 0.353553385 : f32
    %78 = vector.broadcast %cst_42 : f32 to vector<8x8xf32>
    %79 = arith.mulf %77, %78 : vector<8x8xf32>
    %cst_43 = arith.constant dense<0xFF800000> : vector<8xf32>
    %80 = vector.multi_reduction <maximumf>, %79, %cst_43 [1] : vector<8x8xf32> to vector<8xf32>
    %81 = vector.shape_cast %80 : vector<8xf32> to vector<8x1xf32>
    %82 = vector.broadcast %81 : vector<8x1xf32> to vector<8x8xf32>
    %83 = arith.subf %79, %82 : vector<8x8xf32>
    %84 = math.exp %83 : vector<8x8xf32>
    %cst_44 = arith.constant dense<0.000000e+00> : vector<8xf32>
    %85 = vector.multi_reduction <add>, %84, %cst_44 [1] : vector<8x8xf32> to vector<8xf32>
    %86 = vector.shape_cast %85 : vector<8xf32> to vector<8x1xf32>
    %cst_45 = arith.constant 1.000000e+00 : f32
    %87 = vector.broadcast %cst_45 : f32 to vector<8x1xf32>
    %88 = arith.divf %87, %86 : vector<8x1xf32>
    %89 = vector.broadcast %88 : vector<8x1xf32> to vector<8x8xf32>
    %90 = arith.mulf %84, %89 : vector<8x8xf32>
    %91 = arith.truncf %90 : vector<8x8xf32> to vector<8x8xbf16>
    %cst_46 = arith.constant dense<0.000000e+00> : vector<8x8xf32>
    %92 = tpu.matmul %91, %75, %cst_46 {dimension_numbers = #tpu.dot_dimension_numbers<[1], [0], [0], [1], [0, 0, 1, 1], [], []>} : vector<8x8xbf16>, vector<8x8xbf16>, vector<8x8xf32> -> vector<8x8xf32>
    %c0_47 = arith.constant 0 : index
    %c16_48 = arith.constant 16 : index
    %93 = vector.load %arg14[%c0_47, %c16_48] : memref<8x32xf32, #tpu.memory_space<vmem>>, vector<8x8xf32>
    tpu.vector_store %arg14[%c0_47, %c16_48], %92 {strides = array<i32>} : memref<8x32xf32, #tpu.memory_space<vmem>>, vector<8x8xf32>,
    %94 = vector.extract_strided_slice %30 {offsets = [0, 24], sizes = [8, 8], strides = [1, 1]} : vector<8x32xbf16> to vector<8x8xbf16>
    %c0_49 = arith.constant 0 : index
    %c24 = arith.constant 24 : index
    %95 = vector.load %arg12[%c0_49, %c24] : memref<8x32xbf16, #tpu.memory_space<vmem>>, vector<8x8xbf16>
    %c0_50 = arith.constant 0 : index
    %c24_51 = arith.constant 24 : index
    %96 = vector.load %arg13[%c0_50, %c24_51] : memref<8x32xbf16, #tpu.memory_space<vmem>>, vector<8x8xbf16>
    %97 = tpu.transpose %95, [1, 0] : vector<8x8xbf16> -> vector<8x8xbf16>
    %cst_52 = arith.constant dense<0.000000e+00> : vector<8x8xf32>
    %98 = tpu.matmul %94, %97, %cst_52 {dimension_numbers = #tpu.dot_dimension_numbers<[1], [0], [0], [1], [0, 0, 1, 1], [], []>} : vector<8x8xbf16>, vector<8x8xbf16>, vector<8x8xf32> -> vector<8x8xf32>
    %cst_53 = arith.constant 0.353553385 : f32
    %99 = vector.broadcast %cst_53 : f32 to vector<8x8xf32>
    %100 = arith.mulf %98, %99 : vector<8x8xf32>
    %cst_54 = arith.constant dense<0xFF800000> : vector<8xf32>
    %101 = vector.multi_reduction <maximumf>, %100, %cst_54 [1] : vector<8x8xf32> to vector<8xf32>
    %102 = vector.shape_cast %101 : vector<8xf32> to vector<8x1xf32>
    %103 = vector.broadcast %102 : vector<8x1xf32> to vector<8x8xf32>
    %104 = arith.subf %100, %103 : vector<8x8xf32>
    %105 = math.exp %104 : vector<8x8xf32>
    %cst_55 = arith.constant dense<0.000000e+00> : vector<8xf32>
    %106 = vector.multi_reduction <add>, %105, %cst_55 [1] : vector<8x8xf32> to vector<8xf32>
    %107 = vector.shape_cast %106 : vector<8xf32> to vector<8x1xf32>
    %cst_56 = arith.constant 1.000000e+00 : f32
    %108 = vector.broadcast %cst_56 : f32 to vector<8x1xf32>
    %109 = arith.divf %108, %107 : vector<8x1xf32>
    %110 = vector.broadcast %109 : vector<8x1xf32> to vector<8x8xf32>
    %111 = arith.mulf %105, %110 : vector<8x8xf32>
    %112 = arith.truncf %111 : vector<8x8xf32> to vector<8x8xbf16>
    %cst_57 = arith.constant dense<0.000000e+00> : vector<8x8xf32>
    %113 = tpu.matmul %112, %96, %cst_57 {dimension_numbers = #tpu.dot_dimension_numbers<[1], [0], [0], [1], [0, 0, 1, 1], [], []>} : vector<8x8xbf16>, vector<8x8xbf16>, vector<8x8xf32> -> vector<8x8xf32>
    %c0_58 = arith.constant 0 : index
    %c24_59 = arith.constant 24 : index
    %114 = vector.load %arg14[%c0_58, %c24_59] : memref<8x32xf32, #tpu.memory_space<vmem>>, vector<8x8xf32>
    tpu.vector_store %arg14[%c0_58, %c24_59], %113 {strides = array<i32>} : memref<8x32xf32, #tpu.memory_space<vmem>>, vector<8x8xf32>,
    %c0_60 = arith.constant 0 : index
    %c0_61 = arith.constant 0 : index
    %115 = vector.load %arg14[%c0_60, %c0_61] : memref<8x32xf32, #tpu.memory_space<vmem>>, vector<8x32xf32>
    %116 = arith.truncf %115 : vector<8x32xf32> to vector<8x32xbf16>
    %c0_62 = arith.constant 0 : index
    %c0_63 = arith.constant 0 : index
    %117 = vector.load %arg9[%c0_62, %c0_63] : memref<32x32xbf16, #tpu.memory_space<vmem>>, vector<32x32xbf16>
    %cst_64 = arith.constant dense<0.000000e+00> : vector<8x32xf32>
    %118 = tpu.matmul %116, %117, %cst_64 {dimension_numbers = #tpu.dot_dimension_numbers<[1], [0], [0], [1], [0, 0, 1, 1], [], []>} : vector<8x32xbf16>, vector<32x32xbf16>, vector<8x32xf32> -> vector<8x32xf32>
    %c0_65 = arith.constant 0 : index
    %c0_66 = arith.constant 0 : index
    %119 = vector.load %arg10[%c0_65, %c0_66] : memref<1x32xf32, #tpu.memory_space<vmem>>, vector<1x32xf32>
    %120 = vector.broadcast %119 : vector<1x32xf32> to vector<8x32xf32>
    %121 = arith.addf %118, %120 : vector<8x32xf32>
    %122 = arith.addf %4, %121 : vector<8x32xf32>
    %c0_67 = arith.constant 0 : index
    %c0_68 = arith.constant 0 : index
    %c0_69 = arith.constant 0 : index
    %123 = vector.load %arg11[%c0_67, %c0_68, %c0_69] : memref<1x8x32xf32, #tpu.memory_space<vmem>>, vector<1x8x32xf32>
    %124 = vector.shape_cast %123 : vector<1x8x32xf32> to vector<8x32xf32>
    %125 = vector.shape_cast %122 : vector<8x32xf32> to vector<1x8x32xf32>
    tpu.vector_store %arg11[%c0_67, %c0_68, %c0_69], %125 {strides = array<i32>} : memref<1x8x32xf32, #tpu.memory_space<vmem>>, vector<1x8x32xf32>,
    return
  }
  func.func @transform_0(%arg0: i32, %arg1: i32) -> (i32, i32, i32) {
    %c0_i32 = arith.constant 0 : i32
    %c0_i32_0 = arith.constant 0 : i32
    return %arg0, %arg1, %c0_i32 : i32, i32, i32
  }
  func.func @transform_1(%arg0: i32, %arg1: i32) -> (i32, i32, i32) {
    %c0_i32 = arith.constant 0 : i32
    %c0_i32_0 = arith.constant 0 : i32
    %c0_i32_1 = arith.constant 0 : i32
    return %arg0, %c0_i32, %c0_i32_0 : i32, i32, i32
  }
  func.func @transform_2(%arg0: i32, %arg1: i32) -> (i32, i32) {
    %c0_i32 = arith.constant 0 : i32
    %c0_i32_0 = arith.constant 0 : i32
    %c0_i32_1 = arith.constant 0 : i32
    return %c0_i32, %c0_i32_0 : i32, i32
  }
  func.func @transform_3(%arg0: i32, %arg1: i32) -> (i32, i32) {
    %c0_i32 = arith.constant 0 : i32
    %c0_i32_0 = arith.constant 0 : i32
    %c0_i32_1 = arith.constant 0 : i32
    return %c0_i32, %c0_i32_0 : i32, i32
  }
  func.func @transform_4(%arg0: i32, %arg1: i32) -> (i32, i32) {
    %c0_i32 = arith.constant 0 : i32
    %c0_i32_0 = arith.constant 0 : i32
    %c0_i32_1 = arith.constant 0 : i32
    return %c0_i32, %c0_i32_0 : i32, i32
  }
  func.func @transform_5(%arg0: i32, %arg1: i32) -> (i32, i32) {
    %c0_i32 = arith.constant 0 : i32
    %c0_i32_0 = arith.constant 0 : i32
    %c0_i32_1 = arith.constant 0 : i32
    return %c0_i32, %c0_i32_0 : i32, i32
  }
  func.func @transform_6(%arg0: i32, %arg1: i32) -> (i32, i32) {
    %c0_i32 = arith.constant 0 : i32
    %c0_i32_0 = arith.constant 0 : i32
    %c0_i32_1 = arith.constant 0 : i32
    return %c0_i32, %c0_i32_0 : i32, i32
  }
  func.func @transform_7(%arg0: i32, %arg1: i32) -> (i32, i32) {
    %c0_i32 = arith.constant 0 : i32
    %c0_i32_0 = arith.constant 0 : i32
    %c0_i32_1 = arith.constant 0 : i32
    return %c0_i32, %c0_i32_0 : i32, i32
  }
  func.func @transform_8(%arg0: i32, %arg1: i32) -> (i32, i32) {
    %c0_i32 = arith.constant 0 : i32
    %c0_i32_0 = arith.constant 0 : i32
    %c0_i32_1 = arith.constant 0 : i32
    return %c0_i32, %c0_i32_0 : i32, i32
  }
  func.func @transform_9(%arg0: i32, %arg1: i32) -> (i32, i32, i32) {
    %c0_i32 = arith.constant 0 : i32
    %c0_i32_0 = arith.constant 0 : i32
    return %arg0, %arg1, %c0_i32 : i32, i32, i32
  }
}

module attributes {stable_mosaic.version = 11 : i64} {
  func.func @_ffn_kernel(%arg0: i32, %arg1: i32, %arg2: memref<16x32xf32, #tpu.memory_space<vmem>>, %arg3: memref<1x32xf32, #tpu.memory_space<vmem>>, %arg4: memref<32x128xbf16, #tpu.memory_space<vmem>>, %arg5: memref<1x128xf32, #tpu.memory_space<vmem>>, %arg6: memref<64x32xbf16, #tpu.memory_space<vmem>>, %arg7: memref<1x32xf32, #tpu.memory_space<vmem>>, %arg8: memref<16x32xf32, #tpu.memory_space<vmem>>, %arg9: memref<16x32xbf16, #tpu.memory_space<vmem>>, %arg10: memref<16x32xf32, #tpu.memory_space<vmem>>) attributes {dimension_semantics = [#tpu.dimension_semantics<parallel>, #tpu.dimension_semantics<arbitrary>], iteration_bounds = array<i64: 1, 1>, scalar_prefetch = 0 : i64, scratch_operands = 2 : i64, tpu.core_type = #tpu.core_type<tc>, window_params = [{transform_indices = @transform_0, window_bounds = array<i64: 16, 32>}, {pipeline_mode = #tpu.pipeline_mode<synchronous>, transform_indices = @transform_1, window_bounds = array<i64: 1, 32>}, {transform_indices = @transform_2, window_bounds = array<i64: 32, 128>}, {transform_indices = @transform_3, window_bounds = array<i64: 1, 128>}, {transform_indices = @transform_4, window_bounds = array<i64: 64, 32>}, {pipeline_mode = #tpu.pipeline_mode<synchronous>, transform_indices = @transform_5, window_bounds = array<i64: 1, 32>}, {transform_indices = @transform_6, window_bounds = array<i64: 16, 32>}]} {
    %c0_i32 = arith.constant 0 : i32
    %0 = arith.cmpi eq, %arg1, %c0_i32 : i32
    %1 = arith.extui %0 : i1 to i32
    %c0_i32_0 = arith.constant 0 : i32
    %2 = arith.cmpi ne, %1, %c0_i32_0 : i32
    scf.if %2 {
      %c0_16 = arith.constant 0 : index
      %c0_17 = arith.constant 0 : index
      %27 = vector.load %arg2[%c0_16, %c0_17] : memref<16x32xf32, #tpu.memory_space<vmem>>, vector<16x32xf32>
      %c0_18 = arith.constant 0 : index
      %c0_19 = arith.constant 0 : index
      %28 = vector.load %arg3[%c0_18, %c0_19] : memref<1x32xf32, #tpu.memory_space<vmem>>, vector<1x32xf32>
      %cst_20 = arith.constant 9.99999997E-7 : f32
      %29 = vector.broadcast %cst_20 : f32 to vector<16x32xf32>
      %30 = arith.addf %27, %29 : vector<16x32xf32>
      %cst_21 = arith.constant 9.99999997E-7 : f32
      %31 = vector.broadcast %cst_21 : f32 to vector<16x32xf32>
      %32 = arith.addf %30, %31 : vector<16x32xf32>
      %33 = arith.mulf %32, %32 : vector<16x32xf32>
      %cst_22 = arith.constant dense<0.000000e+00> : vector<16xf32>
      %34 = vector.multi_reduction <add>, %33, %cst_22 [1] : vector<16x32xf32> to vector<16xf32>
      %35 = vector.shape_cast %34 : vector<16xf32> to vector<16x1xf32>
      %36 = math.sqrt %35 : vector<16x1xf32>
      %cst_23 = arith.constant 5.65685415 : f32
      %37 = vector.broadcast %cst_23 : f32 to vector<16x1xf32>
      %38 = arith.mulf %36, %37 : vector<16x1xf32>
      %cst_24 = arith.constant 9.99999997E-7 : f32
      %39 = vector.broadcast %cst_24 : f32 to vector<16x1xf32>
      %40 = arith.addf %38, %39 : vector<16x1xf32>
      %cst_25 = arith.constant 1.000000e+00 : f32
      %41 = vector.broadcast %cst_25 : f32 to vector<16x1xf32>
      %42 = arith.divf %41, %40 : vector<16x1xf32>
      %43 = vector.broadcast %42 : vector<16x1xf32> to vector<16x32xf32>
      %44 = arith.mulf %30, %43 : vector<16x32xf32>
      %45 = vector.broadcast %28 : vector<1x32xf32> to vector<16x32xf32>
      %46 = arith.mulf %44, %45 : vector<16x32xf32>
      %47 = arith.truncf %46 : vector<16x32xf32> to vector<16x32xbf16>
      %c0_26 = arith.constant 0 : index
      %c0_27 = arith.constant 0 : index
      %48 = vector.load %arg9[%c0_26, %c0_27] : memref<16x32xbf16, #tpu.memory_space<vmem>>, vector<16x32xbf16>
      tpu.vector_store %arg9[%c0_26, %c0_27], %47 {strides = array<i32>} : memref<16x32xbf16, #tpu.memory_space<vmem>>, vector<16x32xbf16>,
      %cst_28 = arith.constant 0.000000e+00 : f32
      %49 = vector.broadcast %cst_28 : f32 to vector<16x32xf32>
      %c0_29 = arith.constant 0 : index
      %c0_30 = arith.constant 0 : index
      %50 = vector.load %arg10[%c0_29, %c0_30] : memref<16x32xf32, #tpu.memory_space<vmem>>, vector<16x32xf32>
      tpu.vector_store %arg10[%c0_29, %c0_30], %49 {strides = array<i32>} : memref<16x32xf32, #tpu.memory_space<vmem>>, vector<16x32xf32>,
    } else {
    }
    %c0 = arith.constant 0 : index
    %c0_1 = arith.constant 0 : index
    %3 = vector.load %arg9[%c0, %c0_1] : memref<16x32xbf16, #tpu.memory_space<vmem>>, vector<16x32xbf16>
    %c0_2 = arith.constant 0 : index
    %c0_3 = arith.constant 0 : index
    %4 = vector.load %arg4[%c0_2, %c0_3] : memref<32x128xbf16, #tpu.memory_space<vmem>>, vector<32x128xbf16>
    %cst = arith.constant dense<0.000000e+00> : vector<16x128xf32>
    %5 = tpu.matmul %3, %4, %cst {dimension_numbers = #tpu.dot_dimension_numbers<[1], [0], [0], [1], [0, 0, 1, 1], [], []>} : vector<16x32xbf16>, vector<32x128xbf16>, vector<16x128xf32> -> vector<16x128xf32>
    %c0_4 = arith.constant 0 : index
    %c0_5 = arith.constant 0 : index
    %6 = vector.load %arg5[%c0_4, %c0_5] : memref<1x128xf32, #tpu.memory_space<vmem>>, vector<1x128xf32>
    %7 = vector.broadcast %6 : vector<1x128xf32> to vector<16x128xf32>
    %8 = arith.addf %5, %7 : vector<16x128xf32>
    %9 = vector.extract_strided_slice %8 {offsets = [0, 0], sizes = [16, 64], strides = [1, 1]} : vector<16x128xf32> to vector<16x64xf32>
    %10 = vector.extract_strided_slice %8 {offsets = [0, 64], sizes = [16, 64], strides = [1, 1]} : vector<16x128xf32> to vector<16x64xf32>
    %11 = arith.negf %9 : vector<16x64xf32>
    %12 = math.exp %11 : vector<16x64xf32>
    %cst_6 = arith.constant 1.000000e+00 : f32
    %13 = vector.broadcast %cst_6 : f32 to vector<16x64xf32>
    %14 = arith.addf %13, %12 : vector<16x64xf32>
    %15 = arith.divf %13, %14 : vector<16x64xf32>
    %16 = arith.mulf %9, %15 : vector<16x64xf32>
    %17 = arith.mulf %16, %10 : vector<16x64xf32>
    %c0_7 = arith.constant 0 : index
    %c0_8 = arith.constant 0 : index
    %18 = vector.load %arg10[%c0_7, %c0_8] : memref<16x32xf32, #tpu.memory_space<vmem>>, vector<16x32xf32>
    %19 = arith.truncf %17 : vector<16x64xf32> to vector<16x64xbf16>
    %c0_9 = arith.constant 0 : index
    %c0_10 = arith.constant 0 : index
    %20 = vector.load %arg6[%c0_9, %c0_10] : memref<64x32xbf16, #tpu.memory_space<vmem>>, vector<64x32xbf16>
    %cst_11 = arith.constant dense<0.000000e+00> : vector<16x32xf32>
    %21 = tpu.matmul %19, %20, %cst_11 {dimension_numbers = #tpu.dot_dimension_numbers<[1], [0], [0], [1], [0, 0, 1, 1], [], []>} : vector<16x64xbf16>, vector<64x32xbf16>, vector<16x32xf32> -> vector<16x32xf32>
    %22 = arith.addf %18, %21 : vector<16x32xf32>
    %c0_12 = arith.constant 0 : index
    %c0_13 = arith.constant 0 : index
    %23 = vector.load %arg10[%c0_12, %c0_13] : memref<16x32xf32, #tpu.memory_space<vmem>>, vector<16x32xf32>
    tpu.vector_store %arg10[%c0_12, %c0_13], %22 {strides = array<i32>} : memref<16x32xf32, #tpu.memory_space<vmem>>, vector<16x32xf32>,
    %c0_i32_14 = arith.constant 0 : i32
    %24 = arith.cmpi eq, %arg1, %c0_i32_14 : i32
    %25 = arith.extui %24 : i1 to i32
    %c0_i32_15 = arith.constant 0 : i32
    %26 = arith.cmpi ne, %25, %c0_i32_15 : i32
    scf.if %26 {
      %c0_16 = arith.constant 0 : index
      %c0_17 = arith.constant 0 : index
      %27 = vector.load %arg2[%c0_16, %c0_17] : memref<16x32xf32, #tpu.memory_space<vmem>>, vector<16x32xf32>
      %c0_18 = arith.constant 0 : index
      %c0_19 = arith.constant 0 : index
      %28 = vector.load %arg10[%c0_18, %c0_19] : memref<16x32xf32, #tpu.memory_space<vmem>>, vector<16x32xf32>
      %29 = arith.addf %27, %28 : vector<16x32xf32>
      %c0_20 = arith.constant 0 : index
      %c0_21 = arith.constant 0 : index
      %30 = vector.load %arg7[%c0_20, %c0_21] : memref<1x32xf32, #tpu.memory_space<vmem>>, vector<1x32xf32>
      %31 = vector.broadcast %30 : vector<1x32xf32> to vector<16x32xf32>
      %32 = arith.addf %29, %31 : vector<16x32xf32>
      %c0_22 = arith.constant 0 : index
      %c0_23 = arith.constant 0 : index
      %33 = vector.load %arg8[%c0_22, %c0_23] : memref<16x32xf32, #tpu.memory_space<vmem>>, vector<16x32xf32>
      tpu.vector_store %arg8[%c0_22, %c0_23], %32 {strides = array<i32>} : memref<16x32xf32, #tpu.memory_space<vmem>>, vector<16x32xf32>,
    } else {
    }
    return
  }
  func.func @transform_0(%arg0: i32, %arg1: i32) -> (i32, i32) {
    %c0_i32 = arith.constant 0 : i32
    %c0_i32_0 = arith.constant 0 : i32
    return %arg0, %c0_i32 : i32, i32
  }
  func.func @transform_1(%arg0: i32, %arg1: i32) -> (i32, i32) {
    %c0_i32 = arith.constant 0 : i32
    %c0_i32_0 = arith.constant 0 : i32
    %c0_i32_1 = arith.constant 0 : i32
    return %c0_i32, %c0_i32_0 : i32, i32
  }
  func.func @transform_2(%arg0: i32, %arg1: i32) -> (i32, i32) {
    %c0_i32 = arith.constant 0 : i32
    %c0_i32_0 = arith.constant 0 : i32
    return %c0_i32, %arg1 : i32, i32
  }
  func.func @transform_3(%arg0: i32, %arg1: i32) -> (i32, i32) {
    %c0_i32 = arith.constant 0 : i32
    %c0_i32_0 = arith.constant 0 : i32
    return %c0_i32, %arg1 : i32, i32
  }
  func.func @transform_4(%arg0: i32, %arg1: i32) -> (i32, i32) {
    %c0_i32 = arith.constant 0 : i32
    %c0_i32_0 = arith.constant 0 : i32
    return %arg1, %c0_i32 : i32, i32
  }
  func.func @transform_5(%arg0: i32, %arg1: i32) -> (i32, i32) {
    %c0_i32 = arith.constant 0 : i32
    %c0_i32_0 = arith.constant 0 : i32
    %c0_i32_1 = arith.constant 0 : i32
    return %c0_i32, %c0_i32_0 : i32, i32
  }
  func.func @transform_6(%arg0: i32, %arg1: i32) -> (i32, i32) {
    %c0_i32 = arith.constant 0 : i32
    %c0_i32_0 = arith.constant 0 : i32
    return %arg0, %c0_i32 : i32, i32
  }
}

</mosaic_0001>

<llo_original>
// kernel: tpu_custom_call.1
$region0: #{tpu_custom_call.1}
  #allocation0 [shape = 'u32[]', space=smem, size = 0x4, offset = 0x4, fixed_abs, tag = 'smem constant byte address 0x4 - core index']
  #allocation1 [shape = 'u32[144,128]{1,0:T(1,128)}', space=vmem, size = 0x12000, scoped, tag = 'internal scratch']
  %s0 = inlined_call_operand.hbm [shape: f32[8,128], index: 0, kind: input, shape index: {}]
  %s1 = inlined_call_operand.hbm [shape: f32[8,128], index: 1, kind: output, shape index: {}]
  %s2 = sld [smem:[#allocation0]]
  $region18: #{tpu_custom_call.1} parent=0
    _
  %s4 = ssub.s32 1, %s2
  %s5 = scalar_select 0, %s4, %s2
  $region1: #{tpu_custom_call.1} parent=0
    #allocation2 [shape = 'u8[4096]{0}', space=vmem, size = 0x1000, scoped, tag = 'input window, operand 0, single buffered']
    #allocation3 [shape = 's32[1]{0}', space=sflag, size = 0x4, scoped, tag = 'scoped memory for tpu_custom_call.1']
    #allocation4 [shape = 's32[1]{0}', space=sflag, size = 0x4, scoped, tag = 'scoped memory for tpu_custom_call.1']
    #allocation5 [shape = 'u8[4096]{0}', space=vmem, size = 0x1000, scoped, tag = 'output window, operand 0, single buffered']
    %6 = vsyncpa [#allocation3], 0
    %7 = vsyncpa [#allocation4], 0
    // Predicated region
    $region2: #{tpu_custom_call.1} parent=1 // pred_check
      _
    $region3: #{tpu_custom_call.1} parent=1 // pred_check_branch
      %9 = sbr.rel (0) target = $region5
    $region4: #{tpu_custom_call.1} parent=1 // pred_region
      %s11 = ssub.s32 128, 128
      %12 = vsyncadd [#allocation3], %s11
      %s14 = sshll.u32 [#allocation2], 4
      %s15 = int_to_ptr.vmem [resolvable:$true] %s14
      %17 = dma.hbm_to_vmem [thread:$0]  %s0, 128, %s15, [#allocation3]
    $region5: #{tpu_custom_call.1} parent=1 // pred_fallthru
      _
    // Predicated region
    $region6: #{tpu_custom_call.1} parent=1 // pred_check
      _
    $region7: #{tpu_custom_call.1} parent=1 // pred_check_branch
      %19 = sbr.rel (0) target = $region9
    $region8: #{tpu_custom_call.1} parent=1 // pred_region
      %20 = dma.done [#allocation3], 128
    $region9: #{tpu_custom_call.1} parent=1 // pred_fallthru
      _
    %v21 = vld [vmem:[#allocation2] sm:$0xff]
    %v22 = vadd.f32 %v21, 1.0
    %23 = vst [vmem:[#allocation5] sm:$0xff] %v22
    // Predicated region
    $region10: #{tpu_custom_call.1} parent=1 // pred_check
      _
    $region11: #{tpu_custom_call.1} parent=1 // pred_check_branch
      %25 = sbr.rel (0) target = $region13
    $region12: #{tpu_custom_call.1} parent=1 // pred_region
      %s27 = ssub.s32 128, 128
      %28 = vsyncadd [#allocation4], %s27
      %s30 = sshll.u32 [#allocation5], 4
      %s31 = int_to_ptr.vmem [resolvable:$true] %s30
      %33 = dma.vmem_to_hbm [thread:$0]  %s31, 128, %s1, [#allocation4]
    $region13: #{tpu_custom_call.1} parent=1 // pred_fallthru
      _
    // Predicated region
    $region14: #{tpu_custom_call.1} parent=1 // pred_check
      _
    $region15: #{tpu_custom_call.1} parent=1 // pred_check_branch
      %35 = sbr.rel (0) target = $region17
    $region16: #{tpu_custom_call.1} parent=1 // pred_region
      %36 = dma.done [#allocation4], 128
    $region17: #{tpu_custom_call.1} parent=1 // pred_fallthru
      _
    %37 = vsyncpa [#allocation3], 1
    %38 = vsyncpa [#allocation4], 1

// kernel: tile.14
$region0: #{tile.14}
  %s0 = inlined_call_operand.vmem [shape: f32[8,4,8], index: 0, kind: input, shape index: {}]
  %s1 = inlined_call_operand.hbm [shape: f32[8,32], index: 1, kind: output, shape index: {}]
  $region1: #{tile.14} parent=0
    #allocation0 [shape = 'u8[4096]{0}', space=vmem, size = 0x1000, scoped, tag = 'operand span for operand 1']
    #allocation1 [shape = 's32[1]{0}', space=sflag, size = 0x4, scoped, tag = 'scoped memory for tile.14']
    #allocation2 [shape = 'u8[32768]{0}', space=vmem, size = 0x8000, scoped, tag = 'scoped mem for input reshape']
    %2 = vsyncpa [#allocation1], 0
    %s4 = sshllo.u32 0, 4
    %s5 = smul.addr 4, 7
    %s6 = scalar_lea.vmem %s0, %s5
    %v7 = vld [vmem:[%s6] sm:%s4]
    %s8 = scalar_lea.vmem [#allocation2], 56
    %9 = vst [vmem:[%s8] sm:%s4] %v7
    %s10 = smul.addr 4, 6
    %s11 = scalar_lea.vmem %s0, %s10
    %v12 = vld [vmem:[%s11] sm:%s4]
    %s13 = scalar_lea.vmem [#allocation2], 48
    %14 = vst [vmem:[%s13] sm:%s4] %v12
    %s15 = smul.addr 4, 5
    %s16 = scalar_lea.vmem %s0, %s15
    %v17 = vld [vmem:[%s16] sm:%s4]
    %s18 = scalar_lea.vmem [#allocation2], 40
    %19 = vst [vmem:[%s18] sm:%s4] %v17
    %s20 = smul.addr 4, 4
    %s21 = scalar_lea.vmem %s0, %s20
    %v22 = vld [vmem:[%s21] sm:%s4]
    %s23 = scalar_lea.vmem [#allocation2], 32
    %24 = vst [vmem:[%s23] sm:%s4] %v22
    %s25 = smul.addr 4, 3
    %s26 = scalar_lea.vmem %s0, %s25
    %v27 = vld [vmem:[%s26] sm:%s4]
    %s28 = scalar_lea.vmem [#allocation2], 24
    %29 = vst [vmem:[%s28] sm:%s4] %v27
    %s30 = smul.addr 4, 2
    %s31 = scalar_lea.vmem %s0, %s30
    %v32 = vld [vmem:[%s31] sm:%s4]
    %s33 = scalar_lea.vmem [#allocation2], 16
    %34 = vst [vmem:[%s33] sm:%s4] %v32
    %s35 = scalar_lea.vmem %s0, 4
    %v36 = vld [vmem:[%s35] sm:%s4]
    %s37 = scalar_lea.vmem [#allocation2], 8
    %38 = vst [vmem:[%s37] sm:%s4] %v36
    %v39 = vld [vmem:[%s0] sm:%s4]
    %40 = vst [vmem:[#allocation2] sm:%s4] %v39
    %v41 = vld [vmem:[#allocation2] ss:$8 sm:$0xf]
    %v42 = vld [vmem:[#allocation2] ss:$8 sm:$0xf0]
    %vm43 = vcmask 1047556
    %v44 = vsel %vm43, %v42, %v41
    %vm45 = vcmask 64512
    %46 = vst.msk [vmem:[#allocation0] sm:$0xff] %vm45, %v44
    %s47 = scalar_lea.vmem [#allocation2], 3
    %v48 = vld [vmem:[%s47] ss:$8 sm:$0xf]
    %s49 = scalar_lea.vmem [#allocation2], 3
    %v50 = vld [vmem:[%s49] ss:$8 sm:$0xf0]
    %vm51 = vcmask 1047556
    %v52 = vsel %vm51, %v50, %v48
    %53 = vrot.lane.b32.xlu0 %v52, 24
    %v54 = vpop.permute.xlu0 %53
    %vm55 = vcmask 261312
    %56 = vst.msk [vmem:[#allocation0] sm:$0xff] %vm55, %v54
    %s57 = scalar_lea.vmem [#allocation2], 2
    %v58 = vld [vmem:[%s57] ss:$8 sm:$0xf]
    %s59 = scalar_lea.vmem [#allocation2], 2
    %v60 = vld [vmem:[%s59] ss:$8 sm:$0xf0]
    %vm61 = vcmask 1047556
    %v62 = vsel %vm61, %v60, %v58
    %63 = vrot.lane.b32.xlu0 %v62, 16
    %v64 = vpop.permute.xlu0 %63
    %vm65 = vcmask 195712
    %66 = vst.msk [vmem:[#allocation0] sm:$0xff] %vm65, %v64
    %s67 = scalar_lea.vmem [#allocation2], 1
    %v68 = vld [vmem:[%s67] ss:$8 sm:$0xf]
    %s69 = scalar_lea.vmem [#allocation2], 1
    %v70 = vld [vmem:[%s69] ss:$8 sm:$0xf0]
    %vm71 = vcmask 1047556
    %v72 = vsel %vm71, %v70, %v68
    %73 = vrot.lane.b32.xlu0 %v72, 8
    %v74 = vpop.permute.xlu0 %73
    %vm75 = vcmask 130112
    %76 = vst.msk [vmem:[#allocation0] sm:$0xff] %vm75, %v74
    %s78 = ssub.s32 128, 128
    %79 = vsyncadd [#allocation1], %s78
    %s81 = sshll.u32 [#allocation0], 4
    %s82 = int_to_ptr.vmem [resolvable:$true] %s81
    %84 = dma.vmem_to_hbm [thread:$0]  %s82, 128, %s1, [#allocation1]
    %85 = dma.done [#allocation1], 128
    %86 = vsyncpa [#allocation1], 1

// kernel: encoder_layer.5
$region0: #{encoder_layer.5}
  #allocation0 [shape = 'u32[]', space=smem, size = 0x4, offset = 0x4, fixed_abs, tag = 'smem constant byte address 0x4 - core index']
  #allocation1 [shape = 'u32[144,128]{1,0:T(1,128)}', space=vmem, size = 0x12000, scoped, tag = 'internal scratch']
  #allocation2 [shape = 'bf16[16,32]{1,0:T(16,128)(2,1)}', space=vmem, size = 0x1000, scoped, tag = 'scratch operand']
  #allocation3 [shape = 'f32[16,32]{1,0:T(8,128)}', space=vmem, size = 0x2000, scoped, tag = 'scratch operand']
  %s0 = inlined_call_operand.hbm [shape: f32[16,32], index: 0, kind: input, shape index: {}]
  %s1 = inlined_call_operand.hbm [shape: f32[1,32], index: 1, kind: input, shape index: {}]
  %s2 = inlined_call_operand.hbm [shape: bf16[32,128], index: 2, kind: input, shape index: {}]
  %s3 = inlined_call_operand.hbm [shape: f32[1,128], index: 3, kind: input, shape index: {}]
  %s4 = inlined_call_operand.hbm [shape: bf16[64,32], index: 4, kind: input, shape index: {}]
  %s5 = inlined_call_operand.hbm [shape: f32[1,32], index: 5, kind: input, shape index: {}]
  %s6 = inlined_call_operand.hbm [shape: f32[16,32], index: 6, kind: output, shape index: {}]
  %s7 = sld [smem:[#allocation0]]
  $region66: #{encoder_layer.5} parent=0
    _
  %s9 = ssub.s32 1, %s7
  %s10 = scalar_select 0, %s9, %s7
  $region1: #{encoder_layer.5} parent=0
    #allocation4 [shape = 'u8[8192]{0}', space=vmem, size = 0x2000, scoped, tag = 'input window, operand 0, single buffered']
    #allocation5 [shape = 's32[1]{0}', space=sflag, size = 0x4, scoped, tag = 'scoped memory for encoder_layer.5']
    #allocation6 [shape = 's32[1]{0}', space=sflag, size = 0x4, scoped, tag = 'scoped memory for encoder_layer.5']
    #allocation7 [shape = 'u8[512]{0}', space=vmem, size = 0x400, scoped, tag = 'input window, operand 1, single buffered']
    #allocation8 [shape = 's32[1]{0}', space=sflag, size = 0x4, scoped, tag = 'scoped memory for encoder_layer.5']
    #allocation9 [shape = 'u8[8192]{0}', space=vmem, size = 0x2000, scoped, tag = 'input window, operand 2, single buffered']
    #allocation10 [shape = 'u8[512]{0}', space=vmem, size = 0x400, scoped, tag = 'input window, operand 3, single buffered']
    #allocation11 [shape = 's32[1]{0}', space=sflag, size = 0x4, scoped, tag = 'scoped memory for encoder_layer.5']
    #allocation12 [shape = 'u8[16384]{0}', space=vmem, size = 0x4000, scoped, tag = 'input window, operand 4, single buffered']
    #allocation13 [shape = 'u8[512]{0}', space=vmem, size = 0x400, scoped, tag = 'input window, operand 5, single buffered']
    #allocation14 [shape = 's32[1]{0}', space=sflag, size = 0x4, scoped, tag = 'scoped memory for encoder_layer.5']
    #allocation15 [shape = 'u8[8192]{0}', space=vmem, size = 0x2000, scoped, tag = 'output window, operand 0, single buffered']
    %11 = vsyncpa [#allocation5], 0
    %12 = vsyncpa [#allocation8], 0
    %13 = vsyncpa [#allocation11], 0
    %14 = vsyncpa [#allocation14], 0
    %15 = vsyncpa [#allocation6], 0
    // Predicated region
    $region2: #{encoder_layer.5} parent=1 // pred_check
      _
    $region3: #{encoder_layer.5} parent=1 // pred_check_branch
      %17 = sbr.rel (0) target = $region5
    $region4: #{encoder_layer.5} parent=1 // pred_region
      %s19 = ssub.s32 256, 256
      %20 = vsyncadd [#allocation5], %s19
      %s21 = sshll.u32 [#allocation4], 4
      %s22 = int_to_ptr.vmem [resolvable:$true] %s21
      %27 = dma.hbm_to_vmem [thread:$0]  %s0, 256, %s22, [#allocation5], 128, 128, 8
    $region5: #{encoder_layer.5} parent=1 // pred_fallthru
      _
    // Predicated region
    $region6: #{encoder_layer.5} parent=1 // pred_check
      _
    $region7: #{encoder_layer.5} parent=1 // pred_check_branch
      %29 = sbr.rel (0) target = $region9
    $region8: #{encoder_layer.5} parent=1 // pred_region
      %s31 = ssub.s32 16, 16
      %32 = vsyncadd [#allocation8], %s31
      %s34 = sshll.u32 [#allocation7], 4
      %s35 = int_to_ptr.vmem [resolvable:$true] %s34
      %37 = dma.hbm_to_vmem [thread:$0]  %s1, 16, %s35, [#allocation8]
    $region9: #{encoder_layer.5} parent=1 // pred_fallthru
      _
    // Predicated region
    $region10: #{encoder_layer.5} parent=1 // pred_check
      _
    $region11: #{encoder_layer.5} parent=1 // pred_check_branch
      %39 = sbr.rel (0) target = $region13
    $region12: #{encoder_layer.5} parent=1 // pred_region
      %s41 = ssub.s32 256, 256
      %42 = vsyncadd [#allocation8], %s41
      %s43 = sshll.u32 [#allocation9], 4
      %s44 = int_to_ptr.vmem [resolvable:$true] %s43
      %49 = dma.hbm_to_vmem [thread:$0]  %s2, 256, %s44, [#allocation8], 64, 64, 4
    $region13: #{encoder_layer.5} parent=1 // pred_fallthru
      _
    // Predicated region
    $region14: #{encoder_layer.5} parent=1 // pred_check
      _
    $region15: #{encoder_layer.5} parent=1 // pred_check_branch
      %51 = sbr.rel (0) target = $region17
    $region16: #{encoder_layer.5} parent=1 // pred_region
      %s53 = ssub.s32 16, 16
      %54 = vsyncadd [#allocation11], %s53
      %s56 = sshll.u32 [#allocation10], 4
      %s57 = int_to_ptr.vmem [resolvable:$true] %s56
      %59 = dma.hbm_to_vmem [thread:$0]  %s3, 16, %s57, [#allocation11]
    $region17: #{encoder_layer.5} parent=1 // pred_fallthru
      _
    // Predicated region
    $region18: #{encoder_layer.5} parent=1 // pred_check
      _
    $region19: #{encoder_layer.5} parent=1 // pred_check_branch
      %61 = sbr.rel (0) target = $region21
    $region20: #{encoder_layer.5} parent=1 // pred_region
      %s63 = ssub.s32 512, 512
      %64 = vsyncadd [#allocation11], %s63
      %s65 = sshll.u32 [#allocation12], 4
      %s66 = int_to_ptr.vmem [resolvable:$true] %s65
      %71 = dma.hbm_to_vmem [thread:$0]  %s4, 512, %s66, [#allocation11], 64, 64, 4
    $region21: #{encoder_layer.5} parent=1 // pred_fallthru
      _
    // Predicated region
    $region22: #{encoder_layer.5} parent=1 // pred_check
      _
    $region23: #{encoder_layer.5} parent=1 // pred_check_branch
      %73 = sbr.rel (0) target = $region25
    $region24: #{encoder_layer.5} parent=1 // pred_region
      %s75 = ssub.s32 16, 16
      %76 = vsyncadd [#allocation14], %s75
      %s78 = sshll.u32 [#allocation13], 4
      %s79 = int_to_ptr.vmem [resolvable:$true] %s78
      %81 = dma.hbm_to_vmem [thread:$0]  %s5, 16, %s79, [#allocation14]
    $region25: #{encoder_layer.5} parent=1 // pred_fallthru
      _
    // Predicated region
    $region26: #{encoder_layer.5} parent=1 // pred_check
      _
    $region27: #{encoder_layer.5} parent=1 // pred_check_branch
      %83 = sbr.rel (0) target = $region29
    $region28: #{encoder_layer.5} parent=1 // pred_region
      %84 = dma.done [#allocation5], 256
    $region29: #{encoder_layer.5} parent=1 // pred_fallthru
      _
    // Predicated region
    $region30: #{encoder_layer.5} parent=1 // pred_check
      _
    $region31: #{encoder_layer.5} parent=1 // pred_check_branch
      %86 = sbr.rel (0) target = $region33
    $region32: #{encoder_layer.5} parent=1 // pred_region
      %87 = dma.done [#allocation8], 16
    $region33: #{encoder_layer.5} parent=1 // pred_fallthru
      _
    // Predicated region
    $region34: #{encoder_layer.5} parent=1 // pred_check
      _
    $region35: #{encoder_layer.5} parent=1 // pred_check_branch
      %89 = sbr.rel (0) target = $region37
    $region36: #{encoder_layer.5} parent=1 // pred_region
      %90 = dma.done [#allocation8], 256
    $region37: #{encoder_layer.5} parent=1 // pred_fallthru
      _
    // Predicated region
    $region38: #{encoder_layer.5} parent=1 // pred_check
      _
    $region39: #{encoder_layer.5} parent=1 // pred_check_branch
      %92 = sbr.rel (0) target = $region41
    $region40: #{encoder_layer.5} parent=1 // pred_region
      %93 = dma.done [#allocation11], 16
    $region41: #{encoder_layer.5} parent=1 // pred_fallthru
      _
    // Predicated region
    $region42: #{encoder_layer.5} parent=1 // pred_check
      _
    $region43: #{encoder_layer.5} parent=1 // pred_check_branch
      %95 = sbr.rel (0) target = $region45
    $region44: #{encoder_layer.5} parent=1 // pred_region
      %96 = dma.done [#allocation11], 512
    $region45: #{encoder_layer.5} parent=1 // pred_fallthru
      _
    // Predicated region
    $region46: #{encoder_layer.5} parent=1 // pred_check
      _
    $region47: #{encoder_layer.5} parent=1 // pred_check_branch
      %98 = sbr.rel (0) target = $region49
    $region48: #{encoder_layer.5} parent=1 // pred_region
      %99 = dma.done [#allocation14], 16
    $region49: #{encoder_layer.5} parent=1 // pred_fallthru
      _
    %p101 = scmp.eq.s32.totalorder 0, 0
    // Predicated region
    $region50: #{encoder_layer.5} parent=1 // pred_check
      %p102 = pneg %p101
    $region51: #{encoder_layer.5} parent=1 // pred_check_branch
      %104 = sbr.rel (%p102) target = $region53
    $region52: #{encoder_layer.5} parent=1 // pred_region
      %v105 = vld [vmem:[#allocation4] sm:$0xff]
      %v106 = vld [vmem:[#allocation4 + $0x8] sm:$0xff]
      %v107 = vld [vmem:[#allocation7] sm:$0x1]
      %v108 = vadd.f32 %v105, 1e-06
      %v109 = vadd.f32 %v106, 1e-06
      %v110 = vadd.f32 %v108, 1e-06
      %v111 = vadd.f32 %v109, 1e-06
      %v112 = vmul.f32 %v110, %v110
      %v113 = vmul.f32 %v111, %v111
      %vm114 = vcmask 261120
      %v115 = vsel %vm114, %v112, 0.0
      %116 = vadd.xlane.f32.xlu0 %v115
      %v117 = vpop.xlane.xlu0 %116
      %v118 = vsel %vm114, %v113, 0.0
      %119 = vadd.xlane.f32.xlu0 %v118
      %v120 = vpop.xlane.xlu0 %119
      %v121 = vrsqrt.pop %v117
      %v122 = vmul.f32 %v117, %v121
      %vm123 = vcmp.eq.f32.partialorder %v117, inf
      %v124 = vsel %vm123, %v117, %v122
      %vm125 = vcmp.eq.f32.partialorder %v117, 0.0
      %v126 = vand.u32 %v117, 2147483648
      %v127 = vsel %vm125, %v126, %v124
      %v128 = vrsqrt.pop %v120
      %v129 = vmul.f32 %v120, %v128
      %vm130 = vcmp.eq.f32.partialorder %v120, inf
      %v131 = vsel %vm130, %v120, %v129
      %vm132 = vcmp.eq.f32.partialorder %v120, 0.0
      %v133 = vand.u32 %v120, 2147483648
      %v134 = vsel %vm132, %v133, %v131
      %v135 = vmul.f32 %v127, 5.656854
      %v136 = vmul.f32 %v134, 5.656854
      %v137 = vadd.f32 %v135, 1e-06
      %v138 = vadd.f32 %v136, 1e-06
      %v139 = vrcp.pop %v137
      %v140 = vmul.f32 1.0, %v139
      %v141 = vrcp.pop %v138
      %v142 = vmul.f32 1.0, %v141
      %v143 = vmul.f32 %v108, %v140
      %v144 = vmul.f32 %v109, %v142
      %v146 = vlaneseq
      %v147 = vshrl.u32 %v146, 7
      %v148 = vsub.s32 0, %v147
      %v149 = vrot.slane %v107, %v148
      %v151 = vmul.f32 %v143, %v149
      %v152 = vmul.f32 %v144, %v149
      %v153 = vpack.c.bf16 %v152, %v151
      %154 = vst.msk [vmem:[#allocation2] sm:$0xff] %vm114, %v153
      %155 = vst.msk [vmem:[#allocation3] sm:$0xff] %vm114, 0.0
      %156 = vst.msk [vmem:[#allocation3 + $0x8] sm:$0xff] %vm114, 0.0
    $region53: #{encoder_layer.5} parent=1 // pred_fallthru
      _
    %v157 = vld [vmem:[#allocation2] sm:$0xff]
    %v158 = vld [vmem:[#allocation9] sm:$0xf]
    %v159 = vld [vmem:[#allocation9 + $0x4] sm:$0xf]
    %v160 = vld [vmem:[#allocation9 + $0x8] sm:$0xf]
    %v161 = vld [vmem:[#allocation9 + $0xc] sm:$0xf]
    %v162 = vld [vmem:[#allocation10] sm:$0x1]
    %v164 = vlaneseq
    %v165 = vshrl.u32 %v164, 7
    %v166 = vsub.s32 0, %v165
    %v167 = vrot.slane %v162, %v166
    %v173 = vunpack.c.l.b16 %v158
    %v174 = vunpack.c.l.b16 %v159
    %v175 = vunpack.c.l.b16 %v160
    %v176 = vunpack.c.l.b16 %v161
    %v177 = vpack.c.b16 %v174, %v173
    %v178 = vpack.c.b16 %v176, %v175
    %vm181 = vcmask 261120
    %v183 = vsel %vm181, %v157, 0
    %185 = vmatprep.subr.bf16.mxu0 0
    %186 = vmatpush1.bf16.msra.mxu0 %v177
    %187 = vmatprep.subr.bf16.mxu0 0
    %188 = vmatpush1.bf16.msra.mxu0 %v178
    %189 = vmatprep.subr.bf16.mxu0 0
    %190 = vmatpush1.bf16.msra.mxu0 0
    %191 = vmatprep.subr.bf16.mxu0 0
    %192 = vmatpush1.bf16.msra.mxu0 0
    %193 = vmatprep.subr.bf16.mxu0 0
    %194 = vmatpush1.bf16.msra.mxu0 0
    %195 = vmatprep.subr.bf16.mxu0 0
    %196 = vmatpush1.bf16.msra.mxu0 0
    %197 = vmatprep.subr.bf16.mxu0 0
    %198 = vmatpush1.bf16.msra.mxu0 0
    %199 = vmatprep.subr.bf16.mxu0 0
    %200 = vmatpush1.bf16.msra.mxu0 0
    %201 = vmatprep.subr.bf16.mxu0 0
    %202 = vmatpush1.bf16.msra.mxu0 0
    %203 = vmatprep.subr.bf16.mxu0 0
    %204 = vmatpush1.bf16.msra.mxu0 0
    %205 = vmatprep.subr.bf16.mxu0 0
    %206 = vmatpush1.bf16.msra.mxu0 0
    %207 = vmatprep.subr.bf16.mxu0 0
    %208 = vmatpush1.bf16.msra.mxu0 0
    %209 = vmatprep.subr.bf16.mxu0 0
    %210 = vmatpush1.bf16.msra.mxu0 0
    %211 = vmatprep.subr.bf16.mxu0 0
    %212 = vmatpush1.bf16.msra.mxu0 0
    %213 = vmatprep.subr.bf16.mxu0 0
    %214 = vmatpush1.bf16.msra.mxu0 0
    %215 = vmatprep.subr.bf16.mxu0 0
    %216 = vmatpush1.bf16.msra.mxu0 0
    %217 = vmatprep.mubr.bf16.mxu0 0
    %218 = vmatmul.mubr.bf16.gmra.mrb[0].mxu0 %v183
    %v219 = vpop.f32.mrb[0].mxu0
    %v220 = vadd.f32 %v167, %v219
    %v221 = vpop.f32.mrb[0].mxu0
    %v222 = vpop.f32.mrb[0].mxu0
    %v223 = vadd.f32 %v167, %v222
    %v224 = vpop.f32.mrb[0].mxu0
    %225 = vdwg.mxu0
    %v226 = vxor.u32 %v220, 2147483648
    %v227 = vxor.u32 %v223, 2147483648
    %v228 = vmul.f32 %v226, 1.442695
    %v229 = vpow.pop %v228
    %v230 = vmul.f32 %v227, 1.442695
    %v231 = vpow.pop %v230
    %v232 = vadd.f32 %v229, 1.0
    %v233 = vadd.f32 %v231, 1.0
    %v234 = vrcp.pop %v232
    %v235 = vmul.f32 1.0, %v234
    %v236 = vrcp.pop %v233
    %v237 = vmul.f32 1.0, %v236
    %v238 = vmul.f32 %v220, %v235
    %v239 = vmul.f32 %v223, %v237
    %242 = vrot.lane.b32.xlu0 %v220, 64
    %v243 = vpop.permute.xlu0 %242
    %244 = vrot.lane.b32.xlu0 %v223, 64
    %v245 = vpop.permute.xlu0 %244
    %v248 = vmul.f32 %v238, %v243
    %v249 = vmul.f32 %v239, %v245
    %v250 = vld [vmem:[#allocation3] sm:$0xff]
    %v251 = vld [vmem:[#allocation3 + $0x8] sm:$0xff]
    %v252 = vpack.c.bf16 %v249, %v248
    %v253 = vld [vmem:[#allocation12] sm:$0xf]
    %v254 = vld [vmem:[#allocation12 + $0x4] sm:$0xf]
    %v255 = vld [vmem:[#allocation12 + $0x8] sm:$0xf]
    %v256 = vld [vmem:[#allocation12 + $0xc] sm:$0xf]
    %v257 = vld [vmem:[#allocation12 + $0x10] sm:$0xf]
    %v258 = vld [vmem:[#allocation12 + $0x14] sm:$0xf]
    %v259 = vld [vmem:[#allocation12 + $0x18] sm:$0xf]
    %v260 = vld [vmem:[#allocation12 + $0x1c] sm:$0xf]
    %v269 = vunpack.c.l.b16 %v253
    %v270 = vunpack.c.l.b16 %v254
    %v271 = vunpack.c.l.b16 %v255
    %v272 = vunpack.c.l.b16 %v256
    %v273 = vunpack.c.l.b16 %v257
    %v274 = vunpack.c.l.b16 %v258
    %v275 = vunpack.c.l.b16 %v259
    %v276 = vunpack.c.l.b16 %v260
    %v277 = vpack.c.b16 %v270, %v269
    %v278 = vpack.c.b16 %v272, %v271
    %v279 = vpack.c.b16 %v274, %v273
    %v280 = vpack.c.b16 %v276, %v275
    %vm285 = vcmask 523264
    %v287 = vsel %vm285, %v252, 0
    %289 = vmatprep.subr.bf16.mxu0 0
    %290 = vmatpush1.bf16.msra.mxu0 %v277
    %291 = vmatprep.subr.bf16.mxu0 0
    %292 = vmatpush1.bf16.msra.mxu0 %v278
    %293 = vmatprep.subr.bf16.mxu0 0
    %294 = vmatpush1.bf16.msra.mxu0 %v279
    %295 = vmatprep.subr.bf16.mxu0 0
    %296 = vmatpush1.bf16.msra.mxu0 %v280
    %297 = vmatprep.subr.bf16.mxu0 0
    %298 = vmatpush1.bf16.msra.mxu0 0
    %299 = vmatprep.subr.bf16.mxu0 0
    %300 = vmatpush1.bf16.msra.mxu0 0
    %301 = vmatprep.subr.bf16.mxu0 0
    %302 = vmatpush1.bf16.msra.mxu0 0
    %303 = vmatprep.subr.bf16.mxu0 0
    %304 = vmatpush1.bf16.msra.mxu0 0
    %305 = vmatprep.subr.bf16.mxu0 0
    %306 = vmatpush1.bf16.msra.mxu0 0
    %307 = vmatprep.subr.bf16.mxu0 0
    %308 = vmatpush1.bf16.msra.mxu0 0
    %309 = vmatprep.subr.bf16.mxu0 0
    %310 = vmatpush1.bf16.msra.mxu0 0
    %311 = vmatprep.subr.bf16.mxu0 0
    %312 = vmatpush1.bf16.msra.mxu0 0
    %313 = vmatprep.subr.bf16.mxu0 0
    %314 = vmatpush1.bf16.msra.mxu0 0
    %315 = vmatprep.subr.bf16.mxu0 0
    %316 = vmatpush1.bf16.msra.mxu0 0
    %317 = vmatprep.subr.bf16.mxu0 0
    %318 = vmatpush1.bf16.msra.mxu0 0
    %319 = vmatprep.subr.bf16.mxu0 0
    %320 = vmatpush1.bf16.msra.mxu0 0
    %321 = vmatprep.mubr.bf16.mxu0 0
    %322 = vmatmul.mubr.bf16.gmra.mrb[0].mxu0 %v287
    %v323 = vpop.f32.mrb[0].mxu0
    %v324 = vadd.f32 0.0, %v323
    %v325 = vpop.f32.mrb[0].mxu0
    %v326 = vpop.f32.mrb[0].mxu0
    %v327 = vadd.f32 0.0, %v326
    %v328 = vpop.f32.mrb[0].mxu0
    %329 = vdwg.mxu0
    %v330 = vadd.f32 %v250, %v324
    %v331 = vadd.f32 %v251, %v327
    %332 = vst.msk [vmem:[#allocation3] sm:$0xff] %vm181, %v330
    %333 = vst.msk [vmem:[#allocation3 + $0x8] sm:$0xff] %vm181, %v331
    // Predicated region
    $region54: #{encoder_layer.5} parent=1 // pred_check
      %p334 = pneg %p101
    $region55: #{encoder_layer.5} parent=1 // pred_check_branch
      %336 = sbr.rel (%p334) target = $region57
    $region56: #{encoder_layer.5} parent=1 // pred_region
      %v337 = vld [vmem:[#allocation4] sm:$0xff]
      %v338 = vld [vmem:[#allocation4 + $0x8] sm:$0xff]
      %v339 = vld [vmem:[#allocation3] sm:$0xff]
      %v340 = vld [vmem:[#allocation3 + $0x8] sm:$0xff]
      %v341 = vadd.f32 %v337, %v339
      %v342 = vadd.f32 %v338, %v340
      %v343 = vld [vmem:[#allocation13] sm:$0x1]
      %v345 = vlaneseq
      %v346 = vshrl.u32 %v345, 7
      %v347 = vsub.s32 0, %v346
      %v348 = vrot.slane %v343, %v347
      %v350 = vadd.f32 %v341, %v348
      %v351 = vadd.f32 %v342, %v348
      %352 = vst.msk [vmem:[#allocation15] sm:$0xff] %vm181, %v350
      %353 = vst.msk [vmem:[#allocation15 + $0x8] sm:$0xff] %vm181, %v351
    $region57: #{encoder_layer.5} parent=1 // pred_fallthru
      _
    // Predicated region
    $region58: #{encoder_layer.5} parent=1 // pred_check
      _
    $region59: #{encoder_layer.5} parent=1 // pred_check_branch
      %355 = sbr.rel (0) target = $region61
    $region60: #{encoder_layer.5} parent=1 // pred_region
      %s357 = ssub.s32 256, 256
      %358 = vsyncadd [#allocation6], %s357
      %s359 = sshll.u32 [#allocation15], 4
      %s360 = int_to_ptr.vmem [resolvable:$true] %s359
      %365 = dma.vmem_to_hbm [thread:$0]  %s360, 256, %s6, [#allocation6], 128, 128, 8
    $region61: #{encoder_layer.5} parent=1 // pred_fallthru
      _
    // Predicated region
    $region62: #{encoder_layer.5} parent=1 // pred_check
      _
    $region63: #{encoder_layer.5} parent=1 // pred_check_branch
      %367 = sbr.rel (0) target = $region65
    $region64: #{encoder_layer.5} parent=1 // pred_region
      %368 = dma.done [#allocation6], 256
    $region65: #{encoder_layer.5} parent=1 // pred_fallthru
      _
    %369 = vsyncpa [#allocation5], 1
    %370 = vsyncpa [#allocation8], 1
    %371 = vsyncpa [#allocation11], 1
    %372 = vsyncpa [#allocation14], 1
    %373 = vsyncpa [#allocation6], 1

// kernel: encoder_layer.4
$region0: #{encoder_layer.4}
  #allocation0 [shape = 'u32[]', space=smem, size = 0x4, offset = 0x4, fixed_abs, tag = 'smem constant byte address 0x4 - core index']
  #allocation1 [shape = 'u32[144,128]{1,0:T(1,128)}', space=vmem, size = 0x12000, scoped, tag = 'internal scratch']
  #allocation2 [shape = 'bf16[8,32]{1,0:T(8,128)(2,1)}', space=vmem, size = 0x800, scoped, tag = 'scratch operand']
  #allocation3 [shape = 'bf16[8,32]{1,0:T(8,128)(2,1)}', space=vmem, size = 0x800, scoped, tag = 'scratch operand']
  #allocation4 [shape = 'f32[8,32]{1,0:T(8,128)}', space=vmem, size = 0x1000, scoped, tag = 'scratch operand']
  %s0 = inlined_call_operand.hbm [shape: f32[2,8,32], index: 0, kind: input, shape index: {}]
  %s1 = inlined_call_operand.hbm [shape: f32[2,8,32], index: 1, kind: input, shape index: {}]
  %s2 = inlined_call_operand.hbm [shape: f32[1,32], index: 2, kind: input, shape index: {}]
  %s3 = inlined_call_operand.hbm [shape: bf16[32,32], index: 3, kind: input, shape index: {}]
  %s4 = inlined_call_operand.hbm [shape: f32[1,32], index: 4, kind: input, shape index: {}]
  %s5 = inlined_call_operand.hbm [shape: bf16[32,64], index: 5, kind: input, shape index: {}]
  %s6 = inlined_call_operand.hbm [shape: f32[1,64], index: 6, kind: input, shape index: {}]
  %s7 = inlined_call_operand.hbm [shape: bf16[32,32], index: 7, kind: input, shape index: {}]
  %s8 = inlined_call_operand.hbm [shape: f32[1,32], index: 8, kind: input, shape index: {}]
  %s9 = inlined_call_operand.hbm [shape: f32[2,8,32], index: 9, kind: output, shape index: {}]
  %s10 = sld [smem:[#allocation0]]
  $region109: #{encoder_layer.4} parent=0
    _
  %s12 = ssub.s32 1, %s10
  %s13 = scalar_select 0, %s12, %s10
  $region1: #{encoder_layer.4} parent=0
    #allocation5 [shape = 'u8[8192]{0}', space=vmem, size = 0x2000, scoped, tag = 'input window, operand 0']
    #allocation6 [shape = 's32[2]{0}', space=sflag, size = 0x8, scoped, tag = 'scoped memory for encoder_layer.4']
    #allocation7 [shape = 's32[2]{0}', space=sflag, size = 0x8, scoped, tag = 'scoped memory for encoder_layer.4']
    #allocation8 [shape = 'u8[8192]{0}', space=vmem, size = 0x2000, scoped, tag = 'input window, operand 1']
    #allocation9 [shape = 's32[2]{0}', space=sflag, size = 0x8, scoped, tag = 'scoped memory for encoder_layer.4']
    #allocation10 [shape = 'u8[512]{0}', space=vmem, size = 0x400, scoped, tag = 'input window, operand 2, single buffered']
    #allocation11 [shape = 'u8[8192]{0}', space=vmem, size = 0x2000, scoped, tag = 'input window, operand 3, single buffered']
    #allocation12 [shape = 's32[1]{0}', space=sflag, size = 0x4, scoped, tag = 'scoped memory for encoder_layer.4']
    #allocation13 [shape = 'u8[512]{0}', space=vmem, size = 0x400, scoped, tag = 'input window, operand 4, single buffered']
    #allocation14 [shape = 'u8[8192]{0}', space=vmem, size = 0x2000, scoped, tag = 'input window, operand 5, single buffered']
    #allocation15 [shape = 's32[1]{0}', space=sflag, size = 0x4, scoped, tag = 'scoped memory for encoder_layer.4']
    #allocation16 [shape = 'u8[512]{0}', space=vmem, size = 0x400, scoped, tag = 'input window, operand 6, single buffered']
    #allocation17 [shape = 'u8[8192]{0}', space=vmem, size = 0x2000, scoped, tag = 'input window, operand 7, single buffered']
    #allocation18 [shape = 's32[1]{0}', space=sflag, size = 0x4, scoped, tag = 'scoped memory for encoder_layer.4']
    #allocation19 [shape = 'u8[512]{0}', space=vmem, size = 0x400, scoped, tag = 'input window, operand 8, single buffered']
    #allocation20 [shape = 'u8[8192]{0}', space=vmem, size = 0x2000, scoped, tag = 'output window, operand 0']
    %14 = vsyncpa [#allocation6], 0
    %s15 = scalar_lea.sflag [#allocation6], 1
    %16 = vsyncpa %s15, 0
    %17 = vsyncpa [#allocation9], 0
    %s18 = scalar_lea.sflag [#allocation9], 1
    %19 = vsyncpa %s18, 0
    %20 = vsyncpa [#allocation12], 0
    %21 = vsyncpa [#allocation15], 0
    %22 = vsyncpa [#allocation18], 0
    %23 = vsyncpa [#allocation7], 0
    %s24 = scalar_lea.sflag [#allocation7], 1
    %25 = vsyncpa %s24, 0
    loop: start=0, step=1, limit=4
    $region2: #{encoder_layer.4} parent=1 // loop_pre_header
      _
    $region3: #{encoder_layer.4} parent=1 // loop_header
      %s27 = sphi 0, %s31
      %p28 = scmp.ge.s32.totalorder %s27, 4
      %s34 = sphi 0, %s46
      %s35 = sphi 0, %s42
      %s36 = sphi 0, %s34
      %s37 = sphi 0, %s35
      %s38 = sphi 0, %s36
      %s39 = sphi 0, %s37
      %s51 = sphi 0, %s53
      %s54 = sphi 0, %s51
      %s55 = sphi 0, %s54
      %s71 = sphi 0, %s55
      %s77 = sphi 0, %s79
      %s80 = sphi 0, %s77
      %s81 = sphi 0, %s80
      %s97 = sphi 0, %s81
      %s101 = sphi 0, %s101
      %s103 = sphi 0, %s101
      %s104 = sphi 0, %s103
      %s118 = sphi 0, %s104
      %s122 = sphi 0, %s122
      %s124 = sphi 0, %s122
      %s125 = sphi 0, %s124
      %s139 = sphi 0, %s125
      %s143 = sphi 0, %s143
      %s145 = sphi 0, %s143
      %s146 = sphi 0, %s145
      %s160 = sphi 0, %s146
      %s164 = sphi 0, %s164
      %s166 = sphi 0, %s164
      %s167 = sphi 0, %s166
      %s181 = sphi 0, %s167
      %s185 = sphi 0, %s185
      %s187 = sphi 0, %s185
      %s188 = sphi 0, %s187
      %s202 = sphi 0, %s188
      %s206 = sphi 0, %s206
      %s208 = sphi 0, %s206
      %s209 = sphi 0, %s208
      %s223 = sphi 0, %s209
      %s227 = sphi 0, %s227
      %s229 = sphi 0, %s227
      %s230 = sphi 0, %s229
      %s244 = sphi 0, %s230
      %s252 = sphi 0, %s254
      %s255 = sphi 0, %s252
      %s256 = sphi 0, %s255
      %s272 = sphi 0, %s256
    $region4: #{encoder_layer.4} parent=1 // loop_header_branch
      %30 = sbr.rel (%p28) target = $region8
    $region5: #{encoder_layer.4} parent=1 // loop_body
      %s32 = ssub.s32 %s27, 1
      %s33 = ssub.s32 %s27, 2
      %s40 = sadd.s32 1, %s35
      %p41 = scmp.ge.s32.totalorder %s40, 1
      %s42 = scalar_select %p41, 0, %s40
      %s43 = sadd.s32 1, %s34
      %s44 = scalar_select %p41, %s43, %s34
      %p45 = scmp.ge.s32.totalorder %s44, 2
      %s46 = scalar_select %p45, 0, %s44
      %s47 = ssub.s32 %s34, %s46
      %s48 = ssub.s32 %s35, %s42
      %s49 = sor.u32 %s47, %s48
      %p50 = scmp.eq.s32.totalorder %s49, 0
      %s52 = sadd.s32 %s51, 1
      %s53 = scalar_select %p50, %s51, %s52
      %p56 = pneg %p50
      %p57 = scmp.eq.s32.totalorder %s27, 1
      %p58 = por %p56, %p57
      %p59 = scmp.ne.s32.totalorder %s51, %s54
      %p60 = scmp.eq.s32.totalorder %s27, 0
      %p61 = por %p59, %p60
      %p62 = scmp.ne.s32.totalorder %s51, %s54
      %p63 = scmp.eq.s32.totalorder %s32, 1
      %p64 = por %p62, %p63
      %p65 = scmp.ne.s32.totalorder %s54, %s55
      %p66 = scmp.eq.s32.totalorder %s32, 0
      %p67 = por %p65, %p66
      %p68 = scmp.ne.s32.totalorder %s54, %s55
      %p69 = scmp.eq.s32.totalorder %s33, 1
      %p70 = por %p68, %p69
      %p72 = scmp.ne.s32.totalorder %s55, %s71
      %p73 = scmp.eq.s32.totalorder %s33, 0
      %p74 = por %p72, %p73
      %s75 = ssub.s32 %s34, %s46
      %p76 = scmp.eq.s32.totalorder %s75, 0
      %s78 = sadd.s32 %s77, 1
      %s79 = scalar_select %p76, %s77, %s78
      %p82 = pneg %p76
      %p83 = scmp.eq.s32.totalorder %s27, 1
      %p84 = por %p82, %p83
      %p85 = scmp.ne.s32.totalorder %s77, %s80
      %p86 = scmp.eq.s32.totalorder %s27, 0
      %p87 = por %p85, %p86
      %p88 = scmp.ne.s32.totalorder %s77, %s80
      %p89 = scmp.eq.s32.totalorder %s32, 1
      %p90 = por %p88, %p89
      %p91 = scmp.ne.s32.totalorder %s80, %s81
      %p92 = scmp.eq.s32.totalorder %s32, 0
      %p93 = por %p91, %p92
      %p94 = scmp.ne.s32.totalorder %s80, %s81
      %p95 = scmp.eq.s32.totalorder %s33, 1
      %p96 = por %p94, %p95
      %p98 = scmp.ne.s32.totalorder %s81, %s97
      %p99 = scmp.eq.s32.totalorder %s33, 0
      %p100 = por %p98, %p99
      %s102 = sadd.s32 %s101, 1
      %p105 = scmp.eq.s32.totalorder %s27, 1
      %p106 = scmp.ne.s32.totalorder %s101, %s103
      %p107 = scmp.eq.s32.totalorder %s27, 0
      %p108 = por %p106, %p107
      %p109 = scmp.ne.s32.totalorder %s101, %s103
      %p110 = scmp.eq.s32.totalorder %s32, 1
      %p111 = por %p109, %p110
      %p112 = scmp.ne.s32.totalorder %s103, %s104
      %p113 = scmp.eq.s32.totalorder %s32, 0
      %p114 = por %p112, %p113
      %p115 = scmp.ne.s32.totalorder %s103, %s104
      %p116 = scmp.eq.s32.totalorder %s33, 1
      %p117 = por %p115, %p116
      %p119 = scmp.ne.s32.totalorder %s104, %s118
      %p120 = scmp.eq.s32.totalorder %s33, 0
      %p121 = por %p119, %p120
      %s123 = sadd.s32 %s122, 1
      %p126 = scmp.eq.s32.totalorder %s27, 1
      %p127 = scmp.ne.s32.totalorder %s122, %s124
      %p128 = scmp.eq.s32.totalorder %s27, 0
      %p129 = por %p127, %p128
      %p130 = scmp.ne.s32.totalorder %s122, %s124
      %p131 = scmp.eq.s32.totalorder %s32, 1
      %p132 = por %p130, %p131
      %p133 = scmp.ne.s32.totalorder %s124, %s125
      %p134 = scmp.eq.s32.totalorder %s32, 0
      %p135 = por %p133, %p134
      %p136 = scmp.ne.s32.totalorder %s124, %s125
      %p137 = scmp.eq.s32.totalorder %s33, 1
      %p138 = por %p136, %p137
      %p140 = scmp.ne.s32.totalorder %s125, %s139
      %p141 = scmp.eq.s32.totalorder %s33, 0
      %p142 = por %p140, %p141
      %s144 = sadd.s32 %s143, 1
      %p147 = scmp.eq.s32.totalorder %s27, 1
      %p148 = scmp.ne.s32.totalorder %s143, %s145
      %p149 = scmp.eq.s32.totalorder %s27, 0
      %p150 = por %p148, %p149
      %p151 = scmp.ne.s32.totalorder %s143, %s145
      %p152 = scmp.eq.s32.totalorder %s32, 1
      %p153 = por %p151, %p152
      %p154 = scmp.ne.s32.totalorder %s145, %s146
      %p155 = scmp.eq.s32.totalorder %s32, 0
      %p156 = por %p154, %p155
      %p157 = scmp.ne.s32.totalorder %s145, %s146
      %p158 = scmp.eq.s32.totalorder %s33, 1
      %p159 = por %p157, %p158
      %p161 = scmp.ne.s32.totalorder %s146, %s160
      %p162 = scmp.eq.s32.totalorder %s33, 0
      %p163 = por %p161, %p162
      %s165 = sadd.s32 %s164, 1
      %p168 = scmp.eq.s32.totalorder %s27, 1
      %p169 = scmp.ne.s32.totalorder %s164, %s166
      %p170 = scmp.eq.s32.totalorder %s27, 0
      %p171 = por %p169, %p170
      %p172 = scmp.ne.s32.totalorder %s164, %s166
      %p173 = scmp.eq.s32.totalorder %s32, 1
      %p174 = por %p172, %p173
      %p175 = scmp.ne.s32.totalorder %s166, %s167
      %p176 = scmp.eq.s32.totalorder %s32, 0
      %p177 = por %p175, %p176
      %p178 = scmp.ne.s32.totalorder %s166, %s167
      %p179 = scmp.eq.s32.totalorder %s33, 1
      %p180 = por %p178, %p179
      %p182 = scmp.ne.s32.totalorder %s167, %s181
      %p183 = scmp.eq.s32.totalorder %s33, 0
      %p184 = por %p182, %p183
      %s186 = sadd.s32 %s185, 1
      %p189 = scmp.eq.s32.totalorder %s27, 1
      %p190 = scmp.ne.s32.totalorder %s185, %s187
      %p191 = scmp.eq.s32.totalorder %s27, 0
      %p192 = por %p190, %p191
      %p193 = scmp.ne.s32.totalorder %s185, %s187
      %p194 = scmp.eq.s32.totalorder %s32, 1
      %p195 = por %p193, %p194
      %p196 = scmp.ne.s32.totalorder %s187, %s188
      %p197 = scmp.eq.s32.totalorder %s32, 0
      %p198 = por %p196, %p197
      %p199 = scmp.ne.s32.totalorder %s187, %s188
      %p200 = scmp.eq.s32.totalorder %s33, 1
      %p201 = por %p199, %p200
      %p203 = scmp.ne.s32.totalorder %s188, %s202
      %p204 = scmp.eq.s32.totalorder %s33, 0
      %p205 = por %p203, %p204
      %s207 = sadd.s32 %s206, 1
      %p210 = scmp.eq.s32.totalorder %s27, 1
      %p211 = scmp.ne.s32.totalorder %s206, %s208
      %p212 = scmp.eq.s32.totalorder %s27, 0
      %p213 = por %p211, %p212
      %p214 = scmp.ne.s32.totalorder %s206, %s208
      %p215 = scmp.eq.s32.totalorder %s32, 1
      %p216 = por %p214, %p215
      %p217 = scmp.ne.s32.totalorder %s208, %s209
      %p218 = scmp.eq.s32.totalorder %s32, 0
      %p219 = por %p217, %p218
      %p220 = scmp.ne.s32.totalorder %s208, %s209
      %p221 = scmp.eq.s32.totalorder %s33, 1
      %p222 = por %p220, %p221
      %p224 = scmp.ne.s32.totalorder %s209, %s223
      %p225 = scmp.eq.s32.totalorder %s33, 0
      %p226 = por %p224, %p225
      %s228 = sadd.s32 %s227, 1
      %p231 = scmp.eq.s32.totalorder %s27, 1
      %p232 = scmp.ne.s32.totalorder %s227, %s229
      %p233 = scmp.eq.s32.totalorder %s27, 0
      %p234 = por %p232, %p233
      %p235 = scmp.ne.s32.totalorder %s227, %s229
      %p236 = scmp.eq.s32.totalorder %s32, 1
      %p237 = por %p235, %p236
      %p238 = scmp.ne.s32.totalorder %s229, %s230
      %p239 = scmp.eq.s32.totalorder %s32, 0
      %p240 = por %p238, %p239
      %p241 = scmp.ne.s32.totalorder %s229, %s230
      %p242 = scmp.eq.s32.totalorder %s33, 1
      %p243 = por %p241, %p242
      %p245 = scmp.ne.s32.totalorder %s230, %s244
      %p246 = scmp.eq.s32.totalorder %s33, 0
      %p247 = por %p245, %p246
      %s248 = ssub.s32 %s34, %s46
      %s249 = ssub.s32 %s35, %s42
      %s250 = sor.u32 %s248, %s249
      %p251 = scmp.eq.s32.totalorder %s250, 0
      %s253 = sadd.s32 %s252, 1
      %s254 = scalar_select %p251, %s252, %s253
      %p257 = pneg %p251
      %p258 = scmp.eq.s32.totalorder %s27, 1
      %p259 = por %p257, %p258
      %p260 = scmp.ne.s32.totalorder %s252, %s255
      %p261 = scmp.eq.s32.totalorder %s27, 0
      %p262 = por %p260, %p261
      %p263 = scmp.ne.s32.totalorder %s252, %s255
      %p264 = scmp.eq.s32.totalorder %s32, 1
      %p265 = por %p263, %p264
      %p266 = scmp.ne.s32.totalorder %s255, %s256
      %p267 = scmp.eq.s32.totalorder %s32, 0
      %p268 = por %p266, %p267
      %p269 = scmp.ne.s32.totalorder %s255, %s256
      %p270 = scmp.eq.s32.totalorder %s33, 1
      %p271 = por %p269, %p270
      %p273 = scmp.ne.s32.totalorder %s256, %s272
      %p274 = scmp.eq.s32.totalorder %s33, 0
      %p275 = por %p273, %p274
      %p276 = scmp.le.s32.totalorder 1, %s27
      %p277 = scmp.lt.s32.totalorder %s27, 3
      %p278 = pnand %p276, %p277
      %p279 = pneg %p278
      // Predicated region
      $region9: #{encoder_layer.4} parent=5 // pred_check
        _
      $region10: #{encoder_layer.4} parent=5 // pred_check_branch
        %281 = sbr.rel (%p278) target = $region12
      $region11: #{encoder_layer.4} parent=5 // pred_region
        %s282 = ssub.s32 %s27, 1
        // Predicated region
        $region13: #{encoder_layer.4} parent=11 // pred_check
          %p283 = pneg %p114
        $region14: #{encoder_layer.4} parent=11 // pred_check_branch
          %285 = sbr.rel (%p283) target = $region16
        $region15: #{encoder_layer.4} parent=11 // pred_region
          %s287 = ssub.s32 16, 16
          %288 = vsyncadd [#allocation9], %s287
          %s290 = sshll.u32 [#allocation10], 4
          %s291 = int_to_ptr.vmem [resolvable:$true] %s290
          %293 = dma.hbm_to_vmem [thread:$0]  %s2, 16, %s291, [#allocation9]
        $region16: #{encoder_layer.4} parent=11 // pred_fallthru
          _
        // Predicated region
        $region17: #{encoder_layer.4} parent=11 // pred_check
          %p294 = pneg %p135
        $region18: #{encoder_layer.4} parent=11 // pred_check_branch
          %296 = sbr.rel (%p294) target = $region20
        $region19: #{encoder_layer.4} parent=11 // pred_region
          %s298 = ssub.s32 256, 256
          %299 = vsyncadd [#allocation12], %s298
          %s300 = sshll.u32 [#allocation11], 4
          %s301 = int_to_ptr.vmem [resolvable:$true] %s300
          %306 = dma.hbm_to_vmem [thread:$0]  %s3, 256, %s301, [#allocation12], 64, 64, 4
        $region20: #{encoder_layer.4} parent=11 // pred_fallthru
          _
        // Predicated region
        $region21: #{encoder_layer.4} parent=11 // pred_check
          %p307 = pneg %p156
        $region22: #{encoder_layer.4} parent=11 // pred_check_branch
          %309 = sbr.rel (%p307) target = $region24
        $region23: #{encoder_layer.4} parent=11 // pred_region
          %s311 = ssub.s32 16, 16
          %312 = vsyncadd [#allocation12], %s311
          %s314 = sshll.u32 [#allocation13], 4
          %s315 = int_to_ptr.vmem [resolvable:$true] %s314
          %317 = dma.hbm_to_vmem [thread:$0]  %s4, 16, %s315, [#allocation12]
        $region24: #{encoder_layer.4} parent=11 // pred_fallthru
          _
        // Predicated region
        $region25: #{encoder_layer.4} parent=11 // pred_check
          %p318 = pneg %p177
        $region26: #{encoder_layer.4} parent=11 // pred_check_branch
          %320 = sbr.rel (%p318) target = $region28
        $region27: #{encoder_layer.4} parent=11 // pred_region
          %s322 = ssub.s32 256, 256
          %323 = vsyncadd [#allocation15], %s322
          %s324 = sshll.u32 [#allocation14], 4
          %s325 = int_to_ptr.vmem [resolvable:$true] %s324
          %330 = dma.hbm_to_vmem [thread:$0]  %s5, 256, %s325, [#allocation15], 64, 64, 4
        $region28: #{encoder_layer.4} parent=11 // pred_fallthru
          _
        // Predicated region
        $region29: #{encoder_layer.4} parent=11 // pred_check
          %p331 = pneg %p198
        $region30: #{encoder_layer.4} parent=11 // pred_check_branch
          %333 = sbr.rel (%p331) target = $region32
        $region31: #{encoder_layer.4} parent=11 // pred_region
          %s335 = ssub.s32 16, 16
          %336 = vsyncadd [#allocation15], %s335
          %s338 = sshll.u32 [#allocation16], 4
          %s339 = int_to_ptr.vmem [resolvable:$true] %s338
          %341 = dma.hbm_to_vmem [thread:$0]  %s6, 16, %s339, [#allocation15]
        $region32: #{encoder_layer.4} parent=11 // pred_fallthru
          _
        // Predicated region
        $region33: #{encoder_layer.4} parent=11 // pred_check
          %p342 = pneg %p219
        $region34: #{encoder_layer.4} parent=11 // pred_check_branch
          %344 = sbr.rel (%p342) target = $region36
        $region35: #{encoder_layer.4} parent=11 // pred_region
          %s346 = ssub.s32 256, 256
          %347 = vsyncadd [#allocation18], %s346
          %s348 = sshll.u32 [#allocation17], 4
          %s349 = int_to_ptr.vmem [resolvable:$true] %s348
          %354 = dma.hbm_to_vmem [thread:$0]  %s7, 256, %s349, [#allocation18], 64, 64, 4
        $region36: #{encoder_layer.4} parent=11 // pred_fallthru
          _
        // Predicated region
        $region37: #{encoder_layer.4} parent=11 // pred_check
          %p355 = pneg %p240
        $region38: #{encoder_layer.4} parent=11 // pred_check_branch
          %357 = sbr.rel (%p355) target = $region40
        $region39: #{encoder_layer.4} parent=11 // pred_region
          %s359 = ssub.s32 16, 16
          %360 = vsyncadd [#allocation18], %s359
          %s362 = sshll.u32 [#allocation19], 4
          %s363 = int_to_ptr.vmem [resolvable:$true] %s362
          %365 = dma.hbm_to_vmem [thread:$0]  %s8, 16, %s363, [#allocation18]
        $region40: #{encoder_layer.4} parent=11 // pred_fallthru
          _
      $region12: #{encoder_layer.4} parent=5 // pred_fallthru
        _
      %p366 = scmp.lt.s32.totalorder %s27, 2
      // Predicated region
      $region41: #{encoder_layer.4} parent=5 // pred_check
        %p367 = pneg %p366
      $region42: #{encoder_layer.4} parent=5 // pred_check_branch
        %369 = sbr.rel (%p367) target = $region44
      $region43: #{encoder_layer.4} parent=5 // pred_region
        // Predicated region
        $region45: #{encoder_layer.4} parent=43 // pred_check
          %p370 = pneg %p61
        $region46: #{encoder_layer.4} parent=43 // pred_check_branch
          %372 = sbr.rel (%p370) target = $region48
        $region47: #{encoder_layer.4} parent=43 // pred_region
          %s373 = sand.u32 %s51, 1
          %s374 = scalar_lea.sflag [#allocation6], %s373
          %s375 = sand.u32 %s51, 1
          %s376 = smul.addr %s375, 8
          %s377 = scalar_lea.vmem [#allocation5], %s376
          %s379 = ssub.s32 128, 128
          %380 = vsyncadd %s374, %s379
          %s381 = sadd.s32 %s35, %s34
          %s382 = smul.addr %s381, 128
          %s383 = scalar_lea.hbm %s0, %s382
          %s385 = sshll.u32 %s377, 4
          %s386 = int_to_ptr.vmem [resolvable:$true] %s385
          %388 = dma.hbm_to_vmem [thread:$0]  %s383, 128, %s386, %s374
        $region48: #{encoder_layer.4} parent=43 // pred_fallthru
          _
        // Predicated region
        $region49: #{encoder_layer.4} parent=43 // pred_check
          %p389 = pneg %p87
        $region50: #{encoder_layer.4} parent=43 // pred_check_branch
          %391 = sbr.rel (%p389) target = $region52
        $region51: #{encoder_layer.4} parent=43 // pred_region
          %s392 = sand.u32 %s27, 1
          %s393 = scalar_lea.sflag [#allocation9], %s392
          %s394 = sand.u32 %s77, 1
          %s395 = smul.addr %s394, 8
          %s396 = scalar_lea.vmem [#allocation8], %s395
          %s398 = ssub.s32 128, 128
          %399 = vsyncadd %s393, %s398
          %s400 = smul.addr %s34, 128
          %s401 = scalar_lea.hbm %s1, %s400
          %s403 = sshll.u32 %s396, 4
          %s404 = int_to_ptr.vmem [resolvable:$true] %s403
          %406 = dma.hbm_to_vmem [thread:$0]  %s401, 128, %s404, %s393
        $region52: #{encoder_layer.4} parent=43 // pred_fallthru
          _
      $region44: #{encoder_layer.4} parent=5 // pred_fallthru
        _
      %p407 = scmp.le.s32.totalorder 1, %s27
      %p408 = scmp.lt.s32.totalorder %s27, 3
      %p409 = pnand %p407, %p408
      %p410 = pneg %p409
      // Predicated region
      $region53: #{encoder_layer.4} parent=5 // pred_check
        _
      $region54: #{encoder_layer.4} parent=5 // pred_check_branch
        %412 = sbr.rel (%p409) target = $region56
      $region55: #{encoder_layer.4} parent=5 // pred_region
        %s413 = ssub.s32 %s27, 1
        %s414 = sand.u32 %s54, 1
        %s415 = scalar_lea.sflag [#allocation6], %s414
        %s416 = sand.u32 %s54, 1
        %s417 = smul.addr %s416, 8
        %s418 = scalar_lea.vmem [#allocation5], %s417
        // Predicated region
        $region57: #{encoder_layer.4} parent=55 // pred_check
          %p419 = pneg %p67
        $region58: #{encoder_layer.4} parent=55 // pred_check_branch
          %421 = sbr.rel (%p419) target = $region60
        $region59: #{encoder_layer.4} parent=55 // pred_region
          %422 = dma.done %s415, 128
        $region60: #{encoder_layer.4} parent=55 // pred_fallthru
          _
        %s423 = sand.u32 %s32, 1
        %s424 = scalar_lea.sflag [#allocation9], %s423
        %s425 = sand.u32 %s80, 1
        %s426 = smul.addr %s425, 8
        %s427 = scalar_lea.vmem [#allocation8], %s426
        // Predicated region
        $region61: #{encoder_layer.4} parent=55 // pred_check
          %p428 = pneg %p93
        $region62: #{encoder_layer.4} parent=55 // pred_check_branch
          %430 = sbr.rel (%p428) target = $region64
        $region63: #{encoder_layer.4} parent=55 // pred_region
          %431 = dma.done %s424, 128
        $region64: #{encoder_layer.4} parent=55 // pred_fallthru
          _
        // Predicated region
        $region65: #{encoder_layer.4} parent=55 // pred_check
          %p432 = pneg %p114
        $region66: #{encoder_layer.4} parent=55 // pred_check_branch
          %434 = sbr.rel (%p432) target = $region68
        $region67: #{encoder_layer.4} parent=55 // pred_region
          %435 = dma.done [#allocation9], 16
        $region68: #{encoder_layer.4} parent=55 // pred_fallthru
          _
        // Predicated region
        $region69: #{encoder_layer.4} parent=55 // pred_check
          %p436 = pneg %p135
        $region70: #{encoder_layer.4} parent=55 // pred_check_branch
          %438 = sbr.rel (%p436) target = $region72
        $region71: #{encoder_layer.4} parent=55 // pred_region
          %439 = dma.done [#allocation12], 256
        $region72: #{encoder_layer.4} parent=55 // pred_fallthru
          _
        // Predicated region
        $region73: #{encoder_layer.4} parent=55 // pred_check
          %p440 = pneg %p156
        $region74: #{encoder_layer.4} parent=55 // pred_check_branch
          %442 = sbr.rel (%p440) target = $region76
        $region75: #{encoder_layer.4} parent=55 // pred_region
          %443 = dma.done [#allocation12], 16
        $region76: #{encoder_layer.4} parent=55 // pred_fallthru
          _
        // Predicated region
        $region77: #{encoder_layer.4} parent=55 // pred_check
          %p444 = pneg %p177
        $region78: #{encoder_layer.4} parent=55 // pred_check_branch
          %446 = sbr.rel (%p444) target = $region80
        $region79: #{encoder_layer.4} parent=55 // pred_region
          %447 = dma.done [#allocation15], 256
        $region80: #{encoder_layer.4} parent=55 // pred_fallthru
          _
        // Predicated region
        $region81: #{encoder_layer.4} parent=55 // pred_check
          %p448 = pneg %p198
        $region82: #{encoder_layer.4} parent=55 // pred_check_branch
          %450 = sbr.rel (%p448) target = $region84
        $region83: #{encoder_layer.4} parent=55 // pred_region
          %451 = dma.done [#allocation15], 16
        $region84: #{encoder_layer.4} parent=55 // pred_fallthru
          _
        // Predicated region
        $region85: #{encoder_layer.4} parent=55 // pred_check
          %p452 = pneg %p219
        $region86: #{encoder_layer.4} parent=55 // pred_check_branch
          %454 = sbr.rel (%p452) target = $region88
        $region87: #{encoder_layer.4} parent=55 // pred_region
          %455 = dma.done [#allocation18], 256
        $region88: #{encoder_layer.4} parent=55 // pred_fallthru
          _
        // Predicated region
        $region89: #{encoder_layer.4} parent=55 // pred_check
          %p456 = pneg %p240
        $region90: #{encoder_layer.4} parent=55 // pred_check_branch
          %458 = sbr.rel (%p456) target = $region92
        $region91: #{encoder_layer.4} parent=55 // pred_region
          %459 = dma.done [#allocation18], 16
        $region92: #{encoder_layer.4} parent=55 // pred_fallthru
          _
        %s460 = sand.u32 %s54, 1
        %s461 = scalar_lea.sflag [#allocation6], %s460
        %s462 = sand.u32 %s54, 1
        %s463 = smul.addr %s462, 8
        %s464 = scalar_lea.vmem [#allocation5], %s463
        %p465 = pneg %p67
        %p466 = pneg %p64
        %s467 = sand.u32 %s32, 1
        %s468 = scalar_lea.sflag [#allocation9], %s467
        %s469 = sand.u32 %s80, 1
        %s470 = smul.addr %s469, 8
        %s471 = scalar_lea.vmem [#allocation8], %s470
        %p472 = pneg %p93
        %p473 = pneg %p90
        %p474 = pneg %p114
        %p475 = pneg %p111
        %p476 = pneg %p135
        %p477 = pneg %p132
        %p478 = pneg %p156
        %p479 = pneg %p153
        %p480 = pneg %p177
        %p481 = pneg %p174
        %p482 = pneg %p198
        %p483 = pneg %p195
        %p484 = pneg %p219
        %p485 = pneg %p216
        %p486 = pneg %p240
        %p487 = pneg %p237
        %p488 = pneg %p268
        %p489 = pneg %p265
        %s490 = sand.u32 %s255, 1
        %s491 = scalar_lea.sflag [#allocation7], %s490
        %s492 = sand.u32 %s255, 1
        %s493 = smul.addr %s492, 8
        %s494 = scalar_lea.vmem [#allocation20], %s493
        %p496 = scmp.eq.s32.totalorder %s37, 0
        // Predicated region
        $region93: #{encoder_layer.4} parent=55 // pred_check
          %p497 = pneg %p496
        $region94: #{encoder_layer.4} parent=55 // pred_check_branch
          %499 = sbr.rel (%p497) target = $region96
        $region95: #{encoder_layer.4} parent=55 // pred_region
          %v500 = vld [vmem:[%s427] sm:$0xff]
          %v501 = vpack.c.bf16 %v500, %v500
          %v502 = vld [vmem:[#allocation14] sm:$0xf]
          %v503 = vld [vmem:[#allocation14 + $0x4] sm:$0xf]
          %v504 = vld [vmem:[#allocation14 + $0x8] sm:$0xf]
          %v505 = vld [vmem:[#allocation14 + $0xc] sm:$0xf]
          %v506 = vld [vmem:[#allocation16] sm:$0x1]
          %v508 = vlaneseq
          %v509 = vshrl.u32 %v508, 7
          %v510 = vsub.s32 0, %v509
          %v511 = vrot.slane %v506, %v510
          %v517 = vunpack.c.l.b16 %v502
          %v518 = vunpack.c.l.b16 %v503
          %v519 = vunpack.c.l.b16 %v504
          %v520 = vunpack.c.l.b16 %v505
          %v521 = vpack.c.b16 %v518, %v517
          %v522 = vpack.c.b16 %v520, %v519
          %vm525 = vcmask 261120
          %v527 = vsel %vm525, %v501, 0
          %529 = vmatprep.subr.bf16.mxu0 0
          %530 = vmatpush1.bf16.msra.mxu0 %v521
          %531 = vmatprep.subr.bf16.mxu0 0
          %532 = vmatpush1.bf16.msra.mxu0 %v522
          %533 = vmatprep.subr.bf16.mxu0 0
          %534 = vmatpush1.bf16.msra.mxu0 0
          %535 = vmatprep.subr.bf16.mxu0 0
          %536 = vmatpush1.bf16.msra.mxu0 0
          %537 = vmatprep.subr.bf16.mxu0 0
          %538 = vmatpush1.bf16.msra.mxu0 0
          %539 = vmatprep.subr.bf16.mxu0 0
          %540 = vmatpush1.bf16.msra.mxu0 0
          %541 = vmatprep.subr.bf16.mxu0 0
          %542 = vmatpush1.bf16.msra.mxu0 0
          %543 = vmatprep.subr.bf16.mxu0 0
          %544 = vmatpush1.bf16.msra.mxu0 0
          %545 = vmatprep.subr.bf16.mxu0 0
          %546 = vmatpush1.bf16.msra.mxu0 0
          %547 = vmatprep.subr.bf16.mxu0 0
          %548 = vmatpush1.bf16.msra.mxu0 0
          %549 = vmatprep.subr.bf16.mxu0 0
          %550 = vmatpush1.bf16.msra.mxu0 0
          %551 = vmatprep.subr.bf16.mxu0 0
          %552 = vmatpush1.bf16.msra.mxu0 0
          %553 = vmatprep.subr.bf16.mxu0 0
          %554 = vmatpush1.bf16.msra.mxu0 0
          %555 = vmatprep.subr.bf16.mxu0 0
          %556 = vmatpush1.bf16.msra.mxu0 0
          %557 = vmatprep.subr.bf16.mxu0 0
          %558 = vmatpush1.bf16.msra.mxu0 0
          %559 = vmatprep.subr.bf16.mxu0 0
          %560 = vmatpush1.bf16.msra.mxu0 0
          %561 = vmatprep.mubr.bf16.mxu0 0
          %562 = vmatmul.mubr.bf16.gmra.mrb[0].mxu0 %v527
          %v563 = vpop.f32.mrb[0].mxu0
          %v564 = vadd.f32 %v511, %v563
          %v565 = vpop.f32.mrb[0].mxu0
          %v566 = vpop.f32.mrb[0].mxu0
          %v567 = vpop.f32.mrb[0].mxu0
          %568 = vdwg.mxu0
          %v569 = vpack.c.bf16 %v564, %v564
          %vm570 = vcmask 257024
          %571 = vst.msk [vmem:[#allocation2] sm:$0xf] %vm570, %v569
          %v573 = vunpack.c.l.b16 %v569
          %v574 = vpack.c.b16 %v573, %v573
          %575 = vrot.lane.b32.xlu0 %v574, 96
          %v576 = vpop.permute.xlu0 %575
          %578 = vst.msk [vmem:[#allocation3] sm:$0xf] %vm570, %v576
        $region96: #{encoder_layer.4} parent=55 // pred_fallthru
          _
        %v579 = vld [vmem:[%s418] sm:$0xff]
        %v580 = vld [vmem:[#allocation10] sm:$0x1]
        %v581 = vadd.f32 %v579, 1e-06
        %v582 = vadd.f32 %v581, 1e-06
        %v583 = vmul.f32 %v582, %v582
        %vm584 = vcmask 261120
        %v585 = vsel %vm584, %v583, 0.0
        %586 = vadd.xlane.f32.xlu0 %v585
        %v587 = vpop.xlane.xlu0 %586
        %v588 = vrsqrt.pop %v587
        %v589 = vmul.f32 %v587, %v588
        %vm590 = vcmp.eq.f32.partialorder %v587, inf
        %v591 = vsel %vm590, %v587, %v589
        %vm592 = vcmp.eq.f32.partialorder %v587, 0.0
        %v593 = vand.u32 %v587, 2147483648
        %v594 = vsel %vm592, %v593, %v591
        %v595 = vmul.f32 %v594, 5.656854
        %v596 = vadd.f32 %v595, 1e-06
        %v597 = vrcp.pop %v596
        %v598 = vmul.f32 1.0, %v597
        %v599 = vmul.f32 %v581, %v598
        %v601 = vlaneseq
        %v602 = vshrl.u32 %v601, 7
        %v603 = vsub.s32 0, %v602
        %v604 = vrot.slane %v580, %v603
        %v606 = vmul.f32 %v599, %v604
        %v607 = vpack.c.bf16 %v606, %v606
        %v608 = vld [vmem:[#allocation11] sm:$0xf]
        %v609 = vld [vmem:[#allocation11 + $0x4] sm:$0xf]
        %v610 = vld [vmem:[#allocation11 + $0x8] sm:$0xf]
        %v611 = vld [vmem:[#allocation11 + $0xc] sm:$0xf]
        %v612 = vld [vmem:[#allocation13] sm:$0x1]
        %v614 = vlaneseq
        %v615 = vshrl.u32 %v614, 7
        %v616 = vsub.s32 0, %v615
        %v617 = vrot.slane %v612, %v616
        %v623 = vunpack.c.l.b16 %v608
        %v624 = vunpack.c.l.b16 %v609
        %v625 = vunpack.c.l.b16 %v610
        %v626 = vunpack.c.l.b16 %v611
        %v627 = vpack.c.b16 %v624, %v623
        %v628 = vpack.c.b16 %v626, %v625
        %v632 = vsel %vm584, %v607, 0
        %634 = vmatprep.subr.bf16.mxu0 0
        %635 = vmatpush1.bf16.msra.mxu0 %v627
        %636 = vmatprep.subr.bf16.mxu0 0
        %637 = vmatpush1.bf16.msra.mxu0 %v628
        %638 = vmatprep.subr.bf16.mxu0 0
        %639 = vmatpush1.bf16.msra.mxu0 0
        %640 = vmatprep.subr.bf16.mxu0 0
        %641 = vmatpush1.bf16.msra.mxu0 0
        %642 = vmatprep.subr.bf16.mxu0 0
        %643 = vmatpush1.bf16.msra.mxu0 0
        %644 = vmatprep.subr.bf16.mxu0 0
        %645 = vmatpush1.bf16.msra.mxu0 0
        %646 = vmatprep.subr.bf16.mxu0 0
        %647 = vmatpush1.bf16.msra.mxu0 0
        %648 = vmatprep.subr.bf16.mxu0 0
        %649 = vmatpush1.bf16.msra.mxu0 0
        %650 = vmatprep.subr.bf16.mxu0 0
        %651 = vmatpush1.bf16.msra.mxu0 0
        %652 = vmatprep.subr.bf16.mxu0 0
        %653 = vmatpush1.bf16.msra.mxu0 0
        %654 = vmatprep.subr.bf16.mxu0 0
        %655 = vmatpush1.bf16.msra.mxu0 0
        %656 = vmatprep.subr.bf16.mxu0 0
        %657 = vmatpush1.bf16.msra.mxu0 0
        %658 = vmatprep.subr.bf16.mxu0 0
        %659 = vmatpush1.bf16.msra.mxu0 0
        %660 = vmatprep.subr.bf16.mxu0 0
        %661 = vmatpush1.bf16.msra.mxu0 0
        %662 = vmatprep.subr.bf16.mxu0 0
        %663 = vmatpush1.bf16.msra.mxu0 0
        %664 = vmatprep.subr.bf16.mxu0 0
        %665 = vmatpush1.bf16.msra.mxu0 0
        %666 = vmatprep.mubr.bf16.mxu0 0
        %667 = vmatmul.mubr.bf16.gmra.mrb[0].mxu0 %v632
        %v668 = vpop.f32.mrb[0].mxu0
        %v669 = vadd.f32 %v617, %v668
        %v670 = vpop.f32.mrb[0].mxu0
        %v671 = vpop.f32.mrb[0].mxu0
        %v672 = vpop.f32.mrb[0].mxu0
        %673 = vdwg.mxu0
        %v674 = vpack.c.bf16 %v669, %v669
        %v675 = vld [vmem:[#allocation2] sm:$0xf]
        %v676 = vld [vmem:[#allocation3] sm:$0xf]
        %vm677 = vcmask 64512
        %v679 = vsel %vm677, %v674, 0
        %v682 = vsel %vm677, %v675, 0
        %684 = vmatprep.subr.bf16.mxu0 0
        %685 = vmatpush1.bf16.xpose.msra.mxu0 %v682
        %686 = vmatprep.subr.bf16.mxu0 0
        %687 = vmatpush1.bf16.xpose.msra.mxu0 0
        %688 = vmatprep.subr.bf16.mxu0 0
        %689 = vmatpush1.bf16.xpose.msra.mxu0 0
        %690 = vmatprep.subr.bf16.mxu0 0
        %691 = vmatpush1.bf16.xpose.msra.mxu0 0
        %692 = vmatprep.subr.bf16.mxu0 0
        %693 = vmatpush1.bf16.xpose.msra.mxu0 0
        %694 = vmatprep.subr.bf16.mxu0 0
        %695 = vmatpush1.bf16.xpose.msra.mxu0 0
        %696 = vmatprep.subr.bf16.mxu0 0
        %697 = vmatpush1.bf16.xpose.msra.mxu0 0
        %698 = vmatprep.subr.bf16.mxu0 0
        %699 = vmatpush1.bf16.xpose.msra.mxu0 0
        %700 = vmatprep.subr.bf16.mxu0 0
        %701 = vmatpush1.bf16.xpose.msra.mxu0 0
        %702 = vmatprep.subr.bf16.mxu0 0
        %703 = vmatpush1.bf16.xpose.msra.mxu0 0
        %704 = vmatprep.subr.bf16.mxu0 0
        %705 = vmatpush1.bf16.xpose.msra.mxu0 0
        %706 = vmatprep.subr.bf16.mxu0 0
        %707 = vmatpush1.bf16.xpose.msra.mxu0 0
        %708 = vmatprep.subr.bf16.mxu0 0
        %709 = vmatpush1.bf16.xpose.msra.mxu0 0
        %710 = vmatprep.subr.bf16.mxu0 0
        %711 = vmatpush1.bf16.xpose.msra.mxu0 0
        %712 = vmatprep.subr.bf16.mxu0 0
        %713 = vmatpush1.bf16.xpose.msra.mxu0 0
        %714 = vmatprep.subr.bf16.mxu0 0
        %715 = vmatpush1.bf16.xpose.msra.mxu0 0
        %716 = vmatprep.mubr.bf16.mxu0 0
        %717 = vmatmul.mubr.bf16.gmra.mrb[0].mxu0 %v679
        %v718 = vpop.f32.mrb[0].mxu0
        %v719 = vadd.f32 0.0, %v718
        %v720 = vpop.f32.mrb[0].mxu0
        %v721 = vpop.f32.mrb[0].mxu0
        %v722 = vpop.f32.mrb[0].mxu0
        %723 = vdwg.mxu0
        %v724 = vmul.f32 %v719, 0.35355338
        %v725 = vsel %vm677, %v724, -inf
        %726 = vmax.xlane.f32.xlu0 %v725
        %v727 = vpop.xlane.xlu0 %726
        %v728 = vsub.f32 %v724, %v727
        %v729 = vmul.f32 %v728, 1.442695
        %v730 = vpow.pop %v729
        %v731 = vsel %vm677, %v730, 0.0
        %732 = vadd.xlane.f32.xlu0 %v731
        %v733 = vpop.xlane.xlu0 %732
        %v734 = vrcp.pop %v733
        %v735 = vmul.f32 1.0, %v734
        %v736 = vmul.f32 %v730, %v735
        %v737 = vpack.c.bf16 %v736, %v736
        %v739 = vsel %vm677, %v737, 0
        %vm741 = vcmask 1043456
        %v743 = vsel %vm741, %v676, 0
        %745 = vmatprep.subr.bf16.mxu0 0
        %746 = vmatpush1.bf16.msra.mxu0 %v743
        %747 = vmatprep.subr.bf16.mxu0 0
        %748 = vmatpush1.bf16.msra.mxu0 0
        %749 = vmatprep.subr.bf16.mxu0 0
        %750 = vmatpush1.bf16.msra.mxu0 0
        %751 = vmatprep.subr.bf16.mxu0 0
        %752 = vmatpush1.bf16.msra.mxu0 0
        %753 = vmatprep.subr.bf16.mxu0 0
        %754 = vmatpush1.bf16.msra.mxu0 0
        %755 = vmatprep.subr.bf16.mxu0 0
        %756 = vmatpush1.bf16.msra.mxu0 0
        %757 = vmatprep.subr.bf16.mxu0 0
        %758 = vmatpush1.bf16.msra.mxu0 0
        %759 = vmatprep.subr.bf16.mxu0 0
        %760 = vmatpush1.bf16.msra.mxu0 0
        %761 = vmatprep.subr.bf16.mxu0 0
        %762 = vmatpush1.bf16.msra.mxu0 0
        %763 = vmatprep.subr.bf16.mxu0 0
        %764 = vmatpush1.bf16.msra.mxu0 0
        %765 = vmatprep.subr.bf16.mxu0 0
        %766 = vmatpush1.bf16.msra.mxu0 0
        %767 = vmatprep.subr.bf16.mxu0 0
        %768 = vmatpush1.bf16.msra.mxu0 0
        %769 = vmatprep.subr.bf16.mxu0 0
        %770 = vmatpush1.bf16.msra.mxu0 0
        %771 = vmatprep.subr.bf16.mxu0 0
        %772 = vmatpush1.bf16.msra.mxu0 0
        %773 = vmatprep.subr.bf16.mxu0 0
        %774 = vmatpush1.bf16.msra.mxu0 0
        %775 = vmatprep.subr.bf16.mxu0 0
        %776 = vmatpush1.bf16.msra.mxu0 0
        %777 = vmatprep.mubr.bf16.mxu0 0
        %778 = vmatmul.mubr.bf16.gmra.mrb[0].mxu0 %v739
        %v779 = vpop.f32.mrb[0].mxu0
        %v780 = vadd.f32 0.0, %v779
        %v781 = vpop.f32.mrb[0].mxu0
        %v782 = vpop.f32.mrb[0].mxu0
        %v783 = vpop.f32.mrb[0].mxu0
        %784 = vdwg.mxu0
        %785 = vst.msk [vmem:[#allocation4] sm:$0xff] %vm677, %v780
        %v786 = vld [vmem:[#allocation2] sm:$0xf]
        %v787 = vld [vmem:[#allocation3] sm:$0xf]
        %789 = vrot.lane.b32.xlu0 %v674, 120
        %v790 = vpop.permute.xlu0 %789
        %v792 = vunpack.c.l.b16 %v786
        %v793 = vpack.c.b16 %v792, %v792
        %794 = vrot.lane.b32.xlu0 %v793, 120
        %v795 = vpop.permute.xlu0 %794
        %v797 = vsel %vm677, %v790, 0
        %v800 = vsel %vm677, %v795, 0
        %802 = vmatprep.subr.bf16.mxu0 0
        %803 = vmatpush1.bf16.xpose.msra.mxu0 %v800
        %804 = vmatprep.subr.bf16.mxu0 0
        %805 = vmatpush1.bf16.xpose.msra.mxu0 0
        %806 = vmatprep.subr.bf16.mxu0 0
        %807 = vmatpush1.bf16.xpose.msra.mxu0 0
        %808 = vmatprep.subr.bf16.mxu0 0
        %809 = vmatpush1.bf16.xpose.msra.mxu0 0
        %810 = vmatprep.subr.bf16.mxu0 0
        %811 = vmatpush1.bf16.xpose.msra.mxu0 0
        %812 = vmatprep.subr.bf16.mxu0 0
        %813 = vmatpush1.bf16.xpose.msra.mxu0 0
        %814 = vmatprep.subr.bf16.mxu0 0
        %815 = vmatpush1.bf16.xpose.msra.mxu0 0
        %816 = vmatprep.subr.bf16.mxu0 0
        %817 = vmatpush1.bf16.xpose.msra.mxu0 0
        %818 = vmatprep.subr.bf16.mxu0 0
        %819 = vmatpush1.bf16.xpose.msra.mxu0 0
        %820 = vmatprep.subr.bf16.mxu0 0
        %821 = vmatpush1.bf16.xpose.msra.mxu0 0
        %822 = vmatprep.subr.bf16.mxu0 0
        %823 = vmatpush1.bf16.xpose.msra.mxu0 0
        %824 = vmatprep.subr.bf16.mxu0 0
        %825 = vmatpush1.bf16.xpose.msra.mxu0 0
        %826 = vmatprep.subr.bf16.mxu0 0
        %827 = vmatpush1.bf16.xpose.msra.mxu0 0
        %828 = vmatprep.subr.bf16.mxu0 0
        %829 = vmatpush1.bf16.xpose.msra.mxu0 0
        %830 = vmatprep.subr.bf16.mxu0 0
        %831 = vmatpush1.bf16.xpose.msra.mxu0 0
        %832 = vmatprep.subr.bf16.mxu0 0
        %833 = vmatpush1.bf16.xpose.msra.mxu0 0
        %834 = vmatprep.mubr.bf16.mxu0 0
        %835 = vmatmul.mubr.bf16.gmra.mrb[0].mxu0 %v797
        %v836 = vpop.f32.mrb[0].mxu0
        %v837 = vadd.f32 0.0, %v836
        %v838 = vpop.f32.mrb[0].mxu0
        %v839 = vpop.f32.mrb[0].mxu0
        %v840 = vpop.f32.mrb[0].mxu0
        %841 = vdwg.mxu0
        %v842 = vmul.f32 %v837, 0.35355338
        %v843 = vsel %vm677, %v842, -inf
        %844 = vmax.xlane.f32.xlu0 %v843
        %v845 = vpop.xlane.xlu0 %844
        %v846 = vsub.f32 %v842, %v845
        %v847 = vmul.f32 %v846, 1.442695
        %v848 = vpow.pop %v847
        %v849 = vsel %vm677, %v848, 0.0
        %850 = vadd.xlane.f32.xlu0 %v849
        %v851 = vpop.xlane.xlu0 %850
        %v852 = vrcp.pop %v851
        %v853 = vmul.f32 1.0, %v852
        %v854 = vmul.f32 %v848, %v853
        %v855 = vpack.c.bf16 %v854, %v854
        %v857 = vunpack.c.l.b16 %v787
        %v858 = vpack.c.b16 %v857, %v857
        %859 = vrot.lane.b32.xlu0 %v858, 120
        %v860 = vpop.permute.xlu0 %859
        %v862 = vsel %vm677, %v855, 0
        %v865 = vsel %vm741, %v860, 0
        %867 = vmatprep.subr.bf16.mxu0 0
        %868 = vmatpush1.bf16.msra.mxu0 %v865
        %869 = vmatprep.subr.bf16.mxu0 0
        %870 = vmatpush1.bf16.msra.mxu0 0
        %871 = vmatprep.subr.bf16.mxu0 0
        %872 = vmatpush1.bf16.msra.mxu0 0
        %873 = vmatprep.subr.bf16.mxu0 0
        %874 = vmatpush1.bf16.msra.mxu0 0
        %875 = vmatprep.subr.bf16.mxu0 0
        %876 = vmatpush1.bf16.msra.mxu0 0
        %877 = vmatprep.subr.bf16.mxu0 0
        %878 = vmatpush1.bf16.msra.mxu0 0
        %879 = vmatprep.subr.bf16.mxu0 0
        %880 = vmatpush1.bf16.msra.mxu0 0
        %881 = vmatprep.subr.bf16.mxu0 0
        %882 = vmatpush1.bf16.msra.mxu0 0
        %883 = vmatprep.subr.bf16.mxu0 0
        %884 = vmatpush1.bf16.msra.mxu0 0
        %885 = vmatprep.subr.bf16.mxu0 0
        %886 = vmatpush1.bf16.msra.mxu0 0
        %887 = vmatprep.subr.bf16.mxu0 0
        %888 = vmatpush1.bf16.msra.mxu0 0
        %889 = vmatprep.subr.bf16.mxu0 0
        %890 = vmatpush1.bf16.msra.mxu0 0
        %891 = vmatprep.subr.bf16.mxu0 0
        %892 = vmatpush1.bf16.msra.mxu0 0
        %893 = vmatprep.subr.bf16.mxu0 0
        %894 = vmatpush1.bf16.msra.mxu0 0
        %895 = vmatprep.subr.bf16.mxu0 0
        %896 = vmatpush1.bf16.msra.mxu0 0
        %897 = vmatprep.subr.bf16.mxu0 0
        %898 = vmatpush1.bf16.msra.mxu0 0
        %899 = vmatprep.mubr.bf16.mxu0 0
        %900 = vmatmul.mubr.bf16.gmra.mrb[0].mxu0 %v862
        %v901 = vpop.f32.mrb[0].mxu0
        %v902 = vadd.f32 0.0, %v901
        %v903 = vpop.f32.mrb[0].mxu0
        %v904 = vpop.f32.mrb[0].mxu0
        %v905 = vpop.f32.mrb[0].mxu0
        %906 = vdwg.mxu0
        %908 = vrot.lane.b32.xlu0 %v902, 8
        %v909 = vpop.permute.xlu0 %908
        %vm911 = vcmask 130112
        %912 = vst.msk [vmem:[#allocation4] sm:$0xff] %vm911, %v909
        %v913 = vld [vmem:[#allocation2] sm:$0xf]
        %v914 = vld [vmem:[#allocation3] sm:$0xf]
        %915 = vrot.lane.b32.xlu0 %v674, 112
        %v916 = vpop.permute.xlu0 %915
        %v918 = vunpack.c.l.b16 %v913
        %v919 = vpack.c.b16 %v918, %v918
        %920 = vrot.lane.b32.xlu0 %v919, 112
        %v921 = vpop.permute.xlu0 %920
        %v923 = vsel %vm677, %v916, 0
        %v926 = vsel %vm677, %v921, 0
        %928 = vmatprep.subr.bf16.mxu0 0
        %929 = vmatpush1.bf16.xpose.msra.mxu0 %v926
        %930 = vmatprep.subr.bf16.mxu0 0
        %931 = vmatpush1.bf16.xpose.msra.mxu0 0
        %932 = vmatprep.subr.bf16.mxu0 0
        %933 = vmatpush1.bf16.xpose.msra.mxu0 0
        %934 = vmatprep.subr.bf16.mxu0 0
        %935 = vmatpush1.bf16.xpose.msra.mxu0 0
        %936 = vmatprep.subr.bf16.mxu0 0
        %937 = vmatpush1.bf16.xpose.msra.mxu0 0
        %938 = vmatprep.subr.bf16.mxu0 0
        %939 = vmatpush1.bf16.xpose.msra.mxu0 0
        %940 = vmatprep.subr.bf16.mxu0 0
        %941 = vmatpush1.bf16.xpose.msra.mxu0 0
        %942 = vmatprep.subr.bf16.mxu0 0
        %943 = vmatpush1.bf16.xpose.msra.mxu0 0
        %944 = vmatprep.subr.bf16.mxu0 0
        %945 = vmatpush1.bf16.xpose.msra.mxu0 0
        %946 = vmatprep.subr.bf16.mxu0 0
        %947 = vmatpush1.bf16.xpose.msra.mxu0 0
        %948 = vmatprep.subr.bf16.mxu0 0
        %949 = vmatpush1.bf16.xpose.msra.mxu0 0
        %950 = vmatprep.subr.bf16.mxu0 0
        %951 = vmatpush1.bf16.xpose.msra.mxu0 0
        %952 = vmatprep.subr.bf16.mxu0 0
        %953 = vmatpush1.bf16.xpose.msra.mxu0 0
        %954 = vmatprep.subr.bf16.mxu0 0
        %955 = vmatpush1.bf16.xpose.msra.mxu0 0
        %956 = vmatprep.subr.bf16.mxu0 0
        %957 = vmatpush1.bf16.xpose.msra.mxu0 0
        %958 = vmatprep.subr.bf16.mxu0 0
        %959 = vmatpush1.bf16.xpose.msra.mxu0 0
        %960 = vmatprep.mubr.bf16.mxu0 0
        %961 = vmatmul.mubr.bf16.gmra.mrb[0].mxu0 %v923
        %v962 = vpop.f32.mrb[0].mxu0
        %v963 = vadd.f32 0.0, %v962
        %v964 = vpop.f32.mrb[0].mxu0
        %v965 = vpop.f32.mrb[0].mxu0
        %v966 = vpop.f32.mrb[0].mxu0
        %967 = vdwg.mxu0
        %v968 = vmul.f32 %v963, 0.35355338
        %v969 = vsel %vm677, %v968, -inf
        %970 = vmax.xlane.f32.xlu0 %v969
        %v971 = vpop.xlane.xlu0 %970
        %v972 = vsub.f32 %v968, %v971
        %v973 = vmul.f32 %v972, 1.442695
        %v974 = vpow.pop %v973
        %v975 = vsel %vm677, %v974, 0.0
        %976 = vadd.xlane.f32.xlu0 %v975
        %v977 = vpop.xlane.xlu0 %976
        %v978 = vrcp.pop %v977
        %v979 = vmul.f32 1.0, %v978
        %v980 = vmul.f32 %v974, %v979
        %v981 = vpack.c.bf16 %v980, %v980
        %v983 = vunpack.c.l.b16 %v914
        %v984 = vpack.c.b16 %v983, %v983
        %985 = vrot.lane.b32.xlu0 %v984, 112
        %v986 = vpop.permute.xlu0 %985
        %v988 = vsel %vm677, %v981, 0
        %v991 = vsel %vm741, %v986, 0
        %993 = vmatprep.subr.bf16.mxu0 0
        %994 = vmatpush1.bf16.msra.mxu0 %v991
        %995 = vmatprep.subr.bf16.mxu0 0
        %996 = vmatpush1.bf16.msra.mxu0 0
        %997 = vmatprep.subr.bf16.mxu0 0
        %998 = vmatpush1.bf16.msra.mxu0 0
        %999 = vmatprep.subr.bf16.mxu0 0
        %1000 = vmatpush1.bf16.msra.mxu0 0
        %1001 = vmatprep.subr.bf16.mxu0 0
        %1002 = vmatpush1.bf16.msra.mxu0 0
        %1003 = vmatprep.subr.bf16.mxu0 0
        %1004 = vmatpush1.bf16.msra.mxu0 0
        %1005 = vmatprep.subr.bf16.mxu0 0
        %1006 = vmatpush1.bf16.msra.mxu0 0
        %1007 = vmatprep.subr.bf16.mxu0 0
        %1008 = vmatpush1.bf16.msra.mxu0 0
        %1009 = vmatprep.subr.bf16.mxu0 0
        %1010 = vmatpush1.bf16.msra.mxu0 0
        %1011 = vmatprep.subr.bf16.mxu0 0
        %1012 = vmatpush1.bf16.msra.mxu0 0
        %1013 = vmatprep.subr.bf16.mxu0 0
        %1014 = vmatpush1.bf16.msra.mxu0 0
        %1015 = vmatprep.subr.bf16.mxu0 0
        %1016 = vmatpush1.bf16.msra.mxu0 0
        %1017 = vmatprep.subr.bf16.mxu0 0
        %1018 = vmatpush1.bf16.msra.mxu0 0
        %1019 = vmatprep.subr.bf16.mxu0 0
        %1020 = vmatpush1.bf16.msra.mxu0 0
        %1021 = vmatprep.subr.bf16.mxu0 0
        %1022 = vmatpush1.bf16.msra.mxu0 0
        %1023 = vmatprep.subr.bf16.mxu0 0
        %1024 = vmatpush1.bf16.msra.mxu0 0
        %1025 = vmatprep.mubr.bf16.mxu0 0
        %1026 = vmatmul.mubr.bf16.gmra.mrb[0].mxu0 %v988
        %v1027 = vpop.f32.mrb[0].mxu0
        %v1028 = vadd.f32 0.0, %v1027
        %v1029 = vpop.f32.mrb[0].mxu0
        %v1030 = vpop.f32.mrb[0].mxu0
        %v1031 = vpop.f32.mrb[0].mxu0
        %1032 = vdwg.mxu0
        %1034 = vrot.lane.b32.xlu0 %v1028, 16
        %v1035 = vpop.permute.xlu0 %1034
        %vm1037 = vcmask 195712
        %1038 = vst.msk [vmem:[#allocation4] sm:$0xff] %vm1037, %v1035
        %v1039 = vld [vmem:[#allocation2] sm:$0xf]
        %v1040 = vld [vmem:[#allocation3] sm:$0xf]
        %1041 = vrot.lane.b32.xlu0 %v674, 104
        %v1042 = vpop.permute.xlu0 %1041
        %v1044 = vunpack.c.l.b16 %v1039
        %v1045 = vpack.c.b16 %v1044, %v1044
        %1046 = vrot.lane.b32.xlu0 %v1045, 104
        %v1047 = vpop.permute.xlu0 %1046
        %v1049 = vsel %vm677, %v1042, 0
        %v1052 = vsel %vm677, %v1047, 0
        %1054 = vmatprep.subr.bf16.mxu0 0
        %1055 = vmatpush1.bf16.xpose.msra.mxu0 %v1052
        %1056 = vmatprep.subr.bf16.mxu0 0
        %1057 = vmatpush1.bf16.xpose.msra.mxu0 0
        %1058 = vmatprep.subr.bf16.mxu0 0
        %1059 = vmatpush1.bf16.xpose.msra.mxu0 0
        %1060 = vmatprep.subr.bf16.mxu0 0
        %1061 = vmatpush1.bf16.xpose.msra.mxu0 0
        %1062 = vmatprep.subr.bf16.mxu0 0
        %1063 = vmatpush1.bf16.xpose.msra.mxu0 0
        %1064 = vmatprep.subr.bf16.mxu0 0
        %1065 = vmatpush1.bf16.xpose.msra.mxu0 0
        %1066 = vmatprep.subr.bf16.mxu0 0
        %1067 = vmatpush1.bf16.xpose.msra.mxu0 0
        %1068 = vmatprep.subr.bf16.mxu0 0
        %1069 = vmatpush1.bf16.xpose.msra.mxu0 0
        %1070 = vmatprep.subr.bf16.mxu0 0
        %1071 = vmatpush1.bf16.xpose.msra.mxu0 0
        %1072 = vmatprep.subr.bf16.mxu0 0
        %1073 = vmatpush1.bf16.xpose.msra.mxu0 0
        %1074 = vmatprep.subr.bf16.mxu0 0
        %1075 = vmatpush1.bf16.xpose.msra.mxu0 0
        %1076 = vmatprep.subr.bf16.mxu0 0
        %1077 = vmatpush1.bf16.xpose.msra.mxu0 0
        %1078 = vmatprep.subr.bf16.mxu0 0
        %1079 = vmatpush1.bf16.xpose.msra.mxu0 0
        %1080 = vmatprep.subr.bf16.mxu0 0
        %1081 = vmatpush1.bf16.xpose.msra.mxu0 0
        %1082 = vmatprep.subr.bf16.mxu0 0
        %1083 = vmatpush1.bf16.xpose.msra.mxu0 0
        %1084 = vmatprep.subr.bf16.mxu0 0
        %1085 = vmatpush1.bf16.xpose.msra.mxu0 0
        %1086 = vmatprep.mubr.bf16.mxu0 0
        %1087 = vmatmul.mubr.bf16.gmra.mrb[0].mxu0 %v1049
        %v1088 = vpop.f32.mrb[0].mxu0
        %v1089 = vadd.f32 0.0, %v1088
        %v1090 = vpop.f32.mrb[0].mxu0
        %v1091 = vpop.f32.mrb[0].mxu0
        %v1092 = vpop.f32.mrb[0].mxu0
        %1093 = vdwg.mxu0
        %v1094 = vmul.f32 %v1089, 0.35355338
        %v1095 = vsel %vm677, %v1094, -inf
        %1096 = vmax.xlane.f32.xlu0 %v1095
        %v1097 = vpop.xlane.xlu0 %1096
        %v1098 = vsub.f32 %v1094, %v1097
        %v1099 = vmul.f32 %v1098, 1.442695
        %v1100 = vpow.pop %v1099
        %v1101 = vsel %vm677, %v1100, 0.0
        %1102 = vadd.xlane.f32.xlu0 %v1101
        %v1103 = vpop.xlane.xlu0 %1102
        %v1104 = vrcp.pop %v1103
        %v1105 = vmul.f32 1.0, %v1104
        %v1106 = vmul.f32 %v1100, %v1105
        %v1107 = vpack.c.bf16 %v1106, %v1106
        %v1109 = vunpack.c.l.b16 %v1040
        %v1110 = vpack.c.b16 %v1109, %v1109
        %1111 = vrot.lane.b32.xlu0 %v1110, 104
        %v1112 = vpop.permute.xlu0 %1111
        %v1114 = vsel %vm677, %v1107, 0
        %v1117 = vsel %vm741, %v1112, 0
        %1119 = vmatprep.subr.bf16.mxu0 0
        %1120 = vmatpush1.bf16.msra.mxu0 %v1117
        %1121 = vmatprep.subr.bf16.mxu0 0
        %1122 = vmatpush1.bf16.msra.mxu0 0
        %1123 = vmatprep.subr.bf16.mxu0 0
        %1124 = vmatpush1.bf16.msra.mxu0 0
        %1125 = vmatprep.subr.bf16.mxu0 0
        %1126 = vmatpush1.bf16.msra.mxu0 0
        %1127 = vmatprep.subr.bf16.mxu0 0
        %1128 = vmatpush1.bf16.msra.mxu0 0
        %1129 = vmatprep.subr.bf16.mxu0 0
        %1130 = vmatpush1.bf16.msra.mxu0 0
        %1131 = vmatprep.subr.bf16.mxu0 0
        %1132 = vmatpush1.bf16.msra.mxu0 0
        %1133 = vmatprep.subr.bf16.mxu0 0
        %1134 = vmatpush1.bf16.msra.mxu0 0
        %1135 = vmatprep.subr.bf16.mxu0 0
        %1136 = vmatpush1.bf16.msra.mxu0 0
        %1137 = vmatprep.subr.bf16.mxu0 0
        %1138 = vmatpush1.bf16.msra.mxu0 0
        %1139 = vmatprep.subr.bf16.mxu0 0
        %1140 = vmatpush1.bf16.msra.mxu0 0
        %1141 = vmatprep.subr.bf16.mxu0 0
        %1142 = vmatpush1.bf16.msra.mxu0 0
        %1143 = vmatprep.subr.bf16.mxu0 0
        %1144 = vmatpush1.bf16.msra.mxu0 0
        %1145 = vmatprep.subr.bf16.mxu0 0
        %1146 = vmatpush1.bf16.msra.mxu0 0
        %1147 = vmatprep.subr.bf16.mxu0 0
        %1148 = vmatpush1.bf16.msra.mxu0 0
        %1149 = vmatprep.subr.bf16.mxu0 0
        %1150 = vmatpush1.bf16.msra.mxu0 0
        %1151 = vmatprep.mubr.bf16.mxu0 0
        %1152 = vmatmul.mubr.bf16.gmra.mrb[0].mxu0 %v1114
        %v1153 = vpop.f32.mrb[0].mxu0
        %v1154 = vadd.f32 0.0, %v1153
        %v1155 = vpop.f32.mrb[0].mxu0
        %v1156 = vpop.f32.mrb[0].mxu0
        %v1157 = vpop.f32.mrb[0].mxu0
        %1158 = vdwg.mxu0
        %1160 = vrot.lane.b32.xlu0 %v1154, 24
        %v1161 = vpop.permute.xlu0 %1160
        %vm1163 = vcmask 261312
        %1164 = vst.msk [vmem:[#allocation4] sm:$0xff] %vm1163, %v1161
        %v1165 = vld [vmem:[#allocation4] sm:$0xff]
        %v1166 = vpack.c.bf16 %v1165, %v1165
        %v1167 = vld [vmem:[#allocation17] sm:$0xf]
        %v1168 = vld [vmem:[#allocation17 + $0x4] sm:$0xf]
        %v1169 = vld [vmem:[#allocation17 + $0x8] sm:$0xf]
        %v1170 = vld [vmem:[#allocation17 + $0xc] sm:$0xf]
        %v1171 = vld [vmem:[#allocation19] sm:$0x1]
        %v1173 = vlaneseq
        %v1174 = vshrl.u32 %v1173, 7
        %v1175 = vsub.s32 0, %v1174
        %v1176 = vrot.slane %v1171, %v1175
        %v1182 = vunpack.c.l.b16 %v1167
        %v1183 = vunpack.c.l.b16 %v1168
        %v1184 = vunpack.c.l.b16 %v1169
        %v1185 = vunpack.c.l.b16 %v1170
        %v1186 = vpack.c.b16 %v1183, %v1182
        %v1187 = vpack.c.b16 %v1185, %v1184
        %v1191 = vsel %vm584, %v1166, 0
        %1193 = vmatprep.subr.bf16.mxu0 0
        %1194 = vmatpush1.bf16.msra.mxu0 %v1186
        %1195 = vmatprep.subr.bf16.mxu0 0
        %1196 = vmatpush1.bf16.msra.mxu0 %v1187
        %1197 = vmatprep.subr.bf16.mxu0 0
        %1198 = vmatpush1.bf16.msra.mxu0 0
        %1199 = vmatprep.subr.bf16.mxu0 0
        %1200 = vmatpush1.bf16.msra.mxu0 0
        %1201 = vmatprep.subr.bf16.mxu0 0
        %1202 = vmatpush1.bf16.msra.mxu0 0
        %1203 = vmatprep.subr.bf16.mxu0 0
        %1204 = vmatpush1.bf16.msra.mxu0 0
        %1205 = vmatprep.subr.bf16.mxu0 0
        %1206 = vmatpush1.bf16.msra.mxu0 0
        %1207 = vmatprep.subr.bf16.mxu0 0
        %1208 = vmatpush1.bf16.msra.mxu0 0
        %1209 = vmatprep.subr.bf16.mxu0 0
        %1210 = vmatpush1.bf16.msra.mxu0 0
        %1211 = vmatprep.subr.bf16.mxu0 0
        %1212 = vmatpush1.bf16.msra.mxu0 0
        %1213 = vmatprep.subr.bf16.mxu0 0
        %1214 = vmatpush1.bf16.msra.mxu0 0
        %1215 = vmatprep.subr.bf16.mxu0 0
        %1216 = vmatpush1.bf16.msra.mxu0 0
        %1217 = vmatprep.subr.bf16.mxu0 0
        %1218 = vmatpush1.bf16.msra.mxu0 0
        %1219 = vmatprep.subr.bf16.mxu0 0
        %1220 = vmatpush1.bf16.msra.mxu0 0
        %1221 = vmatprep.subr.bf16.mxu0 0
        %1222 = vmatpush1.bf16.msra.mxu0 0
        %1223 = vmatprep.subr.bf16.mxu0 0
        %1224 = vmatpush1.bf16.msra.mxu0 0
        %1225 = vmatprep.mubr.bf16.mxu0 0
        %1226 = vmatmul.mubr.bf16.gmra.mrb[0].mxu0 %v1191
        %v1227 = vpop.f32.mrb[0].mxu0
        %v1228 = vadd.f32 %v1176, %v1227
        %v1229 = vpop.f32.mrb[0].mxu0
        %v1230 = vpop.f32.mrb[0].mxu0
        %v1231 = vpop.f32.mrb[0].mxu0
        %1232 = vdwg.mxu0
        %v1233 = vadd.f32 %v579, %v1228
        %1234 = vst.msk [vmem:[%s494] sm:$0xff] %vm584, %v1233
        %s1235 = sand.u32 %s255, 1
        %s1236 = scalar_lea.sflag [#allocation7], %s1235
        %s1237 = sand.u32 %s255, 1
        %s1238 = smul.addr %s1237, 8
        %s1239 = scalar_lea.vmem [#allocation20], %s1238
        // Predicated region
        $region97: #{encoder_layer.4} parent=55 // pred_check
          %p1240 = pneg %p265
        $region98: #{encoder_layer.4} parent=55 // pred_check_branch
          %1242 = sbr.rel (%p1240) target = $region100
        $region99: #{encoder_layer.4} parent=55 // pred_region
          %s1244 = ssub.s32 128, 128
          %1245 = vsyncadd %s1236, %s1244
          %s1246 = sadd.s32 %s37, %s36
          %s1247 = smul.addr %s1246, 128
          %s1248 = scalar_lea.hbm %s9, %s1247
          %s1250 = sshll.u32 %s1239, 4
          %s1251 = int_to_ptr.vmem [resolvable:$true] %s1250
          %1253 = dma.vmem_to_hbm [thread:$0]  %s1251, 128, %s1248, %s1236
        $region100: #{encoder_layer.4} parent=55 // pred_fallthru
          _
      $region56: #{encoder_layer.4} parent=5 // pred_fallthru
        _
      %p1254 = scmp.le.s32.totalorder 2, %s27
      // Predicated region
      $region101: #{encoder_layer.4} parent=5 // pred_check
        %p1255 = pneg %p1254
      $region102: #{encoder_layer.4} parent=5 // pred_check_branch
        %1257 = sbr.rel (%p1255) target = $region104
      $region103: #{encoder_layer.4} parent=5 // pred_region
        %s1258 = ssub.s32 %s27, 2
        // Predicated region
        $region105: #{encoder_layer.4} parent=103 // pred_check
          %p1259 = pneg %p271
        $region106: #{encoder_layer.4} parent=103 // pred_check_branch
          %1261 = sbr.rel (%p1259) target = $region108
        $region107: #{encoder_layer.4} parent=103 // pred_region
          %s1262 = sand.u32 %s256, 1
          %s1263 = scalar_lea.sflag [#allocation7], %s1262
          %s1264 = sand.u32 %s256, 1
          %s1265 = smul.addr %s1264, 8
          %s1266 = scalar_lea.vmem [#allocation20], %s1265
          %1267 = dma.done %s1263, 128
        $region108: #{encoder_layer.4} parent=103 // pred_fallthru
          _
      $region104: #{encoder_layer.4} parent=5 // pred_fallthru
        _
    $region6: #{encoder_layer.4} parent=1 // loop_footer
      %s31 = sadd.s32 1, %s27
    $region7: #{encoder_layer.4} parent=1 // loop_footer_branch
      %26 = sbr.rel target = $region3
    $region8: #{encoder_layer.4} parent=1 // loop_exit
      _
    %1268 = vsyncpa [#allocation6], 1
    %s1269 = scalar_lea.sflag [#allocation6], 1
    %1270 = vsyncpa %s1269, 1
    %1271 = vsyncpa [#allocation9], 1
    %s1272 = scalar_lea.sflag [#allocation9], 1
    %1273 = vsyncpa %s1272, 1
    %1274 = vsyncpa [#allocation12], 1
    %1275 = vsyncpa [#allocation15], 1
    %1276 = vsyncpa [#allocation18], 1
    %1277 = vsyncpa [#allocation7], 1
    %s1278 = scalar_lea.sflag [#allocation7], 1
    %1279 = vsyncpa %s1278, 1

// kernel: encoder_layer.3
$region0: #{encoder_layer.3}
  #allocation0 [shape = 'u32[]', space=smem, size = 0x4, offset = 0x4, fixed_abs, tag = 'smem constant byte address 0x4 - core index']
  #allocation1 [shape = 'u32[144,128]{1,0:T(1,128)}', space=vmem, size = 0x12000, scoped, tag = 'internal scratch']
  #allocation2 [shape = 'bf16[8,32]{1,0:T(8,128)(2,1)}', space=vmem, size = 0x800, scoped, tag = 'scratch operand']
  #allocation3 [shape = 'bf16[8,32]{1,0:T(8,128)(2,1)}', space=vmem, size = 0x800, scoped, tag = 'scratch operand']
  #allocation4 [shape = 'bf16[8,32]{1,0:T(8,128)(2,1)}', space=vmem, size = 0x800, scoped, tag = 'scratch operand']
  #allocation5 [shape = 'f32[8,16]{1,0:T(8,128)}', space=vmem, size = 0x1000, scoped, tag = 'scratch operand']
  %s0 = inlined_call_operand.hbm [shape: f32[2,8,32], index: 0, kind: input, shape index: {}]
  %s1 = inlined_call_operand.hbm [shape: f32[1,32], index: 1, kind: input, shape index: {}]
  %s2 = inlined_call_operand.hbm [shape: bf16[32,96], index: 2, kind: input, shape index: {}]
  %s3 = inlined_call_operand.hbm [shape: f32[1,96], index: 3, kind: input, shape index: {}]
  %s4 = inlined_call_operand.hbm [shape: f32[8,32], index: 4, kind: input, shape index: {}]
  %s5 = inlined_call_operand.hbm [shape: f32[8,32], index: 5, kind: input, shape index: {}]
  %s6 = inlined_call_operand.hbm [shape: f32[1,16], index: 6, kind: input, shape index: {}]
  %s7 = inlined_call_operand.hbm [shape: f32[16,2], index: 7, kind: input, shape index: {}]
  %s8 = inlined_call_operand.hbm [shape: f32[2,16], index: 8, kind: input, shape index: {}]
  %s9 = inlined_call_operand.hbm [shape: bf16[16,32], index: 9, kind: input, shape index: {}]
  %s10 = inlined_call_operand.hbm [shape: f32[1,32], index: 10, kind: input, shape index: {}]
  %s11 = inlined_call_operand.hbm [shape: f32[2,8,32], index: 11, kind: output, shape index: {}]
  %s12 = sld [smem:[#allocation0]]
  $region125: #{encoder_layer.3} parent=0
    _
  %s14 = ssub.s32 1, %s12
  %s15 = scalar_select 0, %s14, %s12
  $region1: #{encoder_layer.3} parent=0
    #allocation6 [shape = 'u8[8192]{0}', space=vmem, size = 0x2000, scoped, tag = 'input window, operand 0']
    #allocation7 [shape = 's32[2]{0}', space=sflag, size = 0x8, scoped, tag = 'scoped memory for encoder_layer.3']
    #allocation8 [shape = 's32[2]{0}', space=sflag, size = 0x8, scoped, tag = 'scoped memory for encoder_layer.3']
    #allocation9 [shape = 'u8[512]{0}', space=vmem, size = 0x400, scoped, tag = 'input window, operand 1, single buffered']
    #allocation10 [shape = 's32[1]{0}', space=sflag, size = 0x4, scoped, tag = 'scoped memory for encoder_layer.3']
    #allocation11 [shape = 'u8[8192]{0}', space=vmem, size = 0x2000, scoped, tag = 'input window, operand 2, single buffered']
    #allocation12 [shape = 'u8[512]{0}', space=vmem, size = 0x400, scoped, tag = 'input window, operand 3, single buffered']
    #allocation13 [shape = 's32[1]{0}', space=sflag, size = 0x4, scoped, tag = 'scoped memory for encoder_layer.3']
    #allocation14 [shape = 'u8[4096]{0}', space=vmem, size = 0x1000, scoped, tag = 'input window, operand 4, single buffered']
    #allocation15 [shape = 'u8[4096]{0}', space=vmem, size = 0x1000, scoped, tag = 'input window, operand 5, single buffered']
    #allocation16 [shape = 's32[1]{0}', space=sflag, size = 0x4, scoped, tag = 'scoped memory for encoder_layer.3']
    #allocation17 [shape = 'u8[512]{0}', space=vmem, size = 0x400, scoped, tag = 'input window, operand 6, single buffered']
    #allocation18 [shape = 'u8[8192]{0}', space=vmem, size = 0x2000, scoped, tag = 'input window, operand 7, single buffered']
    #allocation19 [shape = 's32[1]{0}', space=sflag, size = 0x4, scoped, tag = 'scoped memory for encoder_layer.3']
    #allocation20 [shape = 'u8[1024]{0}', space=vmem, size = 0x400, scoped, tag = 'input window, operand 8, single buffered']
    #allocation21 [shape = 'u8[4096]{0}', space=vmem, size = 0x1000, scoped, tag = 'input window, operand 9, single buffered']
    #allocation22 [shape = 's32[1]{0}', space=sflag, size = 0x4, scoped, tag = 'scoped memory for encoder_layer.3']
    #allocation23 [shape = 'u8[512]{0}', space=vmem, size = 0x400, scoped, tag = 'input window, operand 10, single buffered']
    #allocation24 [shape = 'u8[8192]{0}', space=vmem, size = 0x2000, scoped, tag = 'output window, operand 0']
    %16 = vsyncpa [#allocation7], 0
    %s17 = scalar_lea.sflag [#allocation7], 1
    %18 = vsyncpa %s17, 0
    %19 = vsyncpa [#allocation10], 0
    %20 = vsyncpa [#allocation13], 0
    %21 = vsyncpa [#allocation16], 0
    %22 = vsyncpa [#allocation19], 0
    %23 = vsyncpa [#allocation22], 0
    %24 = vsyncpa [#allocation8], 0
    %s25 = scalar_lea.sflag [#allocation8], 1
    %26 = vsyncpa %s25, 0
    loop: start=0, step=1, limit=4
    $region2: #{encoder_layer.3} parent=1 // loop_pre_header
      _
    $region3: #{encoder_layer.3} parent=1 // loop_header
      %s28 = sphi 0, %s32
      %p29 = scmp.ge.s32.totalorder %s28, 4
      %s35 = sphi 0, %s47
      %s36 = sphi 0, %s43
      %s37 = sphi 0, %s35
      %s38 = sphi 0, %s36
      %s39 = sphi 0, %s37
      %s40 = sphi 0, %s38
      %s50 = sphi 0, %s52
      %s53 = sphi 0, %s50
      %s54 = sphi 0, %s53
      %s70 = sphi 0, %s54
      %s74 = sphi 0, %s74
      %s76 = sphi 0, %s74
      %s77 = sphi 0, %s76
      %s91 = sphi 0, %s77
      %s95 = sphi 0, %s95
      %s97 = sphi 0, %s95
      %s98 = sphi 0, %s97
      %s112 = sphi 0, %s98
      %s116 = sphi 0, %s116
      %s118 = sphi 0, %s116
      %s119 = sphi 0, %s118
      %s133 = sphi 0, %s119
      %s137 = sphi 0, %s137
      %s139 = sphi 0, %s137
      %s140 = sphi 0, %s139
      %s154 = sphi 0, %s140
      %s158 = sphi 0, %s158
      %s160 = sphi 0, %s158
      %s161 = sphi 0, %s160
      %s175 = sphi 0, %s161
      %s179 = sphi 0, %s179
      %s181 = sphi 0, %s179
      %s182 = sphi 0, %s181
      %s196 = sphi 0, %s182
      %s200 = sphi 0, %s200
      %s202 = sphi 0, %s200
      %s203 = sphi 0, %s202
      %s217 = sphi 0, %s203
      %s221 = sphi 0, %s221
      %s223 = sphi 0, %s221
      %s224 = sphi 0, %s223
      %s238 = sphi 0, %s224
      %s242 = sphi 0, %s242
      %s244 = sphi 0, %s242
      %s245 = sphi 0, %s244
      %s259 = sphi 0, %s245
      %s263 = sphi 0, %s263
      %s265 = sphi 0, %s263
      %s266 = sphi 0, %s265
      %s280 = sphi 0, %s266
      %s288 = sphi 0, %s290
      %s291 = sphi 0, %s288
      %s292 = sphi 0, %s291
      %s308 = sphi 0, %s292
    $region4: #{encoder_layer.3} parent=1 // loop_header_branch
      %31 = sbr.rel (%p29) target = $region8
    $region5: #{encoder_layer.3} parent=1 // loop_body
      %s33 = ssub.s32 %s28, 1
      %s34 = ssub.s32 %s28, 2
      %s41 = sadd.s32 1, %s36
      %p42 = scmp.ge.s32.totalorder %s41, 1
      %s43 = scalar_select %p42, 0, %s41
      %s44 = sadd.s32 1, %s35
      %s45 = scalar_select %p42, %s44, %s35
      %p46 = scmp.ge.s32.totalorder %s45, 2
      %s47 = scalar_select %p46, 0, %s45
      %s48 = ssub.s32 %s35, %s47
      %p49 = scmp.eq.s32.totalorder %s48, 0
      %s51 = sadd.s32 %s50, 1
      %s52 = scalar_select %p49, %s50, %s51
      %p55 = pneg %p49
      %p56 = scmp.eq.s32.totalorder %s28, 1
      %p57 = por %p55, %p56
      %p58 = scmp.ne.s32.totalorder %s50, %s53
      %p59 = scmp.eq.s32.totalorder %s28, 0
      %p60 = por %p58, %p59
      %p61 = scmp.ne.s32.totalorder %s50, %s53
      %p62 = scmp.eq.s32.totalorder %s33, 1
      %p63 = por %p61, %p62
      %p64 = scmp.ne.s32.totalorder %s53, %s54
      %p65 = scmp.eq.s32.totalorder %s33, 0
      %p66 = por %p64, %p65
      %p67 = scmp.ne.s32.totalorder %s53, %s54
      %p68 = scmp.eq.s32.totalorder %s34, 1
      %p69 = por %p67, %p68
      %p71 = scmp.ne.s32.totalorder %s54, %s70
      %p72 = scmp.eq.s32.totalorder %s34, 0
      %p73 = por %p71, %p72
      %s75 = sadd.s32 %s74, 1
      %p78 = scmp.eq.s32.totalorder %s28, 1
      %p79 = scmp.ne.s32.totalorder %s74, %s76
      %p80 = scmp.eq.s32.totalorder %s28, 0
      %p81 = por %p79, %p80
      %p82 = scmp.ne.s32.totalorder %s74, %s76
      %p83 = scmp.eq.s32.totalorder %s33, 1
      %p84 = por %p82, %p83
      %p85 = scmp.ne.s32.totalorder %s76, %s77
      %p86 = scmp.eq.s32.totalorder %s33, 0
      %p87 = por %p85, %p86
      %p88 = scmp.ne.s32.totalorder %s76, %s77
      %p89 = scmp.eq.s32.totalorder %s34, 1
      %p90 = por %p88, %p89
      %p92 = scmp.ne.s32.totalorder %s77, %s91
      %p93 = scmp.eq.s32.totalorder %s34, 0
      %p94 = por %p92, %p93
      %s96 = sadd.s32 %s95, 1
      %p99 = scmp.eq.s32.totalorder %s28, 1
      %p100 = scmp.ne.s32.totalorder %s95, %s97
      %p101 = scmp.eq.s32.totalorder %s28, 0
      %p102 = por %p100, %p101
      %p103 = scmp.ne.s32.totalorder %s95, %s97
      %p104 = scmp.eq.s32.totalorder %s33, 1
      %p105 = por %p103, %p104
      %p106 = scmp.ne.s32.totalorder %s97, %s98
      %p107 = scmp.eq.s32.totalorder %s33, 0
      %p108 = por %p106, %p107
      %p109 = scmp.ne.s32.totalorder %s97, %s98
      %p110 = scmp.eq.s32.totalorder %s34, 1
      %p111 = por %p109, %p110
      %p113 = scmp.ne.s32.totalorder %s98, %s112
      %p114 = scmp.eq.s32.totalorder %s34, 0
      %p115 = por %p113, %p114
      %s117 = sadd.s32 %s116, 1
      %p120 = scmp.eq.s32.totalorder %s28, 1
      %p121 = scmp.ne.s32.totalorder %s116, %s118
      %p122 = scmp.eq.s32.totalorder %s28, 0
      %p123 = por %p121, %p122
      %p124 = scmp.ne.s32.totalorder %s116, %s118
      %p125 = scmp.eq.s32.totalorder %s33, 1
      %p126 = por %p124, %p125
      %p127 = scmp.ne.s32.totalorder %s118, %s119
      %p128 = scmp.eq.s32.totalorder %s33, 0
      %p129 = por %p127, %p128
      %p130 = scmp.ne.s32.totalorder %s118, %s119
      %p131 = scmp.eq.s32.totalorder %s34, 1
      %p132 = por %p130, %p131
      %p134 = scmp.ne.s32.totalorder %s119, %s133
      %p135 = scmp.eq.s32.totalorder %s34, 0
      %p136 = por %p134, %p135
      %s138 = sadd.s32 %s137, 1
      %p141 = scmp.eq.s32.totalorder %s28, 1
      %p142 = scmp.ne.s32.totalorder %s137, %s139
      %p143 = scmp.eq.s32.totalorder %s28, 0
      %p144 = por %p142, %p143
      %p145 = scmp.ne.s32.totalorder %s137, %s139
      %p146 = scmp.eq.s32.totalorder %s33, 1
      %p147 = por %p145, %p146
      %p148 = scmp.ne.s32.totalorder %s139, %s140
      %p149 = scmp.eq.s32.totalorder %s33, 0
      %p150 = por %p148, %p149
      %p151 = scmp.ne.s32.totalorder %s139, %s140
      %p152 = scmp.eq.s32.totalorder %s34, 1
      %p153 = por %p151, %p152
      %p155 = scmp.ne.s32.totalorder %s140, %s154
      %p156 = scmp.eq.s32.totalorder %s34, 0
      %p157 = por %p155, %p156
      %s159 = sadd.s32 %s158, 1
      %p162 = scmp.eq.s32.totalorder %s28, 1
      %p163 = scmp.ne.s32.totalorder %s158, %s160
      %p164 = scmp.eq.s32.totalorder %s28, 0
      %p165 = por %p163, %p164
      %p166 = scmp.ne.s32.totalorder %s158, %s160
      %p167 = scmp.eq.s32.totalorder %s33, 1
      %p168 = por %p166, %p167
      %p169 = scmp.ne.s32.totalorder %s160, %s161
      %p170 = scmp.eq.s32.totalorder %s33, 0
      %p171 = por %p169, %p170
      %p172 = scmp.ne.s32.totalorder %s160, %s161
      %p173 = scmp.eq.s32.totalorder %s34, 1
      %p174 = por %p172, %p173
      %p176 = scmp.ne.s32.totalorder %s161, %s175
      %p177 = scmp.eq.s32.totalorder %s34, 0
      %p178 = por %p176, %p177
      %s180 = sadd.s32 %s179, 1
      %p183 = scmp.eq.s32.totalorder %s28, 1
      %p184 = scmp.ne.s32.totalorder %s179, %s181
      %p185 = scmp.eq.s32.totalorder %s28, 0
      %p186 = por %p184, %p185
      %p187 = scmp.ne.s32.totalorder %s179, %s181
      %p188 = scmp.eq.s32.totalorder %s33, 1
      %p189 = por %p187, %p188
      %p190 = scmp.ne.s32.totalorder %s181, %s182
      %p191 = scmp.eq.s32.totalorder %s33, 0
      %p192 = por %p190, %p191
      %p193 = scmp.ne.s32.totalorder %s181, %s182
      %p194 = scmp.eq.s32.totalorder %s34, 1
      %p195 = por %p193, %p194
      %p197 = scmp.ne.s32.totalorder %s182, %s196
      %p198 = scmp.eq.s32.totalorder %s34, 0
      %p199 = por %p197, %p198
      %s201 = sadd.s32 %s200, 1
      %p204 = scmp.eq.s32.totalorder %s28, 1
      %p205 = scmp.ne.s32.totalorder %s200, %s202
      %p206 = scmp.eq.s32.totalorder %s28, 0
      %p207 = por %p205, %p206
      %p208 = scmp.ne.s32.totalorder %s200, %s202
      %p209 = scmp.eq.s32.totalorder %s33, 1
      %p210 = por %p208, %p209
      %p211 = scmp.ne.s32.totalorder %s202, %s203
      %p212 = scmp.eq.s32.totalorder %s33, 0
      %p213 = por %p211, %p212
      %p214 = scmp.ne.s32.totalorder %s202, %s203
      %p215 = scmp.eq.s32.totalorder %s34, 1
      %p216 = por %p214, %p215
      %p218 = scmp.ne.s32.totalorder %s203, %s217
      %p219 = scmp.eq.s32.totalorder %s34, 0
      %p220 = por %p218, %p219
      %s222 = sadd.s32 %s221, 1
      %p225 = scmp.eq.s32.totalorder %s28, 1
      %p226 = scmp.ne.s32.totalorder %s221, %s223
      %p227 = scmp.eq.s32.totalorder %s28, 0
      %p228 = por %p226, %p227
      %p229 = scmp.ne.s32.totalorder %s221, %s223
      %p230 = scmp.eq.s32.totalorder %s33, 1
      %p231 = por %p229, %p230
      %p232 = scmp.ne.s32.totalorder %s223, %s224
      %p233 = scmp.eq.s32.totalorder %s33, 0
      %p234 = por %p232, %p233
      %p235 = scmp.ne.s32.totalorder %s223, %s224
      %p236 = scmp.eq.s32.totalorder %s34, 1
      %p237 = por %p235, %p236
      %p239 = scmp.ne.s32.totalorder %s224, %s238
      %p240 = scmp.eq.s32.totalorder %s34, 0
      %p241 = por %p239, %p240
      %s243 = sadd.s32 %s242, 1
      %p246 = scmp.eq.s32.totalorder %s28, 1
      %p247 = scmp.ne.s32.totalorder %s242, %s244
      %p248 = scmp.eq.s32.totalorder %s28, 0
      %p249 = por %p247, %p248
      %p250 = scmp.ne.s32.totalorder %s242, %s244
      %p251 = scmp.eq.s32.totalorder %s33, 1
      %p252 = por %p250, %p251
      %p253 = scmp.ne.s32.totalorder %s244, %s245
      %p254 = scmp.eq.s32.totalorder %s33, 0
      %p255 = por %p253, %p254
      %p256 = scmp.ne.s32.totalorder %s244, %s245
      %p257 = scmp.eq.s32.totalorder %s34, 1
      %p258 = por %p256, %p257
      %p260 = scmp.ne.s32.totalorder %s245, %s259
      %p261 = scmp.eq.s32.totalorder %s34, 0
      %p262 = por %p260, %p261
      %s264 = sadd.s32 %s263, 1
      %p267 = scmp.eq.s32.totalorder %s28, 1
      %p268 = scmp.ne.s32.totalorder %s263, %s265
      %p269 = scmp.eq.s32.totalorder %s28, 0
      %p270 = por %p268, %p269
      %p271 = scmp.ne.s32.totalorder %s263, %s265
      %p272 = scmp.eq.s32.totalorder %s33, 1
      %p273 = por %p271, %p272
      %p274 = scmp.ne.s32.totalorder %s265, %s266
      %p275 = scmp.eq.s32.totalorder %s33, 0
      %p276 = por %p274, %p275
      %p277 = scmp.ne.s32.totalorder %s265, %s266
      %p278 = scmp.eq.s32.totalorder %s34, 1
      %p279 = por %p277, %p278
      %p281 = scmp.ne.s32.totalorder %s266, %s280
      %p282 = scmp.eq.s32.totalorder %s34, 0
      %p283 = por %p281, %p282
      %s284 = ssub.s32 %s35, %s47
      %s285 = ssub.s32 %s36, %s43
      %s286 = sor.u32 %s284, %s285
      %p287 = scmp.eq.s32.totalorder %s286, 0
      %s289 = sadd.s32 %s288, 1
      %s290 = scalar_select %p287, %s288, %s289
      %p293 = pneg %p287
      %p294 = scmp.eq.s32.totalorder %s28, 1
      %p295 = por %p293, %p294
      %p296 = scmp.ne.s32.totalorder %s288, %s291
      %p297 = scmp.eq.s32.totalorder %s28, 0
      %p298 = por %p296, %p297
      %p299 = scmp.ne.s32.totalorder %s288, %s291
      %p300 = scmp.eq.s32.totalorder %s33, 1
      %p301 = por %p299, %p300
      %p302 = scmp.ne.s32.totalorder %s291, %s292
      %p303 = scmp.eq.s32.totalorder %s33, 0
      %p304 = por %p302, %p303
      %p305 = scmp.ne.s32.totalorder %s291, %s292
      %p306 = scmp.eq.s32.totalorder %s34, 1
      %p307 = por %p305, %p306
      %p309 = scmp.ne.s32.totalorder %s292, %s308
      %p310 = scmp.eq.s32.totalorder %s34, 0
      %p311 = por %p309, %p310
      %p312 = scmp.le.s32.totalorder 1, %s28
      %p313 = scmp.lt.s32.totalorder %s28, 3
      %p314 = pnand %p312, %p313
      %p315 = pneg %p314
      // Predicated region
      $region9: #{encoder_layer.3} parent=5 // pred_check
        _
      $region10: #{encoder_layer.3} parent=5 // pred_check_branch
        %317 = sbr.rel (%p314) target = $region12
      $region11: #{encoder_layer.3} parent=5 // pred_region
        %s318 = ssub.s32 %s28, 1
        // Predicated region
        $region13: #{encoder_layer.3} parent=11 // pred_check
          %p319 = pneg %p87
        $region14: #{encoder_layer.3} parent=11 // pred_check_branch
          %321 = sbr.rel (%p319) target = $region16
        $region15: #{encoder_layer.3} parent=11 // pred_region
          %s323 = ssub.s32 16, 16
          %324 = vsyncadd [#allocation10], %s323
          %s326 = sshll.u32 [#allocation9], 4
          %s327 = int_to_ptr.vmem [resolvable:$true] %s326
          %329 = dma.hbm_to_vmem [thread:$0]  %s1, 16, %s327, [#allocation10]
        $region16: #{encoder_layer.3} parent=11 // pred_fallthru
          _
        // Predicated region
        $region17: #{encoder_layer.3} parent=11 // pred_check
          %p330 = pneg %p108
        $region18: #{encoder_layer.3} parent=11 // pred_check_branch
          %332 = sbr.rel (%p330) target = $region20
        $region19: #{encoder_layer.3} parent=11 // pred_region
          %s334 = ssub.s32 256, 256
          %335 = vsyncadd [#allocation10], %s334
          %s336 = sshll.u32 [#allocation11], 4
          %s337 = int_to_ptr.vmem [resolvable:$true] %s336
          %342 = dma.hbm_to_vmem [thread:$0]  %s2, 256, %s337, [#allocation10], 64, 64, 4
        $region20: #{encoder_layer.3} parent=11 // pred_fallthru
          _
        // Predicated region
        $region21: #{encoder_layer.3} parent=11 // pred_check
          %p343 = pneg %p129
        $region22: #{encoder_layer.3} parent=11 // pred_check_branch
          %345 = sbr.rel (%p343) target = $region24
        $region23: #{encoder_layer.3} parent=11 // pred_region
          %s347 = ssub.s32 16, 16
          %348 = vsyncadd [#allocation13], %s347
          %s350 = sshll.u32 [#allocation12], 4
          %s351 = int_to_ptr.vmem [resolvable:$true] %s350
          %353 = dma.hbm_to_vmem [thread:$0]  %s3, 16, %s351, [#allocation13]
        $region24: #{encoder_layer.3} parent=11 // pred_fallthru
          _
        // Predicated region
        $region25: #{encoder_layer.3} parent=11 // pred_check
          %p354 = pneg %p150
        $region26: #{encoder_layer.3} parent=11 // pred_check_branch
          %356 = sbr.rel (%p354) target = $region28
        $region27: #{encoder_layer.3} parent=11 // pred_region
          %s358 = ssub.s32 128, 128
          %359 = vsyncadd [#allocation13], %s358
          %s361 = sshll.u32 [#allocation14], 4
          %s362 = int_to_ptr.vmem [resolvable:$true] %s361
          %364 = dma.hbm_to_vmem [thread:$0]  %s4, 128, %s362, [#allocation13]
        $region28: #{encoder_layer.3} parent=11 // pred_fallthru
          _
        // Predicated region
        $region29: #{encoder_layer.3} parent=11 // pred_check
          %p365 = pneg %p171
        $region30: #{encoder_layer.3} parent=11 // pred_check_branch
          %367 = sbr.rel (%p365) target = $region32
        $region31: #{encoder_layer.3} parent=11 // pred_region
          %s369 = ssub.s32 128, 128
          %370 = vsyncadd [#allocation16], %s369
          %s372 = sshll.u32 [#allocation15], 4
          %s373 = int_to_ptr.vmem [resolvable:$true] %s372
          %375 = dma.hbm_to_vmem [thread:$0]  %s5, 128, %s373, [#allocation16]
        $region32: #{encoder_layer.3} parent=11 // pred_fallthru
          _
        // Predicated region
        $region33: #{encoder_layer.3} parent=11 // pred_check
          %p376 = pneg %p192
        $region34: #{encoder_layer.3} parent=11 // pred_check_branch
          %378 = sbr.rel (%p376) target = $region36
        $region35: #{encoder_layer.3} parent=11 // pred_region
          %s380 = ssub.s32 16, 16
          %381 = vsyncadd [#allocation16], %s380
          %s383 = sshll.u32 [#allocation17], 4
          %s384 = int_to_ptr.vmem [resolvable:$true] %s383
          %386 = dma.hbm_to_vmem [thread:$0]  %s6, 16, %s384, [#allocation16]
        $region36: #{encoder_layer.3} parent=11 // pred_fallthru
          _
        // Predicated region
        $region37: #{encoder_layer.3} parent=11 // pred_check
          %p387 = pneg %p213
        $region38: #{encoder_layer.3} parent=11 // pred_check_branch
          %389 = sbr.rel (%p387) target = $region40
        $region39: #{encoder_layer.3} parent=11 // pred_region
          %s391 = ssub.s32 256, 256
          %392 = vsyncadd [#allocation19], %s391
          %s393 = sshll.u32 [#allocation18], 4
          %s394 = int_to_ptr.vmem [resolvable:$true] %s393
          %399 = dma.hbm_to_vmem [thread:$0]  %s7, 256, %s394, [#allocation19], 128, 128, 8
        $region40: #{encoder_layer.3} parent=11 // pred_fallthru
          _
        // Predicated region
        $region41: #{encoder_layer.3} parent=11 // pred_check
          %p400 = pneg %p234
        $region42: #{encoder_layer.3} parent=11 // pred_check_branch
          %402 = sbr.rel (%p400) target = $region44
        $region43: #{encoder_layer.3} parent=11 // pred_region
          %s404 = ssub.s32 32, 32
          %405 = vsyncadd [#allocation19], %s404
          %s407 = sshll.u32 [#allocation20], 4
          %s408 = int_to_ptr.vmem [resolvable:$true] %s407
          %410 = dma.hbm_to_vmem [thread:$0]  %s8, 32, %s408, [#allocation19]
        $region44: #{encoder_layer.3} parent=11 // pred_fallthru
          _
        // Predicated region
        $region45: #{encoder_layer.3} parent=11 // pred_check
          %p411 = pneg %p255
        $region46: #{encoder_layer.3} parent=11 // pred_check_branch
          %413 = sbr.rel (%p411) target = $region48
        $region47: #{encoder_layer.3} parent=11 // pred_region
          %s415 = ssub.s32 128, 128
          %416 = vsyncadd [#allocation22], %s415
          %s417 = sshll.u32 [#allocation21], 4
          %s418 = int_to_ptr.vmem [resolvable:$true] %s417
          %423 = dma.hbm_to_vmem [thread:$0]  %s9, 128, %s418, [#allocation22], 64, 64, 4
        $region48: #{encoder_layer.3} parent=11 // pred_fallthru
          _
        // Predicated region
        $region49: #{encoder_layer.3} parent=11 // pred_check
          %p424 = pneg %p276
        $region50: #{encoder_layer.3} parent=11 // pred_check_branch
          %426 = sbr.rel (%p424) target = $region52
        $region51: #{encoder_layer.3} parent=11 // pred_region
          %s428 = ssub.s32 16, 16
          %429 = vsyncadd [#allocation22], %s428
          %s431 = sshll.u32 [#allocation23], 4
          %s432 = int_to_ptr.vmem [resolvable:$true] %s431
          %434 = dma.hbm_to_vmem [thread:$0]  %s10, 16, %s432, [#allocation22]
        $region52: #{encoder_layer.3} parent=11 // pred_fallthru
          _
      $region12: #{encoder_layer.3} parent=5 // pred_fallthru
        _
      %p435 = scmp.lt.s32.totalorder %s28, 2
      // Predicated region
      $region53: #{encoder_layer.3} parent=5 // pred_check
        %p436 = pneg %p435
      $region54: #{encoder_layer.3} parent=5 // pred_check_branch
        %438 = sbr.rel (%p436) target = $region56
      $region55: #{encoder_layer.3} parent=5 // pred_region
        // Predicated region
        $region57: #{encoder_layer.3} parent=55 // pred_check
          %p439 = pneg %p60
        $region58: #{encoder_layer.3} parent=55 // pred_check_branch
          %441 = sbr.rel (%p439) target = $region60
        $region59: #{encoder_layer.3} parent=55 // pred_region
          %s442 = sand.u32 %s50, 1
          %s443 = scalar_lea.sflag [#allocation7], %s442
          %s444 = sand.u32 %s50, 1
          %s445 = smul.addr %s444, 8
          %s446 = scalar_lea.vmem [#allocation6], %s445
          %s448 = ssub.s32 128, 128
          %449 = vsyncadd %s443, %s448
          %s450 = smul.addr %s35, 128
          %s451 = scalar_lea.hbm %s0, %s450
          %s453 = sshll.u32 %s446, 4
          %s454 = int_to_ptr.vmem [resolvable:$true] %s453
          %456 = dma.hbm_to_vmem [thread:$0]  %s451, 128, %s454, %s443
        $region60: #{encoder_layer.3} parent=55 // pred_fallthru
          _
      $region56: #{encoder_layer.3} parent=5 // pred_fallthru
        _
      %p457 = scmp.le.s32.totalorder 1, %s28
      %p458 = scmp.lt.s32.totalorder %s28, 3
      %p459 = pnand %p457, %p458
      %p460 = pneg %p459
      // Predicated region
      $region61: #{encoder_layer.3} parent=5 // pred_check
        _
      $region62: #{encoder_layer.3} parent=5 // pred_check_branch
        %462 = sbr.rel (%p459) target = $region64
      $region63: #{encoder_layer.3} parent=5 // pred_region
        %s463 = ssub.s32 %s28, 1
        %s464 = sand.u32 %s53, 1
        %s465 = scalar_lea.sflag [#allocation7], %s464
        %s466 = sand.u32 %s53, 1
        %s467 = smul.addr %s466, 8
        %s468 = scalar_lea.vmem [#allocation6], %s467
        // Predicated region
        $region65: #{encoder_layer.3} parent=63 // pred_check
          %p469 = pneg %p66
        $region66: #{encoder_layer.3} parent=63 // pred_check_branch
          %471 = sbr.rel (%p469) target = $region68
        $region67: #{encoder_layer.3} parent=63 // pred_region
          %472 = dma.done %s465, 128
        $region68: #{encoder_layer.3} parent=63 // pred_fallthru
          _
        // Predicated region
        $region69: #{encoder_layer.3} parent=63 // pred_check
          %p473 = pneg %p87
        $region70: #{encoder_layer.3} parent=63 // pred_check_branch
          %475 = sbr.rel (%p473) target = $region72
        $region71: #{encoder_layer.3} parent=63 // pred_region
          %476 = dma.done [#allocation10], 16
        $region72: #{encoder_layer.3} parent=63 // pred_fallthru
          _
        // Predicated region
        $region73: #{encoder_layer.3} parent=63 // pred_check
          %p477 = pneg %p108
        $region74: #{encoder_layer.3} parent=63 // pred_check_branch
          %479 = sbr.rel (%p477) target = $region76
        $region75: #{encoder_layer.3} parent=63 // pred_region
          %480 = dma.done [#allocation10], 256
        $region76: #{encoder_layer.3} parent=63 // pred_fallthru
          _
        // Predicated region
        $region77: #{encoder_layer.3} parent=63 // pred_check
          %p481 = pneg %p129
        $region78: #{encoder_layer.3} parent=63 // pred_check_branch
          %483 = sbr.rel (%p481) target = $region80
        $region79: #{encoder_layer.3} parent=63 // pred_region
          %484 = dma.done [#allocation13], 16
        $region80: #{encoder_layer.3} parent=63 // pred_fallthru
          _
        // Predicated region
        $region81: #{encoder_layer.3} parent=63 // pred_check
          %p485 = pneg %p150
        $region82: #{encoder_layer.3} parent=63 // pred_check_branch
          %487 = sbr.rel (%p485) target = $region84
        $region83: #{encoder_layer.3} parent=63 // pred_region
          %488 = dma.done [#allocation13], 128
        $region84: #{encoder_layer.3} parent=63 // pred_fallthru
          _
        // Predicated region
        $region85: #{encoder_layer.3} parent=63 // pred_check
          %p489 = pneg %p171
        $region86: #{encoder_layer.3} parent=63 // pred_check_branch
          %491 = sbr.rel (%p489) target = $region88
        $region87: #{encoder_layer.3} parent=63 // pred_region
          %492 = dma.done [#allocation16], 128
        $region88: #{encoder_layer.3} parent=63 // pred_fallthru
          _
        // Predicated region
        $region89: #{encoder_layer.3} parent=63 // pred_check
          %p493 = pneg %p192
        $region90: #{encoder_layer.3} parent=63 // pred_check_branch
          %495 = sbr.rel (%p493) target = $region92
        $region91: #{encoder_layer.3} parent=63 // pred_region
          %496 = dma.done [#allocation16], 16
        $region92: #{encoder_layer.3} parent=63 // pred_fallthru
          _
        // Predicated region
        $region93: #{encoder_layer.3} parent=63 // pred_check
          %p497 = pneg %p213
        $region94: #{encoder_layer.3} parent=63 // pred_check_branch
          %499 = sbr.rel (%p497) target = $region96
        $region95: #{encoder_layer.3} parent=63 // pred_region
          %500 = dma.done [#allocation19], 256
        $region96: #{encoder_layer.3} parent=63 // pred_fallthru
          _
        // Predicated region
        $region97: #{encoder_layer.3} parent=63 // pred_check
          %p501 = pneg %p234
        $region98: #{encoder_layer.3} parent=63 // pred_check_branch
          %503 = sbr.rel (%p501) target = $region100
        $region99: #{encoder_layer.3} parent=63 // pred_region
          %504 = dma.done [#allocation19], 32
        $region100: #{encoder_layer.3} parent=63 // pred_fallthru
          _
        // Predicated region
        $region101: #{encoder_layer.3} parent=63 // pred_check
          %p505 = pneg %p255
        $region102: #{encoder_layer.3} parent=63 // pred_check_branch
          %507 = sbr.rel (%p505) target = $region104
        $region103: #{encoder_layer.3} parent=63 // pred_region
          %508 = dma.done [#allocation22], 128
        $region104: #{encoder_layer.3} parent=63 // pred_fallthru
          _
        // Predicated region
        $region105: #{encoder_layer.3} parent=63 // pred_check
          %p509 = pneg %p276
        $region106: #{encoder_layer.3} parent=63 // pred_check_branch
          %511 = sbr.rel (%p509) target = $region108
        $region107: #{encoder_layer.3} parent=63 // pred_region
          %512 = dma.done [#allocation22], 16
        $region108: #{encoder_layer.3} parent=63 // pred_fallthru
          _
        %s513 = sand.u32 %s53, 1
        %s514 = scalar_lea.sflag [#allocation7], %s513
        %s515 = sand.u32 %s53, 1
        %s516 = smul.addr %s515, 8
        %s517 = scalar_lea.vmem [#allocation6], %s516
        %p518 = pneg %p66
        %p519 = pneg %p63
        %p520 = pneg %p87
        %p521 = pneg %p84
        %p522 = pneg %p108
        %p523 = pneg %p105
        %p524 = pneg %p129
        %p525 = pneg %p126
        %p526 = pneg %p150
        %p527 = pneg %p147
        %p528 = pneg %p171
        %p529 = pneg %p168
        %p530 = pneg %p192
        %p531 = pneg %p189
        %p532 = pneg %p213
        %p533 = pneg %p210
        %p534 = pneg %p234
        %p535 = pneg %p231
        %p536 = pneg %p255
        %p537 = pneg %p252
        %p538 = pneg %p276
        %p539 = pneg %p273
        %p540 = pneg %p304
        %p541 = pneg %p301
        %s542 = sand.u32 %s291, 1
        %s543 = scalar_lea.sflag [#allocation8], %s542
        %s544 = sand.u32 %s291, 1
        %s545 = smul.addr %s544, 8
        %s546 = scalar_lea.vmem [#allocation24], %s545
        %p548 = scmp.eq.s32.totalorder %s38, 0
        // Predicated region
        $region109: #{encoder_layer.3} parent=63 // pred_check
          %p549 = pneg %p548
        $region110: #{encoder_layer.3} parent=63 // pred_check_branch
          %551 = sbr.rel (%p549) target = $region112
        $region111: #{encoder_layer.3} parent=63 // pred_region
          %v552 = vld [vmem:[%s468] sm:$0xff]
          %v553 = vld [vmem:[#allocation9] sm:$0x1]
          %v554 = vadd.f32 %v552, 1e-06
          %v555 = vadd.f32 %v554, 1e-06
          %v556 = vmul.f32 %v555, %v555
          %vm557 = vcmask 261120
          %v558 = vsel %vm557, %v556, 0.0
          %559 = vadd.xlane.f32.xlu0 %v558
          %v560 = vpop.xlane.xlu0 %559
          %v561 = vrsqrt.pop %v560
          %v562 = vmul.f32 %v560, %v561
          %vm563 = vcmp.eq.f32.partialorder %v560, inf
          %v564 = vsel %vm563, %v560, %v562
          %vm565 = vcmp.eq.f32.partialorder %v560, 0.0
          %v566 = vand.u32 %v560, 2147483648
          %v567 = vsel %vm565, %v566, %v564
          %v568 = vmul.f32 %v567, 5.656854
          %v569 = vadd.f32 %v568, 1e-06
          %v570 = vrcp.pop %v569
          %v571 = vmul.f32 1.0, %v570
          %v572 = vmul.f32 %v554, %v571
          %v574 = vlaneseq
          %v575 = vshrl.u32 %v574, 7
          %v576 = vsub.s32 0, %v575
          %v577 = vrot.slane %v553, %v576
          %v579 = vmul.f32 %v572, %v577
          %v580 = vpack.c.bf16 %v579, %v579
          %v581 = vld [vmem:[#allocation11] sm:$0xf]
          %v582 = vld [vmem:[#allocation11 + $0x4] sm:$0xf]
          %v583 = vld [vmem:[#allocation11 + $0x8] sm:$0xf]
          %v584 = vld [vmem:[#allocation11 + $0xc] sm:$0xf]
          %v585 = vld [vmem:[#allocation12] sm:$0x1]
          %v587 = vlaneseq
          %v588 = vshrl.u32 %v587, 7
          %v589 = vsub.s32 0, %v588
          %v590 = vrot.slane %v585, %v589
          %v596 = vunpack.c.l.b16 %v581
          %v597 = vunpack.c.l.b16 %v582
          %v598 = vunpack.c.l.b16 %v583
          %v599 = vunpack.c.l.b16 %v584
          %v600 = vpack.c.b16 %v597, %v596
          %v601 = vpack.c.b16 %v599, %v598
          %v605 = vsel %vm557, %v580, 0
          %607 = vmatprep.subr.bf16.mxu0 0
          %608 = vmatpush1.bf16.msra.mxu0 %v600
          %609 = vmatprep.subr.bf16.mxu0 0
          %610 = vmatpush1.bf16.msra.mxu0 %v601
          %611 = vmatprep.subr.bf16.mxu0 0
          %612 = vmatpush1.bf16.msra.mxu0 0
          %613 = vmatprep.subr.bf16.mxu0 0
          %614 = vmatpush1.bf16.msra.mxu0 0
          %615 = vmatprep.subr.bf16.mxu0 0
          %616 = vmatpush1.bf16.msra.mxu0 0
          %617 = vmatprep.subr.bf16.mxu0 0
          %618 = vmatpush1.bf16.msra.mxu0 0
          %619 = vmatprep.subr.bf16.mxu0 0
          %620 = vmatpush1.bf16.msra.mxu0 0
          %621 = vmatprep.subr.bf16.mxu0 0
          %622 = vmatpush1.bf16.msra.mxu0 0
          %623 = vmatprep.subr.bf16.mxu0 0
          %624 = vmatpush1.bf16.msra.mxu0 0
          %625 = vmatprep.subr.bf16.mxu0 0
          %626 = vmatpush1.bf16.msra.mxu0 0
          %627 = vmatprep.subr.bf16.mxu0 0
          %628 = vmatpush1.bf16.msra.mxu0 0
          %629 = vmatprep.subr.bf16.mxu0 0
          %630 = vmatpush1.bf16.msra.mxu0 0
          %631 = vmatprep.subr.bf16.mxu0 0
          %632 = vmatpush1.bf16.msra.mxu0 0
          %633 = vmatprep.subr.bf16.mxu0 0
          %634 = vmatpush1.bf16.msra.mxu0 0
          %635 = vmatprep.subr.bf16.mxu0 0
          %636 = vmatpush1.bf16.msra.mxu0 0
          %637 = vmatprep.subr.bf16.mxu0 0
          %638 = vmatpush1.bf16.msra.mxu0 0
          %639 = vmatprep.mubr.bf16.mxu0 0
          %640 = vmatmul.mubr.bf16.gmra.mrb[0].mxu0 %v605
          %v641 = vpop.f32.mrb[0].mxu0
          %v642 = vadd.f32 %v590, %v641
          %v643 = vpop.f32.mrb[0].mxu0
          %v644 = vpop.f32.mrb[0].mxu0
          %v645 = vpop.f32.mrb[0].mxu0
          %646 = vdwg.mxu0
          %v647 = vlaneseq
          %v648 = vand.u32 %v647, 127
          %vm649 = vcmp.lt.s32.totalorder %v648, 0
          %v650 = vsub.s32 0, %v648
          %v651 = vsel %vm649, %v650, %v648
          %v652 = vshrl.u32 %v651, 3
          %v653 = vand.u32 %v651, 7
          %v654 = vsub.s32 0, %v653
          %v655 = vsel %vm649, %v654, %v653
          %vm656 = vcmp.ne.s32.totalorder %v655, 0
          %vm657 = vcmp.lt.s32.totalorder %v655, 0
          %vm658 = vmand %vm657, %vm656
          %v659 = vadd.s32 %v655, 8
          %v660 = vsel %vm658, %v659, %v655
          %vm661 = vcmp.lt.s32.totalorder %v660, 4
          %v662 = vld [vmem:[#allocation14] sm:$0xff]
          %v663 = vld [vmem:[#allocation15] sm:$0xff]
          %vm664 = vcmask 1047808
          %665 = vrot.lane.b32.xlu0 %v642, 32
          %v666 = vpop.permute.xlu0 %665
          %v667 = vsel %vm664, %v666, %v642
          %668 = vrot.lane.b32.xlu0 %v667, 32
          %v669 = vpop.permute.xlu0 %668
          %v670 = vsel %vm664, %v669, %v642
          %672 = vrot.lane.b32.xlu0 %v670, 124
          %v673 = vpop.permute.xlu0 %672
          %675 = vrot.lane.b32.xlu0 %v670, 100
          %v676 = vpop.permute.xlu0 %675
          %v678 = vsel %vm661, %v673, %v676
          %v679 = vmul.f32 %v642, %v662
          %v680 = vmul.f32 %v678, %v663
          %v681 = vadd.f32 %v679, %v680
          %v682 = vpack.c.bf16 %v681, %v681
          %vm683 = vcmask 257024
          %684 = vst.msk [vmem:[#allocation2] sm:$0xf] %vm683, %v682
          %686 = vrot.lane.b32.xlu0 %v642, 96
          %v687 = vpop.permute.xlu0 %686
          %689 = vrot.lane.b32.xlu0 %v687, 32
          %v690 = vpop.permute.xlu0 %689
          %v691 = vsel %vm664, %v690, %v687
          %692 = vrot.lane.b32.xlu0 %v691, 32
          %v693 = vpop.permute.xlu0 %692
          %v694 = vsel %vm664, %v693, %v687
          %696 = vrot.lane.b32.xlu0 %v694, 124
          %v697 = vpop.permute.xlu0 %696
          %699 = vrot.lane.b32.xlu0 %v694, 100
          %v700 = vpop.permute.xlu0 %699
          %v702 = vsel %vm661, %v697, %v700
          %704 = vrot.lane.b32.xlu0 %v662, 32
          %v705 = vpop.permute.xlu0 %704
          %v707 = vmul.f32 %v642, %v705
          %v708 = vmul.f32 %v702, %v663
          %710 = vrot.lane.b32.xlu0 %v708, 32
          %v711 = vpop.permute.xlu0 %710
          %v713 = vadd.f32 %v707, %v711
          %v714 = vpack.c.bf16 %v713, %v713
          %v716 = vunpack.c.l.b16 %v714
          %v717 = vpack.c.b16 %v716, %v716
          %718 = vrot.lane.b32.xlu0 %v717, 96
          %v719 = vpop.permute.xlu0 %718
          %721 = vst.msk [vmem:[#allocation3] sm:$0xf] %vm683, %v719
          %v722 = vpack.c.bf16 %v642, %v642
          %v724 = vunpack.c.l.b16 %v722
          %v725 = vpack.c.b16 %v724, %v724
          %726 = vrot.lane.b32.xlu0 %v725, 64
          %v727 = vpop.permute.xlu0 %726
          %729 = vst.msk [vmem:[#allocation4] sm:$0xf] %vm683, %v727
        $region112: #{encoder_layer.3} parent=63 // pred_fallthru
          _
        %s730 = smul.u32 %s38, 8
        %v731 = vld [vmem:[#allocation17] sm:$0x1]
        %s732 = sshra.s32 %s730, 3
        %s733 = sand.u32 %s730, 7
        %s734 = smul.addr %s732, 4
        %s735 = scalar_lea.vmem [#allocation2], %s734
        %v736 = vld [vmem:[%s735] sm:$0xf]
        %v737 = vld [vmem:[#allocation3] sm:$0xf]
        %v738 = vld [vmem:[#allocation4] sm:$0xf]
        %vm739 = vcmask 64512
        %v741 = vsel %vm739, %v736, 0
        %v744 = vsel %vm739, %v737, 0
        %746 = vmatprep.subr.bf16.mxu0 0
        %747 = vmatpush1.bf16.xpose.msra.mxu0 %v744
        %748 = vmatprep.subr.bf16.mxu0 0
        %749 = vmatpush1.bf16.xpose.msra.mxu0 0
        %750 = vmatprep.subr.bf16.mxu0 0
        %751 = vmatpush1.bf16.xpose.msra.mxu0 0
        %752 = vmatprep.subr.bf16.mxu0 0
        %753 = vmatpush1.bf16.xpose.msra.mxu0 0
        %754 = vmatprep.subr.bf16.mxu0 0
        %755 = vmatpush1.bf16.xpose.msra.mxu0 0
        %756 = vmatprep.subr.bf16.mxu0 0
        %757 = vmatpush1.bf16.xpose.msra.mxu0 0
        %758 = vmatprep.subr.bf16.mxu0 0
        %759 = vmatpush1.bf16.xpose.msra.mxu0 0
        %760 = vmatprep.subr.bf16.mxu0 0
        %761 = vmatpush1.bf16.xpose.msra.mxu0 0
        %762 = vmatprep.subr.bf16.mxu0 0
        %763 = vmatpush1.bf16.xpose.msra.mxu0 0
        %764 = vmatprep.subr.bf16.mxu0 0
        %765 = vmatpush1.bf16.xpose.msra.mxu0 0
        %766 = vmatprep.subr.bf16.mxu0 0
        %767 = vmatpush1.bf16.xpose.msra.mxu0 0
        %768 = vmatprep.subr.bf16.mxu0 0
        %769 = vmatpush1.bf16.xpose.msra.mxu0 0
        %770 = vmatprep.subr.bf16.mxu0 0
        %771 = vmatpush1.bf16.xpose.msra.mxu0 0
        %772 = vmatprep.subr.bf16.mxu0 0
        %773 = vmatpush1.bf16.xpose.msra.mxu0 0
        %774 = vmatprep.subr.bf16.mxu0 0
        %775 = vmatpush1.bf16.xpose.msra.mxu0 0
        %776 = vmatprep.subr.bf16.mxu0 0
        %777 = vmatpush1.bf16.xpose.msra.mxu0 0
        %778 = vmatprep.mubr.bf16.mxu0 0
        %779 = vmatmul.mubr.bf16.gmra.mrb[0].mxu0 %v741
        %v780 = vpop.f32.mrb[0].mxu0
        %v781 = vadd.f32 0.0, %v780
        %v782 = vpop.f32.mrb[0].mxu0
        %v783 = vpop.f32.mrb[0].mxu0
        %v784 = vpop.f32.mrb[0].mxu0
        %785 = vdwg.mxu0
        %v786 = vmul.f32 %v781, 0.35355338
        %v787 = vsel %vm739, %v786, -inf
        %788 = vmax.xlane.f32.xlu0 %v787
        %v789 = vpop.xlane.xlu0 %788
        %v790 = vsub.f32 %v786, %v789
        %v791 = vmul.f32 %v790, 1.442695
        %v792 = vpow.pop %v791
        %v793 = vsel %vm739, %v792, 0.0
        %794 = vadd.xlane.f32.xlu0 %v793
        %v795 = vpop.xlane.xlu0 %794
        %v796 = vrcp.pop %v795
        %v797 = vmul.f32 1.0, %v796
        %v798 = vmul.f32 %v792, %v797
        %v799 = vpack.c.bf16 %v798, %v798
        %v801 = vsel %vm739, %v799, 0
        %vm803 = vcmask 1043456
        %v805 = vsel %vm803, %v738, 0
        %807 = vmatprep.subr.bf16.mxu0 0
        %808 = vmatpush1.bf16.msra.mxu0 %v805
        %809 = vmatprep.subr.bf16.mxu0 0
        %810 = vmatpush1.bf16.msra.mxu0 0
        %811 = vmatprep.subr.bf16.mxu0 0
        %812 = vmatpush1.bf16.msra.mxu0 0
        %813 = vmatprep.subr.bf16.mxu0 0
        %814 = vmatpush1.bf16.msra.mxu0 0
        %815 = vmatprep.subr.bf16.mxu0 0
        %816 = vmatpush1.bf16.msra.mxu0 0
        %817 = vmatprep.subr.bf16.mxu0 0
        %818 = vmatpush1.bf16.msra.mxu0 0
        %819 = vmatprep.subr.bf16.mxu0 0
        %820 = vmatpush1.bf16.msra.mxu0 0
        %821 = vmatprep.subr.bf16.mxu0 0
        %822 = vmatpush1.bf16.msra.mxu0 0
        %823 = vmatprep.subr.bf16.mxu0 0
        %824 = vmatpush1.bf16.msra.mxu0 0
        %825 = vmatprep.subr.bf16.mxu0 0
        %826 = vmatpush1.bf16.msra.mxu0 0
        %827 = vmatprep.subr.bf16.mxu0 0
        %828 = vmatpush1.bf16.msra.mxu0 0
        %829 = vmatprep.subr.bf16.mxu0 0
        %830 = vmatpush1.bf16.msra.mxu0 0
        %831 = vmatprep.subr.bf16.mxu0 0
        %832 = vmatpush1.bf16.msra.mxu0 0
        %833 = vmatprep.subr.bf16.mxu0 0
        %834 = vmatpush1.bf16.msra.mxu0 0
        %835 = vmatprep.subr.bf16.mxu0 0
        %836 = vmatpush1.bf16.msra.mxu0 0
        %837 = vmatprep.subr.bf16.mxu0 0
        %838 = vmatpush1.bf16.msra.mxu0 0
        %839 = vmatprep.mubr.bf16.mxu0 0
        %840 = vmatmul.mubr.bf16.gmra.mrb[0].mxu0 %v801
        %v841 = vpop.f32.mrb[0].mxu0
        %v842 = vadd.f32 0.0, %v841
        %v843 = vpop.f32.mrb[0].mxu0
        %v844 = vpop.f32.mrb[0].mxu0
        %v845 = vpop.f32.mrb[0].mxu0
        %846 = vdwg.mxu0
        %v848 = vunpack.c.l.b16 %v736
        %v849 = vpack.c.b16 %v848, %v848
        %850 = vrot.lane.b32.xlu0 %v849, 112
        %v851 = vpop.permute.xlu0 %850
        %v853 = vunpack.c.l.b16 %v737
        %v854 = vpack.c.b16 %v853, %v853
        %855 = vrot.lane.b32.xlu0 %v854, 112
        %v856 = vpop.permute.xlu0 %855
        %v858 = vsel %vm739, %v851, 0
        %v861 = vsel %vm739, %v856, 0
        %863 = vmatprep.subr.bf16.mxu0 0
        %864 = vmatpush1.bf16.xpose.msra.mxu0 %v861
        %865 = vmatprep.subr.bf16.mxu0 0
        %866 = vmatpush1.bf16.xpose.msra.mxu0 0
        %867 = vmatprep.subr.bf16.mxu0 0
        %868 = vmatpush1.bf16.xpose.msra.mxu0 0
        %869 = vmatprep.subr.bf16.mxu0 0
        %870 = vmatpush1.bf16.xpose.msra.mxu0 0
        %871 = vmatprep.subr.bf16.mxu0 0
        %872 = vmatpush1.bf16.xpose.msra.mxu0 0
        %873 = vmatprep.subr.bf16.mxu0 0
        %874 = vmatpush1.bf16.xpose.msra.mxu0 0
        %875 = vmatprep.subr.bf16.mxu0 0
        %876 = vmatpush1.bf16.xpose.msra.mxu0 0
        %877 = vmatprep.subr.bf16.mxu0 0
        %878 = vmatpush1.bf16.xpose.msra.mxu0 0
        %879 = vmatprep.subr.bf16.mxu0 0
        %880 = vmatpush1.bf16.xpose.msra.mxu0 0
        %881 = vmatprep.subr.bf16.mxu0 0
        %882 = vmatpush1.bf16.xpose.msra.mxu0 0
        %883 = vmatprep.subr.bf16.mxu0 0
        %884 = vmatpush1.bf16.xpose.msra.mxu0 0
        %885 = vmatprep.subr.bf16.mxu0 0
        %886 = vmatpush1.bf16.xpose.msra.mxu0 0
        %887 = vmatprep.subr.bf16.mxu0 0
        %888 = vmatpush1.bf16.xpose.msra.mxu0 0
        %889 = vmatprep.subr.bf16.mxu0 0
        %890 = vmatpush1.bf16.xpose.msra.mxu0 0
        %891 = vmatprep.subr.bf16.mxu0 0
        %892 = vmatpush1.bf16.xpose.msra.mxu0 0
        %893 = vmatprep.subr.bf16.mxu0 0
        %894 = vmatpush1.bf16.xpose.msra.mxu0 0
        %895 = vmatprep.mubr.bf16.mxu0 0
        %896 = vmatmul.mubr.bf16.gmra.mrb[0].mxu0 %v858
        %v897 = vpop.f32.mrb[0].mxu0
        %v898 = vadd.f32 0.0, %v897
        %v899 = vpop.f32.mrb[0].mxu0
        %v900 = vpop.f32.mrb[0].mxu0
        %v901 = vpop.f32.mrb[0].mxu0
        %902 = vdwg.mxu0
        %v903 = vmul.f32 %v898, 0.35355338
        %v904 = vsel %vm739, %v903, -inf
        %905 = vmax.xlane.f32.xlu0 %v904
        %v906 = vpop.xlane.xlu0 %905
        %v907 = vsub.f32 %v903, %v906
        %v908 = vmul.f32 %v907, 1.442695
        %v909 = vpow.pop %v908
        %v910 = vsel %vm739, %v909, 0.0
        %911 = vadd.xlane.f32.xlu0 %v910
        %v912 = vpop.xlane.xlu0 %911
        %v913 = vrcp.pop %v912
        %v914 = vmul.f32 1.0, %v913
        %v915 = vmul.f32 %v909, %v914
        %v916 = vpack.c.bf16 %v915, %v915
        %v918 = vunpack.c.l.b16 %v738
        %v919 = vpack.c.b16 %v918, %v918
        %920 = vrot.lane.b32.xlu0 %v919, 112
        %v921 = vpop.permute.xlu0 %920
        %v923 = vsel %vm739, %v916, 0
        %v926 = vsel %vm803, %v921, 0
        %928 = vmatprep.subr.bf16.mxu0 0
        %929 = vmatpush1.bf16.msra.mxu0 %v926
        %930 = vmatprep.subr.bf16.mxu0 0
        %931 = vmatpush1.bf16.msra.mxu0 0
        %932 = vmatprep.subr.bf16.mxu0 0
        %933 = vmatpush1.bf16.msra.mxu0 0
        %934 = vmatprep.subr.bf16.mxu0 0
        %935 = vmatpush1.bf16.msra.mxu0 0
        %936 = vmatprep.subr.bf16.mxu0 0
        %937 = vmatpush1.bf16.msra.mxu0 0
        %938 = vmatprep.subr.bf16.mxu0 0
        %939 = vmatpush1.bf16.msra.mxu0 0
        %940 = vmatprep.subr.bf16.mxu0 0
        %941 = vmatpush1.bf16.msra.mxu0 0
        %942 = vmatprep.subr.bf16.mxu0 0
        %943 = vmatpush1.bf16.msra.mxu0 0
        %944 = vmatprep.subr.bf16.mxu0 0
        %945 = vmatpush1.bf16.msra.mxu0 0
        %946 = vmatprep.subr.bf16.mxu0 0
        %947 = vmatpush1.bf16.msra.mxu0 0
        %948 = vmatprep.subr.bf16.mxu0 0
        %949 = vmatpush1.bf16.msra.mxu0 0
        %950 = vmatprep.subr.bf16.mxu0 0
        %951 = vmatpush1.bf16.msra.mxu0 0
        %952 = vmatprep.subr.bf16.mxu0 0
        %953 = vmatpush1.bf16.msra.mxu0 0
        %954 = vmatprep.subr.bf16.mxu0 0
        %955 = vmatpush1.bf16.msra.mxu0 0
        %956 = vmatprep.subr.bf16.mxu0 0
        %957 = vmatpush1.bf16.msra.mxu0 0
        %958 = vmatprep.subr.bf16.mxu0 0
        %959 = vmatpush1.bf16.msra.mxu0 0
        %960 = vmatprep.mubr.bf16.mxu0 0
        %961 = vmatmul.mubr.bf16.gmra.mrb[0].mxu0 %v923
        %v962 = vpop.f32.mrb[0].mxu0
        %v963 = vadd.f32 0.0, %v962
        %v964 = vpop.f32.mrb[0].mxu0
        %v965 = vpop.f32.mrb[0].mxu0
        %v966 = vpop.f32.mrb[0].mxu0
        %967 = vdwg.mxu0
        %v969 = vlaneseq
        %v970 = vshrl.u32 %v969, 7
        %v971 = vsub.s32 0, %v970
        %v972 = vrot.slane %v731, %v971
        %v974 = vmul.f32 %v972, %v963
        %v975 = vsub.f32 %v842, %v974
        %976 = vst.msk [vmem:[#allocation5] sm:$0xff] %vm739, %v975
        %v977 = vld [vmem:[%s735] sm:$0xf]
        %v978 = vld [vmem:[#allocation3] sm:$0xf]
        %v979 = vld [vmem:[#allocation4] sm:$0xf]
        %v981 = vunpack.c.l.b16 %v977
        %v982 = vpack.c.b16 %v981, %v981
        %983 = vrot.lane.b32.xlu0 %v982, 120
        %v984 = vpop.permute.xlu0 %983
        %v986 = vunpack.c.l.b16 %v978
        %v987 = vpack.c.b16 %v986, %v986
        %988 = vrot.lane.b32.xlu0 %v987, 120
        %v989 = vpop.permute.xlu0 %988
        %v991 = vsel %vm739, %v984, 0
        %v994 = vsel %vm739, %v989, 0
        %996 = vmatprep.subr.bf16.mxu0 0
        %997 = vmatpush1.bf16.xpose.msra.mxu0 %v994
        %998 = vmatprep.subr.bf16.mxu0 0
        %999 = vmatpush1.bf16.xpose.msra.mxu0 0
        %1000 = vmatprep.subr.bf16.mxu0 0
        %1001 = vmatpush1.bf16.xpose.msra.mxu0 0
        %1002 = vmatprep.subr.bf16.mxu0 0
        %1003 = vmatpush1.bf16.xpose.msra.mxu0 0
        %1004 = vmatprep.subr.bf16.mxu0 0
        %1005 = vmatpush1.bf16.xpose.msra.mxu0 0
        %1006 = vmatprep.subr.bf16.mxu0 0
        %1007 = vmatpush1.bf16.xpose.msra.mxu0 0
        %1008 = vmatprep.subr.bf16.mxu0 0
        %1009 = vmatpush1.bf16.xpose.msra.mxu0 0
        %1010 = vmatprep.subr.bf16.mxu0 0
        %1011 = vmatpush1.bf16.xpose.msra.mxu0 0
        %1012 = vmatprep.subr.bf16.mxu0 0
        %1013 = vmatpush1.bf16.xpose.msra.mxu0 0
        %1014 = vmatprep.subr.bf16.mxu0 0
        %1015 = vmatpush1.bf16.xpose.msra.mxu0 0
        %1016 = vmatprep.subr.bf16.mxu0 0
        %1017 = vmatpush1.bf16.xpose.msra.mxu0 0
        %1018 = vmatprep.subr.bf16.mxu0 0
        %1019 = vmatpush1.bf16.xpose.msra.mxu0 0
        %1020 = vmatprep.subr.bf16.mxu0 0
        %1021 = vmatpush1.bf16.xpose.msra.mxu0 0
        %1022 = vmatprep.subr.bf16.mxu0 0
        %1023 = vmatpush1.bf16.xpose.msra.mxu0 0
        %1024 = vmatprep.subr.bf16.mxu0 0
        %1025 = vmatpush1.bf16.xpose.msra.mxu0 0
        %1026 = vmatprep.subr.bf16.mxu0 0
        %1027 = vmatpush1.bf16.xpose.msra.mxu0 0
        %1028 = vmatprep.mubr.bf16.mxu0 0
        %1029 = vmatmul.mubr.bf16.gmra.mrb[0].mxu0 %v991
        %v1030 = vpop.f32.mrb[0].mxu0
        %v1031 = vadd.f32 0.0, %v1030
        %v1032 = vpop.f32.mrb[0].mxu0
        %v1033 = vpop.f32.mrb[0].mxu0
        %v1034 = vpop.f32.mrb[0].mxu0
        %1035 = vdwg.mxu0
        %v1036 = vmul.f32 %v1031, 0.35355338
        %v1037 = vsel %vm739, %v1036, -inf
        %1038 = vmax.xlane.f32.xlu0 %v1037
        %v1039 = vpop.xlane.xlu0 %1038
        %v1040 = vsub.f32 %v1036, %v1039
        %v1041 = vmul.f32 %v1040, 1.442695
        %v1042 = vpow.pop %v1041
        %v1043 = vsel %vm739, %v1042, 0.0
        %1044 = vadd.xlane.f32.xlu0 %v1043
        %v1045 = vpop.xlane.xlu0 %1044
        %v1046 = vrcp.pop %v1045
        %v1047 = vmul.f32 1.0, %v1046
        %v1048 = vmul.f32 %v1042, %v1047
        %v1049 = vpack.c.bf16 %v1048, %v1048
        %v1051 = vunpack.c.l.b16 %v979
        %v1052 = vpack.c.b16 %v1051, %v1051
        %1053 = vrot.lane.b32.xlu0 %v1052, 120
        %v1054 = vpop.permute.xlu0 %1053
        %v1056 = vsel %vm739, %v1049, 0
        %v1059 = vsel %vm803, %v1054, 0
        %1061 = vmatprep.subr.bf16.mxu0 0
        %1062 = vmatpush1.bf16.msra.mxu0 %v1059
        %1063 = vmatprep.subr.bf16.mxu0 0
        %1064 = vmatpush1.bf16.msra.mxu0 0
        %1065 = vmatprep.subr.bf16.mxu0 0
        %1066 = vmatpush1.bf16.msra.mxu0 0
        %1067 = vmatprep.subr.bf16.mxu0 0
        %1068 = vmatpush1.bf16.msra.mxu0 0
        %1069 = vmatprep.subr.bf16.mxu0 0
        %1070 = vmatpush1.bf16.msra.mxu0 0
        %1071 = vmatprep.subr.bf16.mxu0 0
        %1072 = vmatpush1.bf16.msra.mxu0 0
        %1073 = vmatprep.subr.bf16.mxu0 0
        %1074 = vmatpush1.bf16.msra.mxu0 0
        %1075 = vmatprep.subr.bf16.mxu0 0
        %1076 = vmatpush1.bf16.msra.mxu0 0
        %1077 = vmatprep.subr.bf16.mxu0 0
        %1078 = vmatpush1.bf16.msra.mxu0 0
        %1079 = vmatprep.subr.bf16.mxu0 0
        %1080 = vmatpush1.bf16.msra.mxu0 0
        %1081 = vmatprep.subr.bf16.mxu0 0
        %1082 = vmatpush1.bf16.msra.mxu0 0
        %1083 = vmatprep.subr.bf16.mxu0 0
        %1084 = vmatpush1.bf16.msra.mxu0 0
        %1085 = vmatprep.subr.bf16.mxu0 0
        %1086 = vmatpush1.bf16.msra.mxu0 0
        %1087 = vmatprep.subr.bf16.mxu0 0
        %1088 = vmatpush1.bf16.msra.mxu0 0
        %1089 = vmatprep.subr.bf16.mxu0 0
        %1090 = vmatpush1.bf16.msra.mxu0 0
        %1091 = vmatprep.subr.bf16.mxu0 0
        %1092 = vmatpush1.bf16.msra.mxu0 0
        %1093 = vmatprep.mubr.bf16.mxu0 0
        %1094 = vmatmul.mubr.bf16.gmra.mrb[0].mxu0 %v1056
        %v1095 = vpop.f32.mrb[0].mxu0
        %v1096 = vadd.f32 0.0, %v1095
        %v1097 = vpop.f32.mrb[0].mxu0
        %v1098 = vpop.f32.mrb[0].mxu0
        %v1099 = vpop.f32.mrb[0].mxu0
        %1100 = vdwg.mxu0
        %1101 = vrot.lane.b32.xlu0 %v982, 104
        %v1102 = vpop.permute.xlu0 %1101
        %1103 = vrot.lane.b32.xlu0 %v987, 104
        %v1104 = vpop.permute.xlu0 %1103
        %v1106 = vsel %vm739, %v1102, 0
        %v1109 = vsel %vm739, %v1104, 0
        %1111 = vmatprep.subr.bf16.mxu0 0
        %1112 = vmatpush1.bf16.xpose.msra.mxu0 %v1109
        %1113 = vmatprep.subr.bf16.mxu0 0
        %1114 = vmatpush1.bf16.xpose.msra.mxu0 0
        %1115 = vmatprep.subr.bf16.mxu0 0
        %1116 = vmatpush1.bf16.xpose.msra.mxu0 0
        %1117 = vmatprep.subr.bf16.mxu0 0
        %1118 = vmatpush1.bf16.xpose.msra.mxu0 0
        %1119 = vmatprep.subr.bf16.mxu0 0
        %1120 = vmatpush1.bf16.xpose.msra.mxu0 0
        %1121 = vmatprep.subr.bf16.mxu0 0
        %1122 = vmatpush1.bf16.xpose.msra.mxu0 0
        %1123 = vmatprep.subr.bf16.mxu0 0
        %1124 = vmatpush1.bf16.xpose.msra.mxu0 0
        %1125 = vmatprep.subr.bf16.mxu0 0
        %1126 = vmatpush1.bf16.xpose.msra.mxu0 0
        %1127 = vmatprep.subr.bf16.mxu0 0
        %1128 = vmatpush1.bf16.xpose.msra.mxu0 0
        %1129 = vmatprep.subr.bf16.mxu0 0
        %1130 = vmatpush1.bf16.xpose.msra.mxu0 0
        %1131 = vmatprep.subr.bf16.mxu0 0
        %1132 = vmatpush1.bf16.xpose.msra.mxu0 0
        %1133 = vmatprep.subr.bf16.mxu0 0
        %1134 = vmatpush1.bf16.xpose.msra.mxu0 0
        %1135 = vmatprep.subr.bf16.mxu0 0
        %1136 = vmatpush1.bf16.xpose.msra.mxu0 0
        %1137 = vmatprep.subr.bf16.mxu0 0
        %1138 = vmatpush1.bf16.xpose.msra.mxu0 0
        %1139 = vmatprep.subr.bf16.mxu0 0
        %1140 = vmatpush1.bf16.xpose.msra.mxu0 0
        %1141 = vmatprep.subr.bf16.mxu0 0
        %1142 = vmatpush1.bf16.xpose.msra.mxu0 0
        %1143 = vmatprep.mubr.bf16.mxu0 0
        %1144 = vmatmul.mubr.bf16.gmra.mrb[0].mxu0 %v1106
        %v1145 = vpop.f32.mrb[0].mxu0
        %v1146 = vadd.f32 0.0, %v1145
        %v1147 = vpop.f32.mrb[0].mxu0
        %v1148 = vpop.f32.mrb[0].mxu0
        %v1149 = vpop.f32.mrb[0].mxu0
        %1150 = vdwg.mxu0
        %v1151 = vmul.f32 %v1146, 0.35355338
        %v1152 = vsel %vm739, %v1151, -inf
        %1153 = vmax.xlane.f32.xlu0 %v1152
        %v1154 = vpop.xlane.xlu0 %1153
        %v1155 = vsub.f32 %v1151, %v1154
        %v1156 = vmul.f32 %v1155, 1.442695
        %v1157 = vpow.pop %v1156
        %v1158 = vsel %vm739, %v1157, 0.0
        %1159 = vadd.xlane.f32.xlu0 %v1158
        %v1160 = vpop.xlane.xlu0 %1159
        %v1161 = vrcp.pop %v1160
        %v1162 = vmul.f32 1.0, %v1161
        %v1163 = vmul.f32 %v1157, %v1162
        %v1164 = vpack.c.bf16 %v1163, %v1163
        %1165 = vrot.lane.b32.xlu0 %v1052, 104
        %v1166 = vpop.permute.xlu0 %1165
        %v1168 = vsel %vm739, %v1164, 0
        %v1171 = vsel %vm803, %v1166, 0
        %1173 = vmatprep.subr.bf16.mxu0 0
        %1174 = vmatpush1.bf16.msra.mxu0 %v1171
        %1175 = vmatprep.subr.bf16.mxu0 0
        %1176 = vmatpush1.bf16.msra.mxu0 0
        %1177 = vmatprep.subr.bf16.mxu0 0
        %1178 = vmatpush1.bf16.msra.mxu0 0
        %1179 = vmatprep.subr.bf16.mxu0 0
        %1180 = vmatpush1.bf16.msra.mxu0 0
        %1181 = vmatprep.subr.bf16.mxu0 0
        %1182 = vmatpush1.bf16.msra.mxu0 0
        %1183 = vmatprep.subr.bf16.mxu0 0
        %1184 = vmatpush1.bf16.msra.mxu0 0
        %1185 = vmatprep.subr.bf16.mxu0 0
        %1186 = vmatpush1.bf16.msra.mxu0 0
        %1187 = vmatprep.subr.bf16.mxu0 0
        %1188 = vmatpush1.bf16.msra.mxu0 0
        %1189 = vmatprep.subr.bf16.mxu0 0
        %1190 = vmatpush1.bf16.msra.mxu0 0
        %1191 = vmatprep.subr.bf16.mxu0 0
        %1192 = vmatpush1.bf16.msra.mxu0 0
        %1193 = vmatprep.subr.bf16.mxu0 0
        %1194 = vmatpush1.bf16.msra.mxu0 0
        %1195 = vmatprep.subr.bf16.mxu0 0
        %1196 = vmatpush1.bf16.msra.mxu0 0
        %1197 = vmatprep.subr.bf16.mxu0 0
        %1198 = vmatpush1.bf16.msra.mxu0 0
        %1199 = vmatprep.subr.bf16.mxu0 0
        %1200 = vmatpush1.bf16.msra.mxu0 0
        %1201 = vmatprep.subr.bf16.mxu0 0
        %1202 = vmatpush1.bf16.msra.mxu0 0
        %1203 = vmatprep.subr.bf16.mxu0 0
        %1204 = vmatpush1.bf16.msra.mxu0 0
        %1205 = vmatprep.mubr.bf16.mxu0 0
        %1206 = vmatmul.mubr.bf16.gmra.mrb[0].mxu0 %v1168
        %v1207 = vpop.f32.mrb[0].mxu0
        %v1208 = vadd.f32 0.0, %v1207
        %v1209 = vpop.f32.mrb[0].mxu0
        %v1210 = vpop.f32.mrb[0].mxu0
        %v1211 = vpop.f32.mrb[0].mxu0
        %1212 = vdwg.mxu0
        %1214 = vrot.lane.b32.xlu0 %v1208, 8
        %v1215 = vpop.permute.xlu0 %1214
        %v1217 = vmul.f32 %v972, %v1215
        %1219 = vrot.lane.b32.xlu0 %v1217, 120
        %v1220 = vpop.permute.xlu0 %1219
        %v1222 = vsub.f32 %v1096, %v1220
        %1224 = vrot.lane.b32.xlu0 %v1222, 8
        %v1225 = vpop.permute.xlu0 %1224
        %vm1227 = vcmask 130112
        %1228 = vst.msk [vmem:[#allocation5] sm:$0xff] %vm1227, %v1225
        %v1229 = vld [vmem:[#allocation5] sm:$0xff]
        %v1230 = vld [vmem:[#allocation18] sm:$0xff]
        %v1231 = vld [vmem:[#allocation18 + $0x8] sm:$0xff]
        %vm1232 = vcmask 130048
        %v1234 = vsel %vm1232, %v1229, 0
        %1236 = vmatprep.subr.mxu0 0.0
        %1237 = vmatpush1.msra.mxu0 %v1230
        %1238 = vmatprep.subr.mxu0 0.0
        %1239 = vmatpush1.msra.mxu0 %v1231
        %1240 = vmatprep.subr.mxu0 0.0
        %1241 = vmatpush1.msra.mxu0 0.0
        %1242 = vmatprep.subr.mxu0 0.0
        %1243 = vmatpush1.msra.mxu0 0.0
        %1244 = vmatprep.subr.mxu0 0.0
        %1245 = vmatpush1.msra.mxu0 0.0
        %1246 = vmatprep.subr.mxu0 0.0
        %1247 = vmatpush1.msra.mxu0 0.0
        %1248 = vmatprep.subr.mxu0 0.0
        %1249 = vmatpush1.msra.mxu0 0.0
        %1250 = vmatprep.subr.mxu0 0.0
        %1251 = vmatpush1.msra.mxu0 0.0
        %1252 = vmatprep.subr.mxu0 0.0
        %1253 = vmatpush1.msra.mxu0 0.0
        %1254 = vmatprep.subr.mxu0 0.0
        %1255 = vmatpush1.msra.mxu0 0.0
        %1256 = vmatprep.subr.mxu0 0.0
        %1257 = vmatpush1.msra.mxu0 0.0
        %1258 = vmatprep.subr.mxu0 0.0
        %1259 = vmatpush1.msra.mxu0 0.0
        %1260 = vmatprep.subr.mxu0 0.0
        %1261 = vmatpush1.msra.mxu0 0.0
        %1262 = vmatprep.subr.mxu0 0.0
        %1263 = vmatpush1.msra.mxu0 0.0
        %1264 = vmatprep.subr.mxu0 0.0
        %1265 = vmatpush1.msra.mxu0 0.0
        %1266 = vmatprep.subr.mxu0 0.0
        %1267 = vmatpush1.msra.mxu0 0.0
        %1268 = vmatprep.subr.mxu0 0.0
        %1269 = vmatpush1.msra.mxu0 0.0
        %1270 = vmatprep.subr.mxu0 0.0
        %1271 = vmatpush1.msra.mxu0 0.0
        %1272 = vmatprep.subr.mxu0 0.0
        %1273 = vmatpush1.msra.mxu0 0.0
        %1274 = vmatprep.subr.mxu0 0.0
        %1275 = vmatpush1.msra.mxu0 0.0
        %1276 = vmatprep.subr.mxu0 0.0
        %1277 = vmatpush1.msra.mxu0 0.0
        %1278 = vmatprep.subr.mxu0 0.0
        %1279 = vmatpush1.msra.mxu0 0.0
        %1280 = vmatprep.subr.mxu0 0.0
        %1281 = vmatpush1.msra.mxu0 0.0
        %1282 = vmatprep.subr.mxu0 0.0
        %1283 = vmatpush1.msra.mxu0 0.0
        %1284 = vmatprep.subr.mxu0 0.0
        %1285 = vmatpush1.msra.mxu0 0.0
        %1286 = vmatprep.subr.mxu0 0.0
        %1287 = vmatpush1.msra.mxu0 0.0
        %1288 = vmatprep.subr.mxu0 0.0
        %1289 = vmatpush1.msra.mxu0 0.0
        %1290 = vmatprep.subr.mxu0 0.0
        %1291 = vmatpush1.msra.mxu0 0.0
        %1292 = vmatprep.subr.mxu0 0.0
        %1293 = vmatpush1.msra.mxu0 0.0
        %1294 = vmatprep.subr.mxu0 0.0
        %1295 = vmatpush1.msra.mxu0 0.0
        %1296 = vmatprep.subr.mxu0 0.0
        %1297 = vmatpush1.msra.mxu0 0.0
        %1298 = vmatprep.subr.mxu0 0.0
        %1299 = vmatpush1.msra.mxu0 0.0
        %1300 = vmatprep.mubr.f32.mxu0 0.0
        %1301 = vmatmul.mubr.f32.gmra.mrb[0].mxu0 %v1234
        %v1302 = vpop.f32.mrb[0].mxu0
        %v1303 = vadd.f32 0.0, %v1302
        %v1304 = vpop.f32.mrb[0].mxu0
        %1305 = vdwg.mxu0
        %v1306 = vmul.f32 %v1229, %v1229
        %v1308 = vsel %vm1232, %v1306, 0
        %1310 = vmatprep.subr.mxu0 0.0
        %1311 = vmatpush1.msra.mxu0 %v1230
        %1312 = vmatprep.subr.mxu0 0.0
        %1313 = vmatpush1.msra.mxu0 %v1231
        %1314 = vmatprep.subr.mxu0 0.0
        %1315 = vmatpush1.msra.mxu0 0.0
        %1316 = vmatprep.subr.mxu0 0.0
        %1317 = vmatpush1.msra.mxu0 0.0
        %1318 = vmatprep.subr.mxu0 0.0
        %1319 = vmatpush1.msra.mxu0 0.0
        %1320 = vmatprep.subr.mxu0 0.0
        %1321 = vmatpush1.msra.mxu0 0.0
        %1322 = vmatprep.subr.mxu0 0.0
        %1323 = vmatpush1.msra.mxu0 0.0
        %1324 = vmatprep.subr.mxu0 0.0
        %1325 = vmatpush1.msra.mxu0 0.0
        %1326 = vmatprep.subr.mxu0 0.0
        %1327 = vmatpush1.msra.mxu0 0.0
        %1328 = vmatprep.subr.mxu0 0.0
        %1329 = vmatpush1.msra.mxu0 0.0
        %1330 = vmatprep.subr.mxu0 0.0
        %1331 = vmatpush1.msra.mxu0 0.0
        %1332 = vmatprep.subr.mxu0 0.0
        %1333 = vmatpush1.msra.mxu0 0.0
        %1334 = vmatprep.subr.mxu0 0.0
        %1335 = vmatpush1.msra.mxu0 0.0
        %1336 = vmatprep.subr.mxu0 0.0
        %1337 = vmatpush1.msra.mxu0 0.0
        %1338 = vmatprep.subr.mxu0 0.0
        %1339 = vmatpush1.msra.mxu0 0.0
        %1340 = vmatprep.subr.mxu0 0.0
        %1341 = vmatpush1.msra.mxu0 0.0
        %1342 = vmatprep.subr.mxu0 0.0
        %1343 = vmatpush1.msra.mxu0 0.0
        %1344 = vmatprep.subr.mxu0 0.0
        %1345 = vmatpush1.msra.mxu0 0.0
        %1346 = vmatprep.subr.mxu0 0.0
        %1347 = vmatpush1.msra.mxu0 0.0
        %1348 = vmatprep.subr.mxu0 0.0
        %1349 = vmatpush1.msra.mxu0 0.0
        %1350 = vmatprep.subr.mxu0 0.0
        %1351 = vmatpush1.msra.mxu0 0.0
        %1352 = vmatprep.subr.mxu0 0.0
        %1353 = vmatpush1.msra.mxu0 0.0
        %1354 = vmatprep.subr.mxu0 0.0
        %1355 = vmatpush1.msra.mxu0 0.0
        %1356 = vmatprep.subr.mxu0 0.0
        %1357 = vmatpush1.msra.mxu0 0.0
        %1358 = vmatprep.subr.mxu0 0.0
        %1359 = vmatpush1.msra.mxu0 0.0
        %1360 = vmatprep.subr.mxu0 0.0
        %1361 = vmatpush1.msra.mxu0 0.0
        %1362 = vmatprep.subr.mxu0 0.0
        %1363 = vmatpush1.msra.mxu0 0.0
        %1364 = vmatprep.subr.mxu0 0.0
        %1365 = vmatpush1.msra.mxu0 0.0
        %1366 = vmatprep.subr.mxu0 0.0
        %1367 = vmatpush1.msra.mxu0 0.0
        %1368 = vmatprep.subr.mxu0 0.0
        %1369 = vmatpush1.msra.mxu0 0.0
        %1370 = vmatprep.subr.mxu0 0.0
        %1371 = vmatpush1.msra.mxu0 0.0
        %1372 = vmatprep.subr.mxu0 0.0
        %1373 = vmatpush1.msra.mxu0 0.0
        %1374 = vmatprep.mubr.f32.mxu0 0.0
        %1375 = vmatmul.mubr.f32.gmra.mrb[0].mxu0 %v1308
        %v1376 = vpop.f32.mrb[0].mxu0
        %v1377 = vadd.f32 0.0, %v1376
        %v1378 = vpop.f32.mrb[0].mxu0
        %1379 = vdwg.mxu0
        %v1380 = vld [vmem:[#allocation20] sm:$0x3]
        %vm1381 = vcmask 15360
        %v1383 = vsel %vm1381, %v1303, 0
        %vm1385 = vcmask 1041408
        %v1387 = vsel %vm1385, %v1380, 0
        %1389 = vmatprep.subr.mxu0 0.0
        %1390 = vmatpush1.msra.mxu0 %v1387
        %1391 = vmatprep.subr.mxu0 0.0
        %1392 = vmatpush1.msra.mxu0 0.0
        %1393 = vmatprep.subr.mxu0 0.0
        %1394 = vmatpush1.msra.mxu0 0.0
        %1395 = vmatprep.subr.mxu0 0.0
        %1396 = vmatpush1.msra.mxu0 0.0
        %1397 = vmatprep.subr.mxu0 0.0
        %1398 = vmatpush1.msra.mxu0 0.0
        %1399 = vmatprep.subr.mxu0 0.0
        %1400 = vmatpush1.msra.mxu0 0.0
        %1401 = vmatprep.subr.mxu0 0.0
        %1402 = vmatpush1.msra.mxu0 0.0
        %1403 = vmatprep.subr.mxu0 0.0
        %1404 = vmatpush1.msra.mxu0 0.0
        %1405 = vmatprep.subr.mxu0 0.0
        %1406 = vmatpush1.msra.mxu0 0.0
        %1407 = vmatprep.subr.mxu0 0.0
        %1408 = vmatpush1.msra.mxu0 0.0
        %1409 = vmatprep.subr.mxu0 0.0
        %1410 = vmatpush1.msra.mxu0 0.0
        %1411 = vmatprep.subr.mxu0 0.0
        %1412 = vmatpush1.msra.mxu0 0.0
        %1413 = vmatprep.subr.mxu0 0.0
        %1414 = vmatpush1.msra.mxu0 0.0
        %1415 = vmatprep.subr.mxu0 0.0
        %1416 = vmatpush1.msra.mxu0 0.0
        %1417 = vmatprep.subr.mxu0 0.0
        %1418 = vmatpush1.msra.mxu0 0.0
        %1419 = vmatprep.subr.mxu0 0.0
        %1420 = vmatpush1.msra.mxu0 0.0
        %1421 = vmatprep.subr.mxu0 0.0
        %1422 = vmatpush1.msra.mxu0 0.0
        %1423 = vmatprep.subr.mxu0 0.0
        %1424 = vmatpush1.msra.mxu0 0.0
        %1425 = vmatprep.subr.mxu0 0.0
        %1426 = vmatpush1.msra.mxu0 0.0
        %1427 = vmatprep.subr.mxu0 0.0
        %1428 = vmatpush1.msra.mxu0 0.0
        %1429 = vmatprep.subr.mxu0 0.0
        %1430 = vmatpush1.msra.mxu0 0.0
        %1431 = vmatprep.subr.mxu0 0.0
        %1432 = vmatpush1.msra.mxu0 0.0
        %1433 = vmatprep.subr.mxu0 0.0
        %1434 = vmatpush1.msra.mxu0 0.0
        %1435 = vmatprep.subr.mxu0 0.0
        %1436 = vmatpush1.msra.mxu0 0.0
        %1437 = vmatprep.subr.mxu0 0.0
        %1438 = vmatpush1.msra.mxu0 0.0
        %1439 = vmatprep.subr.mxu0 0.0
        %1440 = vmatpush1.msra.mxu0 0.0
        %1441 = vmatprep.subr.mxu0 0.0
        %1442 = vmatpush1.msra.mxu0 0.0
        %1443 = vmatprep.subr.mxu0 0.0
        %1444 = vmatpush1.msra.mxu0 0.0
        %1445 = vmatprep.subr.mxu0 0.0
        %1446 = vmatpush1.msra.mxu0 0.0
        %1447 = vmatprep.subr.mxu0 0.0
        %1448 = vmatpush1.msra.mxu0 0.0
        %1449 = vmatprep.subr.mxu0 0.0
        %1450 = vmatpush1.msra.mxu0 0.0
        %1451 = vmatprep.subr.mxu0 0.0
        %1452 = vmatpush1.msra.mxu0 0.0
        %1453 = vmatprep.mubr.f32.mxu0 0.0
        %1454 = vmatmul.mubr.f32.gmra.mrb[0].mxu0 %v1383
        %v1455 = vpop.f32.mrb[0].mxu0
        %v1456 = vadd.f32 0.0, %v1455
        %v1457 = vpop.f32.mrb[0].mxu0
        %1458 = vdwg.mxu0
        %v1460 = vsel %vm1381, %v1377, 0
        %1462 = vmatprep.subr.mxu0 0.0
        %1463 = vmatpush1.msra.mxu0 %v1387
        %1464 = vmatprep.subr.mxu0 0.0
        %1465 = vmatpush1.msra.mxu0 0.0
        %1466 = vmatprep.subr.mxu0 0.0
        %1467 = vmatpush1.msra.mxu0 0.0
        %1468 = vmatprep.subr.mxu0 0.0
        %1469 = vmatpush1.msra.mxu0 0.0
        %1470 = vmatprep.subr.mxu0 0.0
        %1471 = vmatpush1.msra.mxu0 0.0
        %1472 = vmatprep.subr.mxu0 0.0
        %1473 = vmatpush1.msra.mxu0 0.0
        %1474 = vmatprep.subr.mxu0 0.0
        %1475 = vmatpush1.msra.mxu0 0.0
        %1476 = vmatprep.subr.mxu0 0.0
        %1477 = vmatpush1.msra.mxu0 0.0
        %1478 = vmatprep.subr.mxu0 0.0
        %1479 = vmatpush1.msra.mxu0 0.0
        %1480 = vmatprep.subr.mxu0 0.0
        %1481 = vmatpush1.msra.mxu0 0.0
        %1482 = vmatprep.subr.mxu0 0.0
        %1483 = vmatpush1.msra.mxu0 0.0
        %1484 = vmatprep.subr.mxu0 0.0
        %1485 = vmatpush1.msra.mxu0 0.0
        %1486 = vmatprep.subr.mxu0 0.0
        %1487 = vmatpush1.msra.mxu0 0.0
        %1488 = vmatprep.subr.mxu0 0.0
        %1489 = vmatpush1.msra.mxu0 0.0
        %1490 = vmatprep.subr.mxu0 0.0
        %1491 = vmatpush1.msra.mxu0 0.0
        %1492 = vmatprep.subr.mxu0 0.0
        %1493 = vmatpush1.msra.mxu0 0.0
        %1494 = vmatprep.subr.mxu0 0.0
        %1495 = vmatpush1.msra.mxu0 0.0
        %1496 = vmatprep.subr.mxu0 0.0
        %1497 = vmatpush1.msra.mxu0 0.0
        %1498 = vmatprep.subr.mxu0 0.0
        %1499 = vmatpush1.msra.mxu0 0.0
        %1500 = vmatprep.subr.mxu0 0.0
        %1501 = vmatpush1.msra.mxu0 0.0
        %1502 = vmatprep.subr.mxu0 0.0
        %1503 = vmatpush1.msra.mxu0 0.0
        %1504 = vmatprep.subr.mxu0 0.0
        %1505 = vmatpush1.msra.mxu0 0.0
        %1506 = vmatprep.subr.mxu0 0.0
        %1507 = vmatpush1.msra.mxu0 0.0
        %1508 = vmatprep.subr.mxu0 0.0
        %1509 = vmatpush1.msra.mxu0 0.0
        %1510 = vmatprep.subr.mxu0 0.0
        %1511 = vmatpush1.msra.mxu0 0.0
        %1512 = vmatprep.subr.mxu0 0.0
        %1513 = vmatpush1.msra.mxu0 0.0
        %1514 = vmatprep.subr.mxu0 0.0
        %1515 = vmatpush1.msra.mxu0 0.0
        %1516 = vmatprep.subr.mxu0 0.0
        %1517 = vmatpush1.msra.mxu0 0.0
        %1518 = vmatprep.subr.mxu0 0.0
        %1519 = vmatpush1.msra.mxu0 0.0
        %1520 = vmatprep.subr.mxu0 0.0
        %1521 = vmatpush1.msra.mxu0 0.0
        %1522 = vmatprep.subr.mxu0 0.0
        %1523 = vmatpush1.msra.mxu0 0.0
        %1524 = vmatprep.subr.mxu0 0.0
        %1525 = vmatpush1.msra.mxu0 0.0
        %1526 = vmatprep.mubr.f32.mxu0 0.0
        %1527 = vmatmul.mubr.f32.gmra.mrb[0].mxu0 %v1460
        %v1528 = vpop.f32.mrb[0].mxu0
        %v1529 = vadd.f32 0.0, %v1528
        %v1530 = vpop.f32.mrb[0].mxu0
        %1531 = vdwg.mxu0
        %v1532 = vmul.f32 %v1456, %v1456
        %v1533 = vsub.f32 %v1529, %v1532
        %v1534 = vmax.f32 %v1533, 0.0
        %v1535 = vsub.f32 %v1229, %v1456
        %v1536 = vadd.f32 %v1534, 1e-05
        %v1537 = vrsqrt.pop %v1536
        %v1538 = vmul.f32 %v1535, %v1537
        %v1539 = vpack.c.bf16 %v1538, %v1538
        %v1540 = vld [vmem:[#allocation21] sm:$0xf]
        %v1541 = vld [vmem:[#allocation21 + $0x4] sm:$0xf]
        %v1542 = vld [vmem:[#allocation23] sm:$0x1]
        %v1544 = vlaneseq
        %v1545 = vshrl.u32 %v1544, 7
        %v1546 = vsub.s32 0, %v1545
        %v1547 = vrot.slane %v1542, %v1546
        %v1551 = vunpack.c.l.b16 %v1540
        %v1552 = vunpack.c.l.b16 %v1541
        %v1553 = vpack.c.b16 %v1552, %v1551
        %v1556 = vsel %vm1232, %v1539, 0
        %1558 = vmatprep.subr.bf16.mxu0 0
        %1559 = vmatpush1.bf16.msra.mxu0 %v1553
        %1560 = vmatprep.subr.bf16.mxu0 0
        %1561 = vmatpush1.bf16.msra.mxu0 0
        %1562 = vmatprep.subr.bf16.mxu0 0
        %1563 = vmatpush1.bf16.msra.mxu0 0
        %1564 = vmatprep.subr.bf16.mxu0 0
        %1565 = vmatpush1.bf16.msra.mxu0 0
        %1566 = vmatprep.subr.bf16.mxu0 0
        %1567 = vmatpush1.bf16.msra.mxu0 0
        %1568 = vmatprep.subr.bf16.mxu0 0
        %1569 = vmatpush1.bf16.msra.mxu0 0
        %1570 = vmatprep.subr.bf16.mxu0 0
        %1571 = vmatpush1.bf16.msra.mxu0 0
        %1572 = vmatprep.subr.bf16.mxu0 0
        %1573 = vmatpush1.bf16.msra.mxu0 0
        %1574 = vmatprep.subr.bf16.mxu0 0
        %1575 = vmatpush1.bf16.msra.mxu0 0
        %1576 = vmatprep.subr.bf16.mxu0 0
        %1577 = vmatpush1.bf16.msra.mxu0 0
        %1578 = vmatprep.subr.bf16.mxu0 0
        %1579 = vmatpush1.bf16.msra.mxu0 0
        %1580 = vmatprep.subr.bf16.mxu0 0
        %1581 = vmatpush1.bf16.msra.mxu0 0
        %1582 = vmatprep.subr.bf16.mxu0 0
        %1583 = vmatpush1.bf16.msra.mxu0 0
        %1584 = vmatprep.subr.bf16.mxu0 0
        %1585 = vmatpush1.bf16.msra.mxu0 0
        %1586 = vmatprep.subr.bf16.mxu0 0
        %1587 = vmatpush1.bf16.msra.mxu0 0
        %1588 = vmatprep.subr.bf16.mxu0 0
        %1589 = vmatpush1.bf16.msra.mxu0 0
        %1590 = vmatprep.mubr.bf16.mxu0 0
        %1591 = vmatmul.mubr.bf16.gmra.mrb[0].mxu0 %v1556
        %v1592 = vpop.f32.mrb[0].mxu0
        %v1593 = vadd.f32 %v1547, %v1592
        %v1594 = vpop.f32.mrb[0].mxu0
        %v1595 = vpop.f32.mrb[0].mxu0
        %v1596 = vpop.f32.mrb[0].mxu0
        %1597 = vdwg.mxu0
        %s1598 = scalar_lea.vmem %s468, %s730 [#allocation6]
        %v1599 = vld [vmem:[%s1598] sm:$0xff]
        %v1600 = vadd.f32 %v1599, %v1593
        %vm1601 = vcmask 261120
        %1602 = vst.msk [vmem:[%s546] sm:$0xff] %vm1601, %v1600
        %s1603 = sand.u32 %s291, 1
        %s1604 = scalar_lea.sflag [#allocation8], %s1603
        %s1605 = sand.u32 %s291, 1
        %s1606 = smul.addr %s1605, 8
        %s1607 = scalar_lea.vmem [#allocation24], %s1606
        // Predicated region
        $region113: #{encoder_layer.3} parent=63 // pred_check
          %p1608 = pneg %p301
        $region114: #{encoder_layer.3} parent=63 // pred_check_branch
          %1610 = sbr.rel (%p1608) target = $region116
        $region115: #{encoder_layer.3} parent=63 // pred_region
          %s1612 = ssub.s32 128, 128
          %1613 = vsyncadd %s1604, %s1612
          %s1614 = sadd.s32 %s38, %s37
          %s1615 = smul.addr %s1614, 128
          %s1616 = scalar_lea.hbm %s11, %s1615
          %s1618 = sshll.u32 %s1607, 4
          %s1619 = int_to_ptr.vmem [resolvable:$true] %s1618
          %1621 = dma.vmem_to_hbm [thread:$0]  %s1619, 128, %s1616, %s1604
        $region116: #{encoder_layer.3} parent=63 // pred_fallthru
          _
      $region64: #{encoder_layer.3} parent=5 // pred_fallthru
        _
      %p1622 = scmp.le.s32.totalorder 2, %s28
      // Predicated region
      $region117: #{encoder_layer.3} parent=5 // pred_check
        %p1623 = pneg %p1622
      $region118: #{encoder_layer.3} parent=5 // pred_check_branch
        %1625 = sbr.rel (%p1623) target = $region120
      $region119: #{encoder_layer.3} parent=5 // pred_region
        %s1626 = ssub.s32 %s28, 2
        // Predicated region
        $region121: #{encoder_layer.3} parent=119 // pred_check
          %p1627 = pneg %p307
        $region122: #{encoder_layer.3} parent=119 // pred_check_branch
          %1629 = sbr.rel (%p1627) target = $region124
        $region123: #{encoder_layer.3} parent=119 // pred_region
          %s1630 = sand.u32 %s292, 1
          %s1631 = scalar_lea.sflag [#allocation8], %s1630
          %s1632 = sand.u32 %s292, 1
          %s1633 = smul.addr %s1632, 8
          %s1634 = scalar_lea.vmem [#allocation24], %s1633
          %1635 = dma.done %s1631, 128
        $region124: #{encoder_layer.3} parent=119 // pred_fallthru
          _
      $region120: #{encoder_layer.3} parent=5 // pred_fallthru
        _
    $region6: #{encoder_layer.3} parent=1 // loop_footer
      %s32 = sadd.s32 1, %s28
    $region7: #{encoder_layer.3} parent=1 // loop_footer_branch
      %27 = sbr.rel target = $region3
    $region8: #{encoder_layer.3} parent=1 // loop_exit
      _
    %1636 = vsyncpa [#allocation7], 1
    %s1637 = scalar_lea.sflag [#allocation7], 1
    %1638 = vsyncpa %s1637, 1
    %1639 = vsyncpa [#allocation10], 1
    %1640 = vsyncpa [#allocation13], 1
    %1641 = vsyncpa [#allocation16], 1
    %1642 = vsyncpa [#allocation19], 1
    %1643 = vsyncpa [#allocation22], 1
    %1644 = vsyncpa [#allocation8], 1
    %s1645 = scalar_lea.sflag [#allocation8], 1
    %1646 = vsyncpa %s1645, 1

</llo_original>
